<compile_context>
chip_gen: v7x
topology: tpu7x:2x2x1
jax: 0.10.0
libtpu: 0.0.40
codegen_flags: <defaults>
</compile_context>

<pallas_src>
import functools

import jax
import jax.numpy as jnp
from jax.experimental import pallas as pl
from jax.experimental.pallas import tpu as pltpu

# ----------------------------- model sizes ---------------------------------
INPUT_SIZE = 29        # vocab
HIDDEN = 32            # hidden_size
LATENT = 32            # latent_size
TENSE = 4
COND = 8               # condition_size

VPAD = 128             # decoder output head padded to a full lane row
VEMB_PAD = 32          # decoder embedding rows padded for the one-hot gather

_VMEM = pl.BlockSpec(memory_space=pltpu.MemorySpace.VMEM)


# ----------------------------- kernel helpers -------------------------------
def _lstm_step(x, h, c, w_ih, w_hh, b):
    """One LSTM cell step (PyTorch gate order i,f,g,o). No [x|h] concat:
    two MXU pushes accumulate into the same f32 gates tile."""
    gates = (jnp.dot(x, w_ih, preferred_element_type=jnp.float32)
             + jnp.dot(h, w_hh, preferred_element_type=jnp.float32) + b)   # (B,4H)
    H = h.shape[-1]
    i_g = jax.nn.sigmoid(gates[:, 0 * H:1 * H])
    f_g = jax.nn.sigmoid(gates[:, 1 * H:2 * H])
    g_g = jnp.tanh(gates[:, 2 * H:3 * H])
    o_g = jax.nn.sigmoid(gates[:, 3 * H:4 * H])
    c_new = f_g * c + i_g * g_g
    h_new = o_g * jnp.tanh(c_new)
    return h_new, c_new


# ----------------------------- fused kernel ---------------------------------
def _cvae_fused_kernel(teacher, length,
                       enc_x_ref, dec_in_ref, tense_ref, eps_ref, h0_ref,
                       enc_wih_ref, enc_whh_ref, enc_b_ref,
                       dec_wih_ref, dec_whh_ref, dec_b_ref,
                       ws_ref, bs_ref, wl_ref, bl_ref,
                       ow_ref, ob_ref,
                       stats_ref, logp_ref, idx_ref):
    """Whole CVAE forward: encoder LSTM (unrolled) -> VAE bridge
    (stats / reparameterize / lat2hid / lat2cell / tense concat) ->
    decoder LSTM + output head + log-softmax + argmax (unrolled)."""
    H, L, C = HIDDEN, LATENT, COND

    # ---------------- encoder: unrolled LSTM over the input word -------------
    enc_wih = enc_wih_ref[...]
    enc_whh = enc_whh_ref[...]
    enc_b = enc_b_ref[...]
    h = h0_ref[...]                       # [zeros(H-C) | tense]
    c = h0_ref[...]
    for t in range(length):
        h, c = _lstm_step(enc_x_ref[t], h, c, enc_wih, enc_whh, enc_b)

    # ---------------- VAE bridge ---------------------------------------------
    # Block-diagonal packed projection: [h|c] -> [hid_mean|hid_logvar|cell_mean|cell_logvar]
    # done as two MXU pushes into one lane-dense (B, 4L)=(B,128) tile (no concat).
    ws = ws_ref[...]                       # (2H, 4L) block-diagonal
    stats = (jnp.dot(h, ws[:H], preferred_element_type=jnp.float32)
             + jnp.dot(c, ws[H:], preferred_element_type=jnp.float32)
             + bs_ref[...])                # (B, 4L)
    stats_ref[...] = stats

    eps = eps_ref[...]                     # (B, 2L)
    hid_lat = stats[:, 0 * L:1 * L] + eps[:, :L] * jnp.exp(0.5 * stats[:, 1 * L:2 * L])
    cell_lat = stats[:, 2 * L:3 * L] + eps[:, L:] * jnp.exp(0.5 * stats[:, 3 * L:4 * L])

    wl = wl_ref[...]                       # (2L, 2(H-C)) block-diagonal
    proj = (jnp.dot(hid_lat, wl[:L], preferred_element_type=jnp.float32)
            + jnp.dot(cell_lat, wl[L:], preferred_element_type=jnp.float32)
            + bl_ref[...])                 # (B, 2(H-C))
    HC = H - C
    tense = tense_ref[...]                 # (B, C)
    h = jnp.concatenate([proj[:, :HC], tense], axis=1)     # decoder h0 (B, H)
    c = jnp.concatenate([proj[:, HC:], tense], axis=1)     # decoder c0 (B, H)

    # ---------------- decoder: unrolled LSTM + head + log-softmax + argmax ---
    dec_wih = dec_wih_ref[...]
    dec_whh = dec_whh_ref[...]
    dec_b = dec_b_ref[...]
    ow = ow_ref[...]                       # (H, VPAD)
    ob = ob_ref[...]                       # (1, VPAD); padded lanes = -1e9
    B = h.shape[0]
    Vp = ow.shape[1]

    if not teacher:
        emb = dec_in_ref[...]              # (VEMB_PAD, H) decoder embedding
        Vemb = emb.shape[0]
        tok = jnp.zeros((B, 1), jnp.int32)  # SOS token = 0

    idx_cols = []
    for t in range(length):
        if teacher:
            x = dec_in_ref[t]              # pre-gathered relu(emb[token]) (B, H)
        else:
            # free-running: one-hot gather of the previous mapped argmax
            onehot = (jax.lax.broadcasted_iota(jnp.int32, (B, Vemb), 1)
                      == tok).astype(jnp.float32)
            x = jnp.maximum(jnp.dot(onehot, emb,
                                    preferred_element_type=jnp.float32), 0.0)

        h, c = _lstm_step(x, h, c, dec_wih, dec_whh, dec_b)

        logits = jnp.dot(h, ow, preferred_element_type=jnp.float32) + ob   # (B, Vp)
        m = jnp.max(logits, axis=-1, keepdims=True)
        lse = jnp.log(jnp.sum(jnp.exp(logits - m), axis=-1, keepdims=True)) + m
        logp_ref[t] = logits - lse

        # torch.max tie-break: first occurrence of the maximum
        ids = jax.lax.broadcasted_iota(jnp.int32, logits.shape, 1)
        number = jnp.min(jnp.where(logits == m, ids, Vp), axis=-1, keepdims=True)
        idx_cols.append(number)            # (B, 1) int32

        if not teacher:
            tok = jnp.where(number != 1, number, 2)    # EOS(1) -> PAD(2)

    # single batched store of all argmax indices (no per-step narrow stores)
    idx_ref[...] = jnp.concatenate(idx_cols, axis=1)   # (B, length)


# ----------------------------- pallas wrapper --------------------------------
def _cvae_pallas(enc_x, dec_in, tense, eps, h0, p, *, teacher):
    length, B, _ = enc_x.shape
    Vp = p["out_w"].shape[1]
    kernel = functools.partial(_cvae_fused_kernel, teacher, length)
    return pl.pallas_call(
        kernel,
        out_shape=(jax.ShapeDtypeStruct((B, 4 * LATENT), jnp.float32),   # stats
                   jax.ShapeDtypeStruct((length, B, Vp), jnp.float32),   # logp
                   jax.ShapeDtypeStruct((B, length), jnp.int32)),        # argmax
        in_specs=[_VMEM] * 17,
        out_specs=(_VMEM, _VMEM, _VMEM),
    )(enc_x, dec_in, tense, eps, h0,
      p["enc_wih"], p["enc_whh"], p["enc_b"],
      p["dec_wih"], p["dec_whh"], p["dec_b"],
      p["w_stats"], p["b_stats"], p["w_lat"], p["b_lat"],
      p["out_w"], p["out_b"])


# ----------------------------- parameters ------------------------------------
def init_params(key):
    """Raw PyTorch-layout (transposed) parameters; one PRNG key per tensor."""
    H, V, L, C, T = HIDDEN, INPUT_SIZE, LATENT, COND, TENSE
    shapes = dict(
        te_em=(T, C),
        enc_emb=(V, H), dec_emb=(V, H),
        enc_w_ih=(H, 4 * H), enc_w_hh=(H, 4 * H), enc_b=(1, 4 * H),  # b_ih+b_hh folded
        dec_w_ih=(H, 4 * H), dec_w_hh=(H, 4 * H), dec_b=(1, 4 * H),
        out_w=(H, V), out_b=(1, V),
        h2m_w=(H, L), h2m_b=(1, L), h2v_w=(H, L), h2v_b=(1, L),
        c2m_w=(H, L), c2m_b=(1, L), c2v_w=(H, L), c2v_b=(1, L),
        l2h_w=(L, H - C), l2h_b=(1, H - C),
        l2c_w=(L, H - C), l2c_b=(1, H - C),
    )
    keys = jax.random.split(key, len(shapes))
    p = {n: (0.1 * jax.random.normal(k, s)).astype(jnp.float32)
         for (n, s), k in zip(shapes.items(), keys)}
    p["enc_emb"] = p["enc_emb"].at[2].set(0.0)     # padding_idx=2
    p["dec_emb"] = p["dec_emb"].at[2].set(0.0)     # padding_idx=2
    return p


def pack_params(p):
    """Fold weights once into the fused / lane-dense layouts the kernel uses."""
    H, V, L, C = HIDDEN, INPUT_SIZE, LATENT, COND
    f32 = jnp.float32

    dec_emb = jnp.zeros((VEMB_PAD, H), f32).at[:V].set(p["dec_emb"])  # padded rows

    out_w = jnp.zeros((H, VPAD), f32).at[:, :V].set(p["out_w"])       # (H, 128)
    out_b = jnp.full((1, VPAD), -1e9, f32).at[:, :V].set(p["out_b"])  # pad lanes lose

    # block-diagonal stats projection: [h|c] -> [hm|hv|cm|cv]  (lane-dense 4L=128)
    w_stats = jnp.zeros((2 * H, 4 * L), f32)
    w_stats = (w_stats.at[:H, 0 * L:1 * L].set(p["h2m_w"])
                      .at[:H, 1 * L:2 * L].set(p["h2v_w"])
                      .at[H:, 2 * L:3 * L].set(p["c2m_w"])
                      .at[H:, 3 * L:4 * L].set(p["c2v_w"]))
    b_stats = jnp.concatenate([p["h2m_b"], p["h2v_b"], p["c2m_b"], p["c2v_b"]], axis=1)

    # block-diagonal latent projection: [hid_lat|cell_lat] -> [lat2hid|lat2cell]
    HC = H - C
    w_lat = jnp.zeros((2 * L, 2 * HC), f32)
    w_lat = w_lat.at[:L, :HC].set(p["l2h_w"]).at[L:, HC:].set(p["l2c_w"])
    b_lat = jnp.concatenate([p["l2h_b"], p["l2c_b"]], axis=1)

    return dict(te_em=p["te_em"], enc_emb=p["enc_emb"], dec_emb=dec_emb,
                enc_wih=p["enc_w_ih"], enc_whh=p["enc_w_hh"], enc_b=p["enc_b"],
                dec_wih=p["dec_w_ih"], dec_whh=p["dec_w_hh"], dec_b=p["dec_b"],
                out_w=out_w, out_b=out_b,
                w_stats=w_stats, b_stats=b_stats, w_lat=w_lat, b_lat=b_lat)


# ----------------------------- CVAE forward ----------------------------------
@functools.partial(jax.jit, static_argnames=("teacher",))
def _cvae_forward_jit(params, input_ids, condition, key, *, teacher):
    B, length = input_ids.shape
    H, C, L, V = HIDDEN, COND, LATENT, INPUT_SIZE

    tense_emb = jnp.take(params["te_em"], condition, axis=0)             # (B, C)
    h0 = jnp.concatenate([jnp.zeros((B, H - C), jnp.float32), tense_emb], axis=1)

    # encoder inputs: pre-gather all step embeddings once -> (length, B, H)
    enc_x = jnp.transpose(jnp.take(params["enc_emb"], input_ids, axis=0), (1, 0, 2))

    if teacher:
        # teacher-forced inputs: step 0 = SOS(0), step i = mapped input[:, i-1]
        sos = jnp.zeros((B, 1), jnp.int32)
        prev = input_ids[:, :length - 1].astype(jnp.int32)
        prev = jnp.where(prev != 1, prev, 2)                 # EOS(1) -> PAD(2)
        dec_ids = jnp.concatenate([sos, prev], axis=1)       # (B, length)
        dec_in = jnp.transpose(
            jnp.maximum(jnp.take(params["dec_emb"], dec_ids, axis=0), 0.0),
            (1, 0, 2))                                       # (length, B, H)
    else:
        dec_in = params["dec_emb"]                           # (VEMB_PAD, H)

    k1, k2 = jax.random.split(key)
    eps = jnp.concatenate([jax.random.normal(k1, (B, L), jnp.float32),
                           jax.random.normal(k2, (B, L), jnp.float32)], axis=1)

    stats, logp, idx = _cvae_pallas(enc_x, dec_in, tense_emb, eps, h0,
                                    params, teacher=teacher)

    predict_full = idx                                       # (B, length)
    dist_full = jnp.transpose(logp[:, :, :V], (1, 0, 2))     # (B, length, V)

    hid_mean, hid_logvar = stats[:, :L], stats[:, L:2 * L]
    cell_mean, cell_logvar = stats[:, 2 * L:3 * L], stats[:, 3 * L:]

    # PyTorch's early `break`: number of steps until every row has fed EOS/PAD.
    fed = input_ids.astype(jnp.int32) if teacher else predict_full
    fed = jnp.where(fed != 1, fed, 2)
    all_eos = jnp.all(jnp.cumsum((fed == 2).astype(jnp.int32), axis=1) > 0, axis=0)
    steps = jnp.where(jnp.any(all_eos), jnp.argmax(all_eos) + 1, length).astype(jnp.int32)

    return (predict_full, dist_full,
            hid_mean[None], hid_logvar[None],
            cell_mean[None], cell_logvar[None], steps)


def cvae_forward(params, input_ids, condition, use_teacher_forcing, key):
    """Mirrors CVAE.forward: returns
       (predict, distribution, hid_mean, hid_logvar, cell_mean, cell_logvar)."""
    (predict_full, dist_full, hm, hv, cm, cv, steps) = _cvae_forward_jit(
        params, input_ids, condition, key, teacher=bool(use_teacher_forcing))
    # TODO(synk): PyTorch's data-dependent `break` needs the step count on the
    # host for a static slice size -> exactly one device->host sync here.
    steps = int(steps)
    return (predict_full[:, :steps], dist_full[:, :steps, :], hm, hv, cm, cv)


# ----------------------------- main -------------------------------------------
if __name__ == "__main__":
    root = jax.random.PRNGKey(0)
    k_param, k_data, k_cond, k_eps = jax.random.split(root, 4)

    params = pack_params(init_params(k_param))

    batch, length = 2, 8
    input_ids = jax.random.randint(k_data, (batch, length), 3, INPUT_SIZE,
                                   dtype=jnp.int32)
    condition = jax.random.randint(k_cond, (batch,), 0, TENSE, dtype=jnp.int32)

    # teacher-forcing path (matches CVAE.forward training usage)
    outs = cvae_forward(params, input_ids, condition,
                        use_teacher_forcing=True, key=k_eps)
    outs = jax.tree_util.tree_map(jax.block_until_ready, outs)
    predict, distribution, hid_mean, hid_logvar, cell_mean, cell_logvar = outs
    assert predict.shape[0] == batch and 1 <= predict.shape[1] <= length
    assert distribution.shape == (batch, predict.shape[1], INPUT_SIZE)
    assert hid_mean.shape == (1, batch, LATENT)
    assert cell_logvar.shape == (1, batch, LATENT)
    # log-softmax sanity: probabilities over the real 29-token vocab sum to 1
    assert bool(jnp.allclose(jnp.sum(jnp.exp(distribution), axis=-1), 1.0, atol=1e-3))

    # free-running path (exercises the in-kernel argmax-feedback gather)
    outs2 = cvae_forward(params, input_ids, condition,
                         use_teacher_forcing=False, key=k_eps)
    outs2 = jax.tree_util.tree_map(jax.block_until_ready, outs2)
    predict2, distribution2 = outs2[0], outs2[1]
    assert predict2.shape[0] == batch and 1 <= predict2.shape[1] <= length
    assert distribution2.shape == (batch, predict2.shape[1], INPUT_SIZE)

    print("KERNEL_OK")
</pallas_src>

<mosaic_0001>
module attributes {stable_mosaic.version = 11 : i64} {
  func.func @_cvae_fused_kernel(%arg0: memref<8x2x32xf32, #tpu.memory_space<vmem>>, %arg1: memref<8x2x32xf32, #tpu.memory_space<vmem>>, %arg2: memref<2x8xf32, #tpu.memory_space<vmem>>, %arg3: memref<2x64xf32, #tpu.memory_space<vmem>>, %arg4: memref<2x32xf32, #tpu.memory_space<vmem>>, %arg5: memref<32x128xf32, #tpu.memory_space<vmem>>, %arg6: memref<32x128xf32, #tpu.memory_space<vmem>>, %arg7: memref<1x128xf32, #tpu.memory_space<vmem>>, %arg8: memref<32x128xf32, #tpu.memory_space<vmem>>, %arg9: memref<32x128xf32, #tpu.memory_space<vmem>>, %arg10: memref<1x128xf32, #tpu.memory_space<vmem>>, %arg11: memref<64x128xf32, #tpu.memory_space<vmem>>, %arg12: memref<1x128xf32, #tpu.memory_space<vmem>>, %arg13: memref<64x48xf32, #tpu.memory_space<vmem>>, %arg14: memref<1x48xf32, #tpu.memory_space<vmem>>, %arg15: memref<32x128xf32, #tpu.memory_space<vmem>>, %arg16: memref<1x128xf32, #tpu.memory_space<vmem>>, %arg17: memref<2x128xf32, #tpu.memory_space<vmem>>, %arg18: memref<8x2x128xf32, #tpu.memory_space<vmem>>, %arg19: memref<2x8xi32, #tpu.memory_space<vmem>>) attributes {dimension_semantics = [], scalar_prefetch = 0 : i64, scratch_operands = 0 : i64, tpu.core_type = #tpu.core_type<tc>} {
    %c0 = arith.constant 0 : index
    %c0_0 = arith.constant 0 : index
    %0 = vector.load %arg5[%c0, %c0_0] : memref<32x128xf32, #tpu.memory_space<vmem>>, vector<32x128xf32>
    %c0_1 = arith.constant 0 : index
    %c0_2 = arith.constant 0 : index
    %1 = vector.load %arg6[%c0_1, %c0_2] : memref<32x128xf32, #tpu.memory_space<vmem>>, vector<32x128xf32>
    %c0_3 = arith.constant 0 : index
    %c0_4 = arith.constant 0 : index
    %2 = vector.load %arg7[%c0_3, %c0_4] : memref<1x128xf32, #tpu.memory_space<vmem>>, vector<1x128xf32>
    %c0_5 = arith.constant 0 : index
    %c0_6 = arith.constant 0 : index
    %3 = vector.load %arg4[%c0_5, %c0_6] : memref<2x32xf32, #tpu.memory_space<vmem>>, vector<2x32xf32>
    %c0_7 = arith.constant 0 : index
    %c0_8 = arith.constant 0 : index
    %4 = vector.load %arg4[%c0_7, %c0_8] : memref<2x32xf32, #tpu.memory_space<vmem>>, vector<2x32xf32>
    %c0_9 = arith.constant 0 : index
    %c0_10 = arith.constant 0 : index
    %c0_11 = arith.constant 0 : index
    %5 = vector.load %arg0[%c0_9, %c0_10, %c0_11] : memref<8x2x32xf32, #tpu.memory_space<vmem>>, vector<1x2x32xf32>
    %6 = vector.shape_cast %5 : vector<1x2x32xf32> to vector<2x32xf32>
    %cst = arith.constant dense<0.000000e+00> : vector<2x128xf32>
    %7 = tpu.matmul %6, %0, %cst {dimension_numbers = #tpu.dot_dimension_numbers<[1], [0], [0], [1], [0, 0, 1, 1], [], []>} : vector<2x32xf32>, vector<32x128xf32>, vector<2x128xf32> -> vector<2x128xf32>
    %cst_12 = arith.constant dense<0.000000e+00> : vector<2x128xf32>
    %8 = tpu.matmul %3, %1, %cst_12 {dimension_numbers = #tpu.dot_dimension_numbers<[1], [0], [0], [1], [0, 0, 1, 1], [], []>} : vector<2x32xf32>, vector<32x128xf32>, vector<2x128xf32> -> vector<2x128xf32>
    %9 = arith.addf %7, %8 : vector<2x128xf32>
    %10 = vector.broadcast %2 : vector<1x128xf32> to vector<2x128xf32>
    %11 = arith.addf %9, %10 : vector<2x128xf32>
    %12 = vector.extract_strided_slice %11 {offsets = [0, 0], sizes = [2, 32], strides = [1, 1]} : vector<2x128xf32> to vector<2x32xf32>
    %13 = arith.negf %12 : vector<2x32xf32>
    %14 = math.exp %13 : vector<2x32xf32>
    %cst_13 = arith.constant 1.000000e+00 : f32
    %15 = vector.broadcast %cst_13 : f32 to vector<2x32xf32>
    %16 = arith.addf %15, %14 : vector<2x32xf32>
    %17 = arith.divf %15, %16 : vector<2x32xf32>
    %18 = vector.extract_strided_slice %11 {offsets = [0, 32], sizes = [2, 32], strides = [1, 1]} : vector<2x128xf32> to vector<2x32xf32>
    %19 = arith.negf %18 : vector<2x32xf32>
    %20 = math.exp %19 : vector<2x32xf32>
    %cst_14 = arith.constant 1.000000e+00 : f32
    %21 = vector.broadcast %cst_14 : f32 to vector<2x32xf32>
    %22 = arith.addf %21, %20 : vector<2x32xf32>
    %23 = arith.divf %21, %22 : vector<2x32xf32>
    %24 = vector.extract_strided_slice %11 {offsets = [0, 64], sizes = [2, 32], strides = [1, 1]} : vector<2x128xf32> to vector<2x32xf32>
    %25 = math.tanh %24 : vector<2x32xf32>
    %26 = vector.extract_strided_slice %11 {offsets = [0, 96], sizes = [2, 32], strides = [1, 1]} : vector<2x128xf32> to vector<2x32xf32>
    %27 = arith.negf %26 : vector<2x32xf32>
    %28 = math.exp %27 : vector<2x32xf32>
    %cst_15 = arith.constant 1.000000e+00 : f32
    %29 = vector.broadcast %cst_15 : f32 to vector<2x32xf32>
    %30 = arith.addf %29, %28 : vector<2x32xf32>
    %31 = arith.divf %29, %30 : vector<2x32xf32>
    %32 = arith.mulf %23, %4 : vector<2x32xf32>
    %33 = arith.mulf %17, %25 : vector<2x32xf32>
    %34 = arith.addf %32, %33 : vector<2x32xf32>
    %35 = math.tanh %34 : vector<2x32xf32>
    %36 = arith.mulf %31, %35 : vector<2x32xf32>
    %c1 = arith.constant 1 : index
    %c0_16 = arith.constant 0 : index
    %c0_17 = arith.constant 0 : index
    %37 = vector.load %arg0[%c1, %c0_16, %c0_17] : memref<8x2x32xf32, #tpu.memory_space<vmem>>, vector<1x2x32xf32>
    %38 = vector.shape_cast %37 : vector<1x2x32xf32> to vector<2x32xf32>
    %cst_18 = arith.constant dense<0.000000e+00> : vector<2x128xf32>
    %39 = tpu.matmul %38, %0, %cst_18 {dimension_numbers = #tpu.dot_dimension_numbers<[1], [0], [0], [1], [0, 0, 1, 1], [], []>} : vector<2x32xf32>, vector<32x128xf32>, vector<2x128xf32> -> vector<2x128xf32>
    %cst_19 = arith.constant dense<0.000000e+00> : vector<2x128xf32>
    %40 = tpu.matmul %36, %1, %cst_19 {dimension_numbers = #tpu.dot_dimension_numbers<[1], [0], [0], [1], [0, 0, 1, 1], [], []>} : vector<2x32xf32>, vector<32x128xf32>, vector<2x128xf32> -> vector<2x128xf32>
    %41 = arith.addf %39, %40 : vector<2x128xf32>
    %42 = vector.broadcast %2 : vector<1x128xf32> to vector<2x128xf32>
    %43 = arith.addf %41, %42 : vector<2x128xf32>
    %44 = vector.extract_strided_slice %43 {offsets = [0, 0], sizes = [2, 32], strides = [1, 1]} : vector<2x128xf32> to vector<2x32xf32>
    %45 = arith.negf %44 : vector<2x32xf32>
    %46 = math.exp %45 : vector<2x32xf32>
    %cst_20 = arith.constant 1.000000e+00 : f32
    %47 = vector.broadcast %cst_20 : f32 to vector<2x32xf32>
    %48 = arith.addf %47, %46 : vector<2x32xf32>
    %49 = arith.divf %47, %48 : vector<2x32xf32>
    %50 = vector.extract_strided_slice %43 {offsets = [0, 32], sizes = [2, 32], strides = [1, 1]} : vector<2x128xf32> to vector<2x32xf32>
    %51 = arith.negf %50 : vector<2x32xf32>
    %52 = math.exp %51 : vector<2x32xf32>
    %cst_21 = arith.constant 1.000000e+00 : f32
    %53 = vector.broadcast %cst_21 : f32 to vector<2x32xf32>
    %54 = arith.addf %53, %52 : vector<2x32xf32>
    %55 = arith.divf %53, %54 : vector<2x32xf32>
    %56 = vector.extract_strided_slice %43 {offsets = [0, 64], sizes = [2, 32], strides = [1, 1]} : vector<2x128xf32> to vector<2x32xf32>
    %57 = math.tanh %56 : vector<2x32xf32>
    %58 = vector.extract_strided_slice %43 {offsets = [0, 96], sizes = [2, 32], strides = [1, 1]} : vector<2x128xf32> to vector<2x32xf32>
    %59 = arith.negf %58 : vector<2x32xf32>
    %60 = math.exp %59 : vector<2x32xf32>
    %cst_22 = arith.constant 1.000000e+00 : f32
    %61 = vector.broadcast %cst_22 : f32 to vector<2x32xf32>
    %62 = arith.addf %61, %60 : vector<2x32xf32>
    %63 = arith.divf %61, %62 : vector<2x32xf32>
    %64 = arith.mulf %55, %34 : vector<2x32xf32>
    %65 = arith.mulf %49, %57 : vector<2x32xf32>
    %66 = arith.addf %64, %65 : vector<2x32xf32>
    %67 = math.tanh %66 : vector<2x32xf32>
    %68 = arith.mulf %63, %67 : vector<2x32xf32>
    %c2 = arith.constant 2 : index
    %c0_23 = arith.constant 0 : index
    %c0_24 = arith.constant 0 : index
    %69 = vector.load %arg0[%c2, %c0_23, %c0_24] : memref<8x2x32xf32, #tpu.memory_space<vmem>>, vector<1x2x32xf32>
    %70 = vector.shape_cast %69 : vector<1x2x32xf32> to vector<2x32xf32>
    %cst_25 = arith.constant dense<0.000000e+00> : vector<2x128xf32>
    %71 = tpu.matmul %70, %0, %cst_25 {dimension_numbers = #tpu.dot_dimension_numbers<[1], [0], [0], [1], [0, 0, 1, 1], [], []>} : vector<2x32xf32>, vector<32x128xf32>, vector<2x128xf32> -> vector<2x128xf32>
    %cst_26 = arith.constant dense<0.000000e+00> : vector<2x128xf32>
    %72 = tpu.matmul %68, %1, %cst_26 {dimension_numbers = #tpu.dot_dimension_numbers<[1], [0], [0], [1], [0, 0, 1, 1], [], []>} : vector<2x32xf32>, vector<32x128xf32>, vector<2x128xf32> -> vector<2x128xf32>
    %73 = arith.addf %71, %72 : vector<2x128xf32>
    %74 = vector.broadcast %2 : vector<1x128xf32> to vector<2x128xf32>
    %75 = arith.addf %73, %74 : vector<2x128xf32>
    %76 = vector.extract_strided_slice %75 {offsets = [0, 0], sizes = [2, 32], strides = [1, 1]} : vector<2x128xf32> to vector<2x32xf32>
    %77 = arith.negf %76 : vector<2x32xf32>
    %78 = math.exp %77 : vector<2x32xf32>
    %cst_27 = arith.constant 1.000000e+00 : f32
    %79 = vector.broadcast %cst_27 : f32 to vector<2x32xf32>
    %80 = arith.addf %79, %78 : vector<2x32xf32>
    %81 = arith.divf %79, %80 : vector<2x32xf32>
    %82 = vector.extract_strided_slice %75 {offsets = [0, 32], sizes = [2, 32], strides = [1, 1]} : vector<2x128xf32> to vector<2x32xf32>
    %83 = arith.negf %82 : vector<2x32xf32>
    %84 = math.exp %83 : vector<2x32xf32>
    %cst_28 = arith.constant 1.000000e+00 : f32
    %85 = vector.broadcast %cst_28 : f32 to vector<2x32xf32>
    %86 = arith.addf %85, %84 : vector<2x32xf32>
    %87 = arith.divf %85, %86 : vector<2x32xf32>
    %88 = vector.extract_strided_slice %75 {offsets = [0, 64], sizes = [2, 32], strides = [1, 1]} : vector<2x128xf32> to vector<2x32xf32>
    %89 = math.tanh %88 : vector<2x32xf32>
    %90 = vector.extract_strided_slice %75 {offsets = [0, 96], sizes = [2, 32], strides = [1, 1]} : vector<2x128xf32> to vector<2x32xf32>
    %91 = arith.negf %90 : vector<2x32xf32>
    %92 = math.exp %91 : vector<2x32xf32>
    %cst_29 = arith.constant 1.000000e+00 : f32
    %93 = vector.broadcast %cst_29 : f32 to vector<2x32xf32>
    %94 = arith.addf %93, %92 : vector<2x32xf32>
    %95 = arith.divf %93, %94 : vector<2x32xf32>
    %96 = arith.mulf %87, %66 : vector<2x32xf32>
    %97 = arith.mulf %81, %89 : vector<2x32xf32>
    %98 = arith.addf %96, %97 : vector<2x32xf32>
    %99 = math.tanh %98 : vector<2x32xf32>
    %100 = arith.mulf %95, %99 : vector<2x32xf32>
    %c3 = arith.constant 3 : index
    %c0_30 = arith.constant 0 : index
    %c0_31 = arith.constant 0 : index
    %101 = vector.load %arg0[%c3, %c0_30, %c0_31] : memref<8x2x32xf32, #tpu.memory_space<vmem>>, vector<1x2x32xf32>
    %102 = vector.shape_cast %101 : vector<1x2x32xf32> to vector<2x32xf32>
    %cst_32 = arith.constant dense<0.000000e+00> : vector<2x128xf32>
    %103 = tpu.matmul %102, %0, %cst_32 {dimension_numbers = #tpu.dot_dimension_numbers<[1], [0], [0], [1], [0, 0, 1, 1], [], []>} : vector<2x32xf32>, vector<32x128xf32>, vector<2x128xf32> -> vector<2x128xf32>
    %cst_33 = arith.constant dense<0.000000e+00> : vector<2x128xf32>
    %104 = tpu.matmul %100, %1, %cst_33 {dimension_numbers = #tpu.dot_dimension_numbers<[1], [0], [0], [1], [0, 0, 1, 1], [], []>} : vector<2x32xf32>, vector<32x128xf32>, vector<2x128xf32> -> vector<2x128xf32>
    %105 = arith.addf %103, %104 : vector<2x128xf32>
    %106 = vector.broadcast %2 : vector<1x128xf32> to vector<2x128xf32>
    %107 = arith.addf %105, %106 : vector<2x128xf32>
    %108 = vector.extract_strided_slice %107 {offsets = [0, 0], sizes = [2, 32], strides = [1, 1]} : vector<2x128xf32> to vector<2x32xf32>
    %109 = arith.negf %108 : vector<2x32xf32>
    %110 = math.exp %109 : vector<2x32xf32>
    %cst_34 = arith.constant 1.000000e+00 : f32
    %111 = vector.broadcast %cst_34 : f32 to vector<2x32xf32>
    %112 = arith.addf %111, %110 : vector<2x32xf32>
    %113 = arith.divf %111, %112 : vector<2x32xf32>
    %114 = vector.extract_strided_slice %107 {offsets = [0, 32], sizes = [2, 32], strides = [1, 1]} : vector<2x128xf32> to vector<2x32xf32>
    %115 = arith.negf %114 : vector<2x32xf32>
    %116 = math.exp %115 : vector<2x32xf32>
    %cst_35 = arith.constant 1.000000e+00 : f32
    %117 = vector.broadcast %cst_35 : f32 to vector<2x32xf32>
    %118 = arith.addf %117, %116 : vector<2x32xf32>
    %119 = arith.divf %117, %118 : vector<2x32xf32>
    %120 = vector.extract_strided_slice %107 {offsets = [0, 64], sizes = [2, 32], strides = [1, 1]} : vector<2x128xf32> to vector<2x32xf32>
    %121 = math.tanh %120 : vector<2x32xf32>
    %122 = vector.extract_strided_slice %107 {offsets = [0, 96], sizes = [2, 32], strides = [1, 1]} : vector<2x128xf32> to vector<2x32xf32>
    %123 = arith.negf %122 : vector<2x32xf32>
    %124 = math.exp %123 : vector<2x32xf32>
    %cst_36 = arith.constant 1.000000e+00 : f32
    %125 = vector.broadcast %cst_36 : f32 to vector<2x32xf32>
    %126 = arith.addf %125, %124 : vector<2x32xf32>
    %127 = arith.divf %125, %126 : vector<2x32xf32>
    %128 = arith.mulf %119, %98 : vector<2x32xf32>
    %129 = arith.mulf %113, %121 : vector<2x32xf32>
    %130 = arith.addf %128, %129 : vector<2x32xf32>
    %131 = math.tanh %130 : vector<2x32xf32>
    %132 = arith.mulf %127, %131 : vector<2x32xf32>
    %c4 = arith.constant 4 : index
    %c0_37 = arith.constant 0 : index
    %c0_38 = arith.constant 0 : index
    %133 = vector.load %arg0[%c4, %c0_37, %c0_38] : memref<8x2x32xf32, #tpu.memory_space<vmem>>, vector<1x2x32xf32>
    %134 = vector.shape_cast %133 : vector<1x2x32xf32> to vector<2x32xf32>
    %cst_39 = arith.constant dense<0.000000e+00> : vector<2x128xf32>
    %135 = tpu.matmul %134, %0, %cst_39 {dimension_numbers = #tpu.dot_dimension_numbers<[1], [0], [0], [1], [0, 0, 1, 1], [], []>} : vector<2x32xf32>, vector<32x128xf32>, vector<2x128xf32> -> vector<2x128xf32>
    %cst_40 = arith.constant dense<0.000000e+00> : vector<2x128xf32>
    %136 = tpu.matmul %132, %1, %cst_40 {dimension_numbers = #tpu.dot_dimension_numbers<[1], [0], [0], [1], [0, 0, 1, 1], [], []>} : vector<2x32xf32>, vector<32x128xf32>, vector<2x128xf32> -> vector<2x128xf32>
    %137 = arith.addf %135, %136 : vector<2x128xf32>
    %138 = vector.broadcast %2 : vector<1x128xf32> to vector<2x128xf32>
    %139 = arith.addf %137, %138 : vector<2x128xf32>
    %140 = vector.extract_strided_slice %139 {offsets = [0, 0], sizes = [2, 32], strides = [1, 1]} : vector<2x128xf32> to vector<2x32xf32>
    %141 = arith.negf %140 : vector<2x32xf32>
    %142 = math.exp %141 : vector<2x32xf32>
    %cst_41 = arith.constant 1.000000e+00 : f32
    %143 = vector.broadcast %cst_41 : f32 to vector<2x32xf32>
    %144 = arith.addf %143, %142 : vector<2x32xf32>
    %145 = arith.divf %143, %144 : vector<2x32xf32>
    %146 = vector.extract_strided_slice %139 {offsets = [0, 32], sizes = [2, 32], strides = [1, 1]} : vector<2x128xf32> to vector<2x32xf32>
    %147 = arith.negf %146 : vector<2x32xf32>
    %148 = math.exp %147 : vector<2x32xf32>
    %cst_42 = arith.constant 1.000000e+00 : f32
    %149 = vector.broadcast %cst_42 : f32 to vector<2x32xf32>
    %150 = arith.addf %149, %148 : vector<2x32xf32>
    %151 = arith.divf %149, %150 : vector<2x32xf32>
    %152 = vector.extract_strided_slice %139 {offsets = [0, 64], sizes = [2, 32], strides = [1, 1]} : vector<2x128xf32> to vector<2x32xf32>
    %153 = math.tanh %152 : vector<2x32xf32>
    %154 = vector.extract_strided_slice %139 {offsets = [0, 96], sizes = [2, 32], strides = [1, 1]} : vector<2x128xf32> to vector<2x32xf32>
    %155 = arith.negf %154 : vector<2x32xf32>
    %156 = math.exp %155 : vector<2x32xf32>
    %cst_43 = arith.constant 1.000000e+00 : f32
    %157 = vector.broadcast %cst_43 : f32 to vector<2x32xf32>
    %158 = arith.addf %157, %156 : vector<2x32xf32>
    %159 = arith.divf %157, %158 : vector<2x32xf32>
    %160 = arith.mulf %151, %130 : vector<2x32xf32>
    %161 = arith.mulf %145, %153 : vector<2x32xf32>
    %162 = arith.addf %160, %161 : vector<2x32xf32>
    %163 = math.tanh %162 : vector<2x32xf32>
    %164 = arith.mulf %159, %163 : vector<2x32xf32>
    %c5 = arith.constant 5 : index
    %c0_44 = arith.constant 0 : index
    %c0_45 = arith.constant 0 : index
    %165 = vector.load %arg0[%c5, %c0_44, %c0_45] : memref<8x2x32xf32, #tpu.memory_space<vmem>>, vector<1x2x32xf32>
    %166 = vector.shape_cast %165 : vector<1x2x32xf32> to vector<2x32xf32>
    %cst_46 = arith.constant dense<0.000000e+00> : vector<2x128xf32>
    %167 = tpu.matmul %166, %0, %cst_46 {dimension_numbers = #tpu.dot_dimension_numbers<[1], [0], [0], [1], [0, 0, 1, 1], [], []>} : vector<2x32xf32>, vector<32x128xf32>, vector<2x128xf32> -> vector<2x128xf32>
    %cst_47 = arith.constant dense<0.000000e+00> : vector<2x128xf32>
    %168 = tpu.matmul %164, %1, %cst_47 {dimension_numbers = #tpu.dot_dimension_numbers<[1], [0], [0], [1], [0, 0, 1, 1], [], []>} : vector<2x32xf32>, vector<32x128xf32>, vector<2x128xf32> -> vector<2x128xf32>
    %169 = arith.addf %167, %168 : vector<2x128xf32>
    %170 = vector.broadcast %2 : vector<1x128xf32> to vector<2x128xf32>
    %171 = arith.addf %169, %170 : vector<2x128xf32>
    %172 = vector.extract_strided_slice %171 {offsets = [0, 0], sizes = [2, 32], strides = [1, 1]} : vector<2x128xf32> to vector<2x32xf32>
    %173 = arith.negf %172 : vector<2x32xf32>
    %174 = math.exp %173 : vector<2x32xf32>
    %cst_48 = arith.constant 1.000000e+00 : f32
    %175 = vector.broadcast %cst_48 : f32 to vector<2x32xf32>
    %176 = arith.addf %175, %174 : vector<2x32xf32>
    %177 = arith.divf %175, %176 : vector<2x32xf32>
    %178 = vector.extract_strided_slice %171 {offsets = [0, 32], sizes = [2, 32], strides = [1, 1]} : vector<2x128xf32> to vector<2x32xf32>
    %179 = arith.negf %178 : vector<2x32xf32>
    %180 = math.exp %179 : vector<2x32xf32>
    %cst_49 = arith.constant 1.000000e+00 : f32
    %181 = vector.broadcast %cst_49 : f32 to vector<2x32xf32>
    %182 = arith.addf %181, %180 : vector<2x32xf32>
    %183 = arith.divf %181, %182 : vector<2x32xf32>
    %184 = vector.extract_strided_slice %171 {offsets = [0, 64], sizes = [2, 32], strides = [1, 1]} : vector<2x128xf32> to vector<2x32xf32>
    %185 = math.tanh %184 : vector<2x32xf32>
    %186 = vector.extract_strided_slice %171 {offsets = [0, 96], sizes = [2, 32], strides = [1, 1]} : vector<2x128xf32> to vector<2x32xf32>
    %187 = arith.negf %186 : vector<2x32xf32>
    %188 = math.exp %187 : vector<2x32xf32>
    %cst_50 = arith.constant 1.000000e+00 : f32
    %189 = vector.broadcast %cst_50 : f32 to vector<2x32xf32>
    %190 = arith.addf %189, %188 : vector<2x32xf32>
    %191 = arith.divf %189, %190 : vector<2x32xf32>
    %192 = arith.mulf %183, %162 : vector<2x32xf32>
    %193 = arith.mulf %177, %185 : vector<2x32xf32>
    %194 = arith.addf %192, %193 : vector<2x32xf32>
    %195 = math.tanh %194 : vector<2x32xf32>
    %196 = arith.mulf %191, %195 : vector<2x32xf32>
    %c6 = arith.constant 6 : index
    %c0_51 = arith.constant 0 : index
    %c0_52 = arith.constant 0 : index
    %197 = vector.load %arg0[%c6, %c0_51, %c0_52] : memref<8x2x32xf32, #tpu.memory_space<vmem>>, vector<1x2x32xf32>
    %198 = vector.shape_cast %197 : vector<1x2x32xf32> to vector<2x32xf32>
    %cst_53 = arith.constant dense<0.000000e+00> : vector<2x128xf32>
    %199 = tpu.matmul %198, %0, %cst_53 {dimension_numbers = #tpu.dot_dimension_numbers<[1], [0], [0], [1], [0, 0, 1, 1], [], []>} : vector<2x32xf32>, vector<32x128xf32>, vector<2x128xf32> -> vector<2x128xf32>
    %cst_54 = arith.constant dense<0.000000e+00> : vector<2x128xf32>
    %200 = tpu.matmul %196, %1, %cst_54 {dimension_numbers = #tpu.dot_dimension_numbers<[1], [0], [0], [1], [0, 0, 1, 1], [], []>} : vector<2x32xf32>, vector<32x128xf32>, vector<2x128xf32> -> vector<2x128xf32>
    %201 = arith.addf %199, %200 : vector<2x128xf32>
    %202 = vector.broadcast %2 : vector<1x128xf32> to vector<2x128xf32>
    %203 = arith.addf %201, %202 : vector<2x128xf32>
    %204 = vector.extract_strided_slice %203 {offsets = [0, 0], sizes = [2, 32], strides = [1, 1]} : vector<2x128xf32> to vector<2x32xf32>
    %205 = arith.negf %204 : vector<2x32xf32>
    %206 = math.exp %205 : vector<2x32xf32>
    %cst_55 = arith.constant 1.000000e+00 : f32
    %207 = vector.broadcast %cst_55 : f32 to vector<2x32xf32>
    %208 = arith.addf %207, %206 : vector<2x32xf32>
    %209 = arith.divf %207, %208 : vector<2x32xf32>
    %210 = vector.extract_strided_slice %203 {offsets = [0, 32], sizes = [2, 32], strides = [1, 1]} : vector<2x128xf32> to vector<2x32xf32>
    %211 = arith.negf %210 : vector<2x32xf32>
    %212 = math.exp %211 : vector<2x32xf32>
    %cst_56 = arith.constant 1.000000e+00 : f32
    %213 = vector.broadcast %cst_56 : f32 to vector<2x32xf32>
    %214 = arith.addf %213, %212 : vector<2x32xf32>
    %215 = arith.divf %213, %214 : vector<2x32xf32>
    %216 = vector.extract_strided_slice %203 {offsets = [0, 64], sizes = [2, 32], strides = [1, 1]} : vector<2x128xf32> to vector<2x32xf32>
    %217 = math.tanh %216 : vector<2x32xf32>
    %218 = vector.extract_strided_slice %203 {offsets = [0, 96], sizes = [2, 32], strides = [1, 1]} : vector<2x128xf32> to vector<2x32xf32>
    %219 = arith.negf %218 : vector<2x32xf32>
    %220 = math.exp %219 : vector<2x32xf32>
    %cst_57 = arith.constant 1.000000e+00 : f32
    %221 = vector.broadcast %cst_57 : f32 to vector<2x32xf32>
    %222 = arith.addf %221, %220 : vector<2x32xf32>
    %223 = arith.divf %221, %222 : vector<2x32xf32>
    %224 = arith.mulf %215, %194 : vector<2x32xf32>
    %225 = arith.mulf %209, %217 : vector<2x32xf32>
    %226 = arith.addf %224, %225 : vector<2x32xf32>
    %227 = math.tanh %226 : vector<2x32xf32>
    %228 = arith.mulf %223, %227 : vector<2x32xf32>
    %c7 = arith.constant 7 : index
    %c0_58 = arith.constant 0 : index
    %c0_59 = arith.constant 0 : index
    %229 = vector.load %arg0[%c7, %c0_58, %c0_59] : memref<8x2x32xf32, #tpu.memory_space<vmem>>, vector<1x2x32xf32>
    %230 = vector.shape_cast %229 : vector<1x2x32xf32> to vector<2x32xf32>
    %cst_60 = arith.constant dense<0.000000e+00> : vector<2x128xf32>
    %231 = tpu.matmul %230, %0, %cst_60 {dimension_numbers = #tpu.dot_dimension_numbers<[1], [0], [0], [1], [0, 0, 1, 1], [], []>} : vector<2x32xf32>, vector<32x128xf32>, vector<2x128xf32> -> vector<2x128xf32>
    %cst_61 = arith.constant dense<0.000000e+00> : vector<2x128xf32>
    %232 = tpu.matmul %228, %1, %cst_61 {dimension_numbers = #tpu.dot_dimension_numbers<[1], [0], [0], [1], [0, 0, 1, 1], [], []>} : vector<2x32xf32>, vector<32x128xf32>, vector<2x128xf32> -> vector<2x128xf32>
    %233 = arith.addf %231, %232 : vector<2x128xf32>
    %234 = vector.broadcast %2 : vector<1x128xf32> to vector<2x128xf32>
    %235 = arith.addf %233, %234 : vector<2x128xf32>
    %236 = vector.extract_strided_slice %235 {offsets = [0, 0], sizes = [2, 32], strides = [1, 1]} : vector<2x128xf32> to vector<2x32xf32>
    %237 = arith.negf %236 : vector<2x32xf32>
    %238 = math.exp %237 : vector<2x32xf32>
    %cst_62 = arith.constant 1.000000e+00 : f32
    %239 = vector.broadcast %cst_62 : f32 to vector<2x32xf32>
    %240 = arith.addf %239, %238 : vector<2x32xf32>
    %241 = arith.divf %239, %240 : vector<2x32xf32>
    %242 = vector.extract_strided_slice %235 {offsets = [0, 32], sizes = [2, 32], strides = [1, 1]} : vector<2x128xf32> to vector<2x32xf32>
    %243 = arith.negf %242 : vector<2x32xf32>
    %244 = math.exp %243 : vector<2x32xf32>
    %cst_63 = arith.constant 1.000000e+00 : f32
    %245 = vector.broadcast %cst_63 : f32 to vector<2x32xf32>
    %246 = arith.addf %245, %244 : vector<2x32xf32>
    %247 = arith.divf %245, %246 : vector<2x32xf32>
    %248 = vector.extract_strided_slice %235 {offsets = [0, 64], sizes = [2, 32], strides = [1, 1]} : vector<2x128xf32> to vector<2x32xf32>
    %249 = math.tanh %248 : vector<2x32xf32>
    %250 = vector.extract_strided_slice %235 {offsets = [0, 96], sizes = [2, 32], strides = [1, 1]} : vector<2x128xf32> to vector<2x32xf32>
    %251 = arith.negf %250 : vector<2x32xf32>
    %252 = math.exp %251 : vector<2x32xf32>
    %cst_64 = arith.constant 1.000000e+00 : f32
    %253 = vector.broadcast %cst_64 : f32 to vector<2x32xf32>
    %254 = arith.addf %253, %252 : vector<2x32xf32>
    %255 = arith.divf %253, %254 : vector<2x32xf32>
    %256 = arith.mulf %247, %226 : vector<2x32xf32>
    %257 = arith.mulf %241, %249 : vector<2x32xf32>
    %258 = arith.addf %256, %257 : vector<2x32xf32>
    %259 = math.tanh %258 : vector<2x32xf32>
    %260 = arith.mulf %255, %259 : vector<2x32xf32>
    %c0_65 = arith.constant 0 : index
    %c0_66 = arith.constant 0 : index
    %261 = vector.load %arg11[%c0_65, %c0_66] : memref<64x128xf32, #tpu.memory_space<vmem>>, vector<64x128xf32>
    %262 = vector.extract_strided_slice %261 {offsets = [0, 0], sizes = [32, 128], strides = [1, 1]} : vector<64x128xf32> to vector<32x128xf32>
    %cst_67 = arith.constant dense<0.000000e+00> : vector<2x128xf32>
    %263 = tpu.matmul %260, %262, %cst_67 {dimension_numbers = #tpu.dot_dimension_numbers<[1], [0], [0], [1], [0, 0, 1, 1], [], []>} : vector<2x32xf32>, vector<32x128xf32>, vector<2x128xf32> -> vector<2x128xf32>
    %264 = vector.extract_strided_slice %261 {offsets = [32, 0], sizes = [32, 128], strides = [1, 1]} : vector<64x128xf32> to vector<32x128xf32>
    %cst_68 = arith.constant dense<0.000000e+00> : vector<2x128xf32>
    %265 = tpu.matmul %258, %264, %cst_68 {dimension_numbers = #tpu.dot_dimension_numbers<[1], [0], [0], [1], [0, 0, 1, 1], [], []>} : vector<2x32xf32>, vector<32x128xf32>, vector<2x128xf32> -> vector<2x128xf32>
    %266 = arith.addf %263, %265 : vector<2x128xf32>
    %c0_69 = arith.constant 0 : index
    %c0_70 = arith.constant 0 : index
    %267 = vector.load %arg12[%c0_69, %c0_70] : memref<1x128xf32, #tpu.memory_space<vmem>>, vector<1x128xf32>
    %268 = vector.broadcast %267 : vector<1x128xf32> to vector<2x128xf32>
    %269 = arith.addf %266, %268 : vector<2x128xf32>
    %c0_71 = arith.constant 0 : index
    %c0_72 = arith.constant 0 : index
    %270 = vector.load %arg17[%c0_71, %c0_72] : memref<2x128xf32, #tpu.memory_space<vmem>>, vector<2x128xf32>
    tpu.vector_store %arg17[%c0_71, %c0_72], %269 {strides = array<i32>} : memref<2x128xf32, #tpu.memory_space<vmem>>, vector<2x128xf32>,
    %c0_73 = arith.constant 0 : index
    %c0_74 = arith.constant 0 : index
    %271 = vector.load %arg3[%c0_73, %c0_74] : memref<2x64xf32, #tpu.memory_space<vmem>>, vector<2x64xf32>
    %272 = vector.extract_strided_slice %269 {offsets = [0, 0], sizes = [2, 32], strides = [1, 1]} : vector<2x128xf32> to vector<2x32xf32>
    %273 = vector.extract_strided_slice %271 {offsets = [0, 0], sizes = [2, 32], strides = [1, 1]} : vector<2x64xf32> to vector<2x32xf32>
    %274 = vector.extract_strided_slice %269 {offsets = [0, 32], sizes = [2, 32], strides = [1, 1]} : vector<2x128xf32> to vector<2x32xf32>
    %cst_75 = arith.constant 5.000000e-01 : f32
    %275 = vector.broadcast %cst_75 : f32 to vector<2x32xf32>
    %276 = arith.mulf %275, %274 : vector<2x32xf32>
    %277 = math.exp %276 : vector<2x32xf32>
    %278 = arith.mulf %273, %277 : vector<2x32xf32>
    %279 = arith.addf %272, %278 : vector<2x32xf32>
    %280 = vector.extract_strided_slice %269 {offsets = [0, 64], sizes = [2, 32], strides = [1, 1]} : vector<2x128xf32> to vector<2x32xf32>
    %281 = vector.extract_strided_slice %271 {offsets = [0, 32], sizes = [2, 32], strides = [1, 1]} : vector<2x64xf32> to vector<2x32xf32>
    %282 = vector.extract_strided_slice %269 {offsets = [0, 96], sizes = [2, 32], strides = [1, 1]} : vector<2x128xf32> to vector<2x32xf32>
    %cst_76 = arith.constant 5.000000e-01 : f32
    %283 = vector.broadcast %cst_76 : f32 to vector<2x32xf32>
    %284 = arith.mulf %283, %282 : vector<2x32xf32>
    %285 = math.exp %284 : vector<2x32xf32>
    %286 = arith.mulf %281, %285 : vector<2x32xf32>
    %287 = arith.addf %280, %286 : vector<2x32xf32>
    %c0_77 = arith.constant 0 : index
    %c0_78 = arith.constant 0 : index
    %288 = vector.load %arg13[%c0_77, %c0_78] : memref<64x48xf32, #tpu.memory_space<vmem>>, vector<64x48xf32>
    %289 = vector.extract_strided_slice %288 {offsets = [0, 0], sizes = [32, 48], strides = [1, 1]} : vector<64x48xf32> to vector<32x48xf32>
    %cst_79 = arith.constant dense<0.000000e+00> : vector<2x48xf32>
    %290 = tpu.matmul %279, %289, %cst_79 {dimension_numbers = #tpu.dot_dimension_numbers<[1], [0], [0], [1], [0, 0, 1, 1], [], []>} : vector<2x32xf32>, vector<32x48xf32>, vector<2x48xf32> -> vector<2x48xf32>
    %291 = vector.extract_strided_slice %288 {offsets = [32, 0], sizes = [32, 48], strides = [1, 1]} : vector<64x48xf32> to vector<32x48xf32>
    %cst_80 = arith.constant dense<0.000000e+00> : vector<2x48xf32>
    %292 = tpu.matmul %287, %291, %cst_80 {dimension_numbers = #tpu.dot_dimension_numbers<[1], [0], [0], [1], [0, 0, 1, 1], [], []>} : vector<2x32xf32>, vector<32x48xf32>, vector<2x48xf32> -> vector<2x48xf32>
    %293 = arith.addf %290, %292 : vector<2x48xf32>
    %c0_81 = arith.constant 0 : index
    %c0_82 = arith.constant 0 : index
    %294 = vector.load %arg14[%c0_81, %c0_82] : memref<1x48xf32, #tpu.memory_space<vmem>>, vector<1x48xf32>
    %295 = vector.broadcast %294 : vector<1x48xf32> to vector<2x48xf32>
    %296 = arith.addf %293, %295 : vector<2x48xf32>
    %c0_83 = arith.constant 0 : index
    %c0_84 = arith.constant 0 : index
    %297 = vector.load %arg2[%c0_83, %c0_84] : memref<2x8xf32, #tpu.memory_space<vmem>>, vector<2x8xf32>
    %298 = vector.extract_strided_slice %296 {offsets = [0, 0], sizes = [2, 24], strides = [1, 1]} : vector<2x48xf32> to vector<2x24xf32>
    %299 = tpu.concatenate %298, %297 in 1 : vector<2x24xf32>, vector<2x8xf32> -> vector<2x32xf32>
    %300 = vector.extract_strided_slice %296 {offsets = [0, 24], sizes = [2, 24], strides = [1, 1]} : vector<2x48xf32> to vector<2x24xf32>
    %301 = tpu.concatenate %300, %297 in 1 : vector<2x24xf32>, vector<2x8xf32> -> vector<2x32xf32>
    %c0_85 = arith.constant 0 : index
    %c0_86 = arith.constant 0 : index
    %302 = vector.load %arg8[%c0_85, %c0_86] : memref<32x128xf32, #tpu.memory_space<vmem>>, vector<32x128xf32>
    %c0_87 = arith.constant 0 : index
    %c0_88 = arith.constant 0 : index
    %303 = vector.load %arg9[%c0_87, %c0_88] : memref<32x128xf32, #tpu.memory_space<vmem>>, vector<32x128xf32>
    %c0_89 = arith.constant 0 : index
    %c0_90 = arith.constant 0 : index
    %304 = vector.load %arg10[%c0_89, %c0_90] : memref<1x128xf32, #tpu.memory_space<vmem>>, vector<1x128xf32>
    %c0_91 = arith.constant 0 : index
    %c0_92 = arith.constant 0 : index
    %305 = vector.load %arg15[%c0_91, %c0_92] : memref<32x128xf32, #tpu.memory_space<vmem>>, vector<32x128xf32>
    %c0_93 = arith.constant 0 : index
    %c0_94 = arith.constant 0 : index
    %306 = vector.load %arg16[%c0_93, %c0_94] : memref<1x128xf32, #tpu.memory_space<vmem>>, vector<1x128xf32>
    %c0_95 = arith.constant 0 : index
    %c0_96 = arith.constant 0 : index
    %c0_97 = arith.constant 0 : index
    %307 = vector.load %arg1[%c0_95, %c0_96, %c0_97] : memref<8x2x32xf32, #tpu.memory_space<vmem>>, vector<1x2x32xf32>
    %308 = vector.shape_cast %307 : vector<1x2x32xf32> to vector<2x32xf32>
    %cst_98 = arith.constant dense<0.000000e+00> : vector<2x128xf32>
    %309 = tpu.matmul %308, %302, %cst_98 {dimension_numbers = #tpu.dot_dimension_numbers<[1], [0], [0], [1], [0, 0, 1, 1], [], []>} : vector<2x32xf32>, vector<32x128xf32>, vector<2x128xf32> -> vector<2x128xf32>
    %cst_99 = arith.constant dense<0.000000e+00> : vector<2x128xf32>
    %310 = tpu.matmul %299, %303, %cst_99 {dimension_numbers = #tpu.dot_dimension_numbers<[1], [0], [0], [1], [0, 0, 1, 1], [], []>} : vector<2x32xf32>, vector<32x128xf32>, vector<2x128xf32> -> vector<2x128xf32>
    %311 = arith.addf %309, %310 : vector<2x128xf32>
    %312 = vector.broadcast %304 : vector<1x128xf32> to vector<2x128xf32>
    %313 = arith.addf %311, %312 : vector<2x128xf32>
    %314 = vector.extract_strided_slice %313 {offsets = [0, 0], sizes = [2, 32], strides = [1, 1]} : vector<2x128xf32> to vector<2x32xf32>
    %315 = arith.negf %314 : vector<2x32xf32>
    %316 = math.exp %315 : vector<2x32xf32>
    %cst_100 = arith.constant 1.000000e+00 : f32
    %317 = vector.broadcast %cst_100 : f32 to vector<2x32xf32>
    %318 = arith.addf %317, %316 : vector<2x32xf32>
    %319 = arith.divf %317, %318 : vector<2x32xf32>
    %320 = vector.extract_strided_slice %313 {offsets = [0, 32], sizes = [2, 32], strides = [1, 1]} : vector<2x128xf32> to vector<2x32xf32>
    %321 = arith.negf %320 : vector<2x32xf32>
    %322 = math.exp %321 : vector<2x32xf32>
    %cst_101 = arith.constant 1.000000e+00 : f32
    %323 = vector.broadcast %cst_101 : f32 to vector<2x32xf32>
    %324 = arith.addf %323, %322 : vector<2x32xf32>
    %325 = arith.divf %323, %324 : vector<2x32xf32>
    %326 = vector.extract_strided_slice %313 {offsets = [0, 64], sizes = [2, 32], strides = [1, 1]} : vector<2x128xf32> to vector<2x32xf32>
    %327 = math.tanh %326 : vector<2x32xf32>
    %328 = vector.extract_strided_slice %313 {offsets = [0, 96], sizes = [2, 32], strides = [1, 1]} : vector<2x128xf32> to vector<2x32xf32>
    %329 = arith.negf %328 : vector<2x32xf32>
    %330 = math.exp %329 : vector<2x32xf32>
    %cst_102 = arith.constant 1.000000e+00 : f32
    %331 = vector.broadcast %cst_102 : f32 to vector<2x32xf32>
    %332 = arith.addf %331, %330 : vector<2x32xf32>
    %333 = arith.divf %331, %332 : vector<2x32xf32>
    %334 = arith.mulf %325, %301 : vector<2x32xf32>
    %335 = arith.mulf %319, %327 : vector<2x32xf32>
    %336 = arith.addf %334, %335 : vector<2x32xf32>
    %337 = math.tanh %336 : vector<2x32xf32>
    %338 = arith.mulf %333, %337 : vector<2x32xf32>
    %cst_103 = arith.constant dense<0.000000e+00> : vector<2x128xf32>
    %339 = tpu.matmul %338, %305, %cst_103 {dimension_numbers = #tpu.dot_dimension_numbers<[1], [0], [0], [1], [0, 0, 1, 1], [], []>} : vector<2x32xf32>, vector<32x128xf32>, vector<2x128xf32> -> vector<2x128xf32>
    %340 = vector.broadcast %306 : vector<1x128xf32> to vector<2x128xf32>
    %341 = arith.addf %339, %340 : vector<2x128xf32>
    %cst_104 = arith.constant dense<0xFF800000> : vector<2xf32>
    %342 = vector.multi_reduction <maximumf>, %341, %cst_104 [1] : vector<2x128xf32> to vector<2xf32>
    %343 = vector.shape_cast %342 : vector<2xf32> to vector<2x1xf32>
    %344 = vector.broadcast %343 : vector<2x1xf32> to vector<2x128xf32>
    %345 = arith.subf %341, %344 : vector<2x128xf32>
    %346 = math.exp %345 : vector<2x128xf32>
    %cst_105 = arith.constant dense<0.000000e+00> : vector<2xf32>
    %347 = vector.multi_reduction <add>, %346, %cst_105 [1] : vector<2x128xf32> to vector<2xf32>
    %348 = vector.shape_cast %347 : vector<2xf32> to vector<2x1xf32>
    %349 = math.log %348 : vector<2x1xf32>
    %350 = arith.addf %349, %343 : vector<2x1xf32>
    %351 = vector.broadcast %350 : vector<2x1xf32> to vector<2x128xf32>
    %352 = arith.subf %341, %351 : vector<2x128xf32>
    %c0_106 = arith.constant 0 : index
    %c0_107 = arith.constant 0 : index
    %c0_108 = arith.constant 0 : index
    %353 = vector.load %arg18[%c0_106, %c0_107, %c0_108] : memref<8x2x128xf32, #tpu.memory_space<vmem>>, vector<1x2x128xf32>
    %354 = vector.shape_cast %353 : vector<1x2x128xf32> to vector<2x128xf32>
    %355 = vector.shape_cast %352 : vector<2x128xf32> to vector<1x2x128xf32>
    tpu.vector_store %arg18[%c0_106, %c0_107, %c0_108], %355 {strides = array<i32>} : memref<8x2x128xf32, #tpu.memory_space<vmem>>, vector<1x2x128xf32>,
    %356 = tpu.iota {dimensions = array<i32: 1>} : vector<2x128xi32>
    %357 = vector.broadcast %343 : vector<2x1xf32> to vector<2x128xf32>
    %358 = arith.cmpf oeq, %341, %357 : vector<2x128xf32>
    %c128_i32 = arith.constant 128 : i32
    %359 = vector.broadcast %c128_i32 : i32 to vector<2x128xi32>
    %360 = arith.select %358, %356, %359 : vector<2x128xi1>, vector<2x128xi32>
    %cst_109 = arith.constant dense<2147483647> : vector<2xi32>
    %361 = vector.multi_reduction <minsi>, %360, %cst_109 [1] : vector<2x128xi32> to vector<2xi32>
    %362 = vector.shape_cast %361 : vector<2xi32> to vector<2x1xi32>
    %c1_110 = arith.constant 1 : index
    %c0_111 = arith.constant 0 : index
    %c0_112 = arith.constant 0 : index
    %363 = vector.load %arg1[%c1_110, %c0_111, %c0_112] : memref<8x2x32xf32, #tpu.memory_space<vmem>>, vector<1x2x32xf32>
    %364 = vector.shape_cast %363 : vector<1x2x32xf32> to vector<2x32xf32>
    %cst_113 = arith.constant dense<0.000000e+00> : vector<2x128xf32>
    %365 = tpu.matmul %364, %302, %cst_113 {dimension_numbers = #tpu.dot_dimension_numbers<[1], [0], [0], [1], [0, 0, 1, 1], [], []>} : vector<2x32xf32>, vector<32x128xf32>, vector<2x128xf32> -> vector<2x128xf32>
    %cst_114 = arith.constant dense<0.000000e+00> : vector<2x128xf32>
    %366 = tpu.matmul %338, %303, %cst_114 {dimension_numbers = #tpu.dot_dimension_numbers<[1], [0], [0], [1], [0, 0, 1, 1], [], []>} : vector<2x32xf32>, vector<32x128xf32>, vector<2x128xf32> -> vector<2x128xf32>
    %367 = arith.addf %365, %366 : vector<2x128xf32>
    %368 = vector.broadcast %304 : vector<1x128xf32> to vector<2x128xf32>
    %369 = arith.addf %367, %368 : vector<2x128xf32>
    %370 = vector.extract_strided_slice %369 {offsets = [0, 0], sizes = [2, 32], strides = [1, 1]} : vector<2x128xf32> to vector<2x32xf32>
    %371 = arith.negf %370 : vector<2x32xf32>
    %372 = math.exp %371 : vector<2x32xf32>
    %cst_115 = arith.constant 1.000000e+00 : f32
    %373 = vector.broadcast %cst_115 : f32 to vector<2x32xf32>
    %374 = arith.addf %373, %372 : vector<2x32xf32>
    %375 = arith.divf %373, %374 : vector<2x32xf32>
    %376 = vector.extract_strided_slice %369 {offsets = [0, 32], sizes = [2, 32], strides = [1, 1]} : vector<2x128xf32> to vector<2x32xf32>
    %377 = arith.negf %376 : vector<2x32xf32>
    %378 = math.exp %377 : vector<2x32xf32>
    %cst_116 = arith.constant 1.000000e+00 : f32
    %379 = vector.broadcast %cst_116 : f32 to vector<2x32xf32>
    %380 = arith.addf %379, %378 : vector<2x32xf32>
    %381 = arith.divf %379, %380 : vector<2x32xf32>
    %382 = vector.extract_strided_slice %369 {offsets = [0, 64], sizes = [2, 32], strides = [1, 1]} : vector<2x128xf32> to vector<2x32xf32>
    %383 = math.tanh %382 : vector<2x32xf32>
    %384 = vector.extract_strided_slice %369 {offsets = [0, 96], sizes = [2, 32], strides = [1, 1]} : vector<2x128xf32> to vector<2x32xf32>
    %385 = arith.negf %384 : vector<2x32xf32>
    %386 = math.exp %385 : vector<2x32xf32>
    %cst_117 = arith.constant 1.000000e+00 : f32
    %387 = vector.broadcast %cst_117 : f32 to vector<2x32xf32>
    %388 = arith.addf %387, %386 : vector<2x32xf32>
    %389 = arith.divf %387, %388 : vector<2x32xf32>
    %390 = arith.mulf %381, %336 : vector<2x32xf32>
    %391 = arith.mulf %375, %383 : vector<2x32xf32>
    %392 = arith.addf %390, %391 : vector<2x32xf32>
    %393 = math.tanh %392 : vector<2x32xf32>
    %394 = arith.mulf %389, %393 : vector<2x32xf32>
    %cst_118 = arith.constant dense<0.000000e+00> : vector<2x128xf32>
    %395 = tpu.matmul %394, %305, %cst_118 {dimension_numbers = #tpu.dot_dimension_numbers<[1], [0], [0], [1], [0, 0, 1, 1], [], []>} : vector<2x32xf32>, vector<32x128xf32>, vector<2x128xf32> -> vector<2x128xf32>
    %396 = vector.broadcast %306 : vector<1x128xf32> to vector<2x128xf32>
    %397 = arith.addf %395, %396 : vector<2x128xf32>
    %cst_119 = arith.constant dense<0xFF800000> : vector<2xf32>
    %398 = vector.multi_reduction <maximumf>, %397, %cst_119 [1] : vector<2x128xf32> to vector<2xf32>
    %399 = vector.shape_cast %398 : vector<2xf32> to vector<2x1xf32>
    %400 = vector.broadcast %399 : vector<2x1xf32> to vector<2x128xf32>
    %401 = arith.subf %397, %400 : vector<2x128xf32>
    %402 = math.exp %401 : vector<2x128xf32>
    %cst_120 = arith.constant dense<0.000000e+00> : vector<2xf32>
    %403 = vector.multi_reduction <add>, %402, %cst_120 [1] : vector<2x128xf32> to vector<2xf32>
    %404 = vector.shape_cast %403 : vector<2xf32> to vector<2x1xf32>
    %405 = math.log %404 : vector<2x1xf32>
    %406 = arith.addf %405, %399 : vector<2x1xf32>
    %407 = vector.broadcast %406 : vector<2x1xf32> to vector<2x128xf32>
    %408 = arith.subf %397, %407 : vector<2x128xf32>
    %c1_121 = arith.constant 1 : index
    %c0_122 = arith.constant 0 : index
    %c0_123 = arith.constant 0 : index
    %409 = vector.load %arg18[%c1_121, %c0_122, %c0_123] : memref<8x2x128xf32, #tpu.memory_space<vmem>>, vector<1x2x128xf32>
    %410 = vector.shape_cast %409 : vector<1x2x128xf32> to vector<2x128xf32>
    %411 = vector.shape_cast %408 : vector<2x128xf32> to vector<1x2x128xf32>
    tpu.vector_store %arg18[%c1_121, %c0_122, %c0_123], %411 {strides = array<i32>} : memref<8x2x128xf32, #tpu.memory_space<vmem>>, vector<1x2x128xf32>,
    %412 = tpu.iota {dimensions = array<i32: 1>} : vector<2x128xi32>
    %413 = vector.broadcast %399 : vector<2x1xf32> to vector<2x128xf32>
    %414 = arith.cmpf oeq, %397, %413 : vector<2x128xf32>
    %c128_i32_124 = arith.constant 128 : i32
    %415 = vector.broadcast %c128_i32_124 : i32 to vector<2x128xi32>
    %416 = arith.select %414, %412, %415 : vector<2x128xi1>, vector<2x128xi32>
    %cst_125 = arith.constant dense<2147483647> : vector<2xi32>
    %417 = vector.multi_reduction <minsi>, %416, %cst_125 [1] : vector<2x128xi32> to vector<2xi32>
    %418 = vector.shape_cast %417 : vector<2xi32> to vector<2x1xi32>
    %c2_126 = arith.constant 2 : index
    %c0_127 = arith.constant 0 : index
    %c0_128 = arith.constant 0 : index
    %419 = vector.load %arg1[%c2_126, %c0_127, %c0_128] : memref<8x2x32xf32, #tpu.memory_space<vmem>>, vector<1x2x32xf32>
    %420 = vector.shape_cast %419 : vector<1x2x32xf32> to vector<2x32xf32>
    %cst_129 = arith.constant dense<0.000000e+00> : vector<2x128xf32>
    %421 = tpu.matmul %420, %302, %cst_129 {dimension_numbers = #tpu.dot_dimension_numbers<[1], [0], [0], [1], [0, 0, 1, 1], [], []>} : vector<2x32xf32>, vector<32x128xf32>, vector<2x128xf32> -> vector<2x128xf32>
    %cst_130 = arith.constant dense<0.000000e+00> : vector<2x128xf32>
    %422 = tpu.matmul %394, %303, %cst_130 {dimension_numbers = #tpu.dot_dimension_numbers<[1], [0], [0], [1], [0, 0, 1, 1], [], []>} : vector<2x32xf32>, vector<32x128xf32>, vector<2x128xf32> -> vector<2x128xf32>
    %423 = arith.addf %421, %422 : vector<2x128xf32>
    %424 = vector.broadcast %304 : vector<1x128xf32> to vector<2x128xf32>
    %425 = arith.addf %423, %424 : vector<2x128xf32>
    %426 = vector.extract_strided_slice %425 {offsets = [0, 0], sizes = [2, 32], strides = [1, 1]} : vector<2x128xf32> to vector<2x32xf32>
    %427 = arith.negf %426 : vector<2x32xf32>
    %428 = math.exp %427 : vector<2x32xf32>
    %cst_131 = arith.constant 1.000000e+00 : f32
    %429 = vector.broadcast %cst_131 : f32 to vector<2x32xf32>
    %430 = arith.addf %429, %428 : vector<2x32xf32>
    %431 = arith.divf %429, %430 : vector<2x32xf32>
    %432 = vector.extract_strided_slice %425 {offsets = [0, 32], sizes = [2, 32], strides = [1, 1]} : vector<2x128xf32> to vector<2x32xf32>
    %433 = arith.negf %432 : vector<2x32xf32>
    %434 = math.exp %433 : vector<2x32xf32>
    %cst_132 = arith.constant 1.000000e+00 : f32
    %435 = vector.broadcast %cst_132 : f32 to vector<2x32xf32>
    %436 = arith.addf %435, %434 : vector<2x32xf32>
    %437 = arith.divf %435, %436 : vector<2x32xf32>
    %438 = vector.extract_strided_slice %425 {offsets = [0, 64], sizes = [2, 32], strides = [1, 1]} : vector<2x128xf32> to vector<2x32xf32>
    %439 = math.tanh %438 : vector<2x32xf32>
    %440 = vector.extract_strided_slice %425 {offsets = [0, 96], sizes = [2, 32], strides = [1, 1]} : vector<2x128xf32> to vector<2x32xf32>
    %441 = arith.negf %440 : vector<2x32xf32>
    %442 = math.exp %441 : vector<2x32xf32>
    %cst_133 = arith.constant 1.000000e+00 : f32
    %443 = vector.broadcast %cst_133 : f32 to vector<2x32xf32>
    %444 = arith.addf %443, %442 : vector<2x32xf32>
    %445 = arith.divf %443, %444 : vector<2x32xf32>
    %446 = arith.mulf %437, %392 : vector<2x32xf32>
    %447 = arith.mulf %431, %439 : vector<2x32xf32>
    %448 = arith.addf %446, %447 : vector<2x32xf32>
    %449 = math.tanh %448 : vector<2x32xf32>
    %450 = arith.mulf %445, %449 : vector<2x32xf32>
    %cst_134 = arith.constant dense<0.000000e+00> : vector<2x128xf32>
    %451 = tpu.matmul %450, %305, %cst_134 {dimension_numbers = #tpu.dot_dimension_numbers<[1], [0], [0], [1], [0, 0, 1, 1], [], []>} : vector<2x32xf32>, vector<32x128xf32>, vector<2x128xf32> -> vector<2x128xf32>
    %452 = vector.broadcast %306 : vector<1x128xf32> to vector<2x128xf32>
    %453 = arith.addf %451, %452 : vector<2x128xf32>
    %cst_135 = arith.constant dense<0xFF800000> : vector<2xf32>
    %454 = vector.multi_reduction <maximumf>, %453, %cst_135 [1] : vector<2x128xf32> to vector<2xf32>
    %455 = vector.shape_cast %454 : vector<2xf32> to vector<2x1xf32>
    %456 = vector.broadcast %455 : vector<2x1xf32> to vector<2x128xf32>
    %457 = arith.subf %453, %456 : vector<2x128xf32>
    %458 = math.exp %457 : vector<2x128xf32>
    %cst_136 = arith.constant dense<0.000000e+00> : vector<2xf32>
    %459 = vector.multi_reduction <add>, %458, %cst_136 [1] : vector<2x128xf32> to vector<2xf32>
    %460 = vector.shape_cast %459 : vector<2xf32> to vector<2x1xf32>
    %461 = math.log %460 : vector<2x1xf32>
    %462 = arith.addf %461, %455 : vector<2x1xf32>
    %463 = vector.broadcast %462 : vector<2x1xf32> to vector<2x128xf32>
    %464 = arith.subf %453, %463 : vector<2x128xf32>
    %c2_137 = arith.constant 2 : index
    %c0_138 = arith.constant 0 : index
    %c0_139 = arith.constant 0 : index
    %465 = vector.load %arg18[%c2_137, %c0_138, %c0_139] : memref<8x2x128xf32, #tpu.memory_space<vmem>>, vector<1x2x128xf32>
    %466 = vector.shape_cast %465 : vector<1x2x128xf32> to vector<2x128xf32>
    %467 = vector.shape_cast %464 : vector<2x128xf32> to vector<1x2x128xf32>
    tpu.vector_store %arg18[%c2_137, %c0_138, %c0_139], %467 {strides = array<i32>} : memref<8x2x128xf32, #tpu.memory_space<vmem>>, vector<1x2x128xf32>,
    %468 = tpu.iota {dimensions = array<i32: 1>} : vector<2x128xi32>
    %469 = vector.broadcast %455 : vector<2x1xf32> to vector<2x128xf32>
    %470 = arith.cmpf oeq, %453, %469 : vector<2x128xf32>
    %c128_i32_140 = arith.constant 128 : i32
    %471 = vector.broadcast %c128_i32_140 : i32 to vector<2x128xi32>
    %472 = arith.select %470, %468, %471 : vector<2x128xi1>, vector<2x128xi32>
    %cst_141 = arith.constant dense<2147483647> : vector<2xi32>
    %473 = vector.multi_reduction <minsi>, %472, %cst_141 [1] : vector<2x128xi32> to vector<2xi32>
    %474 = vector.shape_cast %473 : vector<2xi32> to vector<2x1xi32>
    %c3_142 = arith.constant 3 : index
    %c0_143 = arith.constant 0 : index
    %c0_144 = arith.constant 0 : index
    %475 = vector.load %arg1[%c3_142, %c0_143, %c0_144] : memref<8x2x32xf32, #tpu.memory_space<vmem>>, vector<1x2x32xf32>
    %476 = vector.shape_cast %475 : vector<1x2x32xf32> to vector<2x32xf32>
    %cst_145 = arith.constant dense<0.000000e+00> : vector<2x128xf32>
    %477 = tpu.matmul %476, %302, %cst_145 {dimension_numbers = #tpu.dot_dimension_numbers<[1], [0], [0], [1], [0, 0, 1, 1], [], []>} : vector<2x32xf32>, vector<32x128xf32>, vector<2x128xf32> -> vector<2x128xf32>
    %cst_146 = arith.constant dense<0.000000e+00> : vector<2x128xf32>
    %478 = tpu.matmul %450, %303, %cst_146 {dimension_numbers = #tpu.dot_dimension_numbers<[1], [0], [0], [1], [0, 0, 1, 1], [], []>} : vector<2x32xf32>, vector<32x128xf32>, vector<2x128xf32> -> vector<2x128xf32>
    %479 = arith.addf %477, %478 : vector<2x128xf32>
    %480 = vector.broadcast %304 : vector<1x128xf32> to vector<2x128xf32>
    %481 = arith.addf %479, %480 : vector<2x128xf32>
    %482 = vector.extract_strided_slice %481 {offsets = [0, 0], sizes = [2, 32], strides = [1, 1]} : vector<2x128xf32> to vector<2x32xf32>
    %483 = arith.negf %482 : vector<2x32xf32>
    %484 = math.exp %483 : vector<2x32xf32>
    %cst_147 = arith.constant 1.000000e+00 : f32
    %485 = vector.broadcast %cst_147 : f32 to vector<2x32xf32>
    %486 = arith.addf %485, %484 : vector<2x32xf32>
    %487 = arith.divf %485, %486 : vector<2x32xf32>
    %488 = vector.extract_strided_slice %481 {offsets = [0, 32], sizes = [2, 32], strides = [1, 1]} : vector<2x128xf32> to vector<2x32xf32>
    %489 = arith.negf %488 : vector<2x32xf32>
    %490 = math.exp %489 : vector<2x32xf32>
    %cst_148 = arith.constant 1.000000e+00 : f32
    %491 = vector.broadcast %cst_148 : f32 to vector<2x32xf32>
    %492 = arith.addf %491, %490 : vector<2x32xf32>
    %493 = arith.divf %491, %492 : vector<2x32xf32>
    %494 = vector.extract_strided_slice %481 {offsets = [0, 64], sizes = [2, 32], strides = [1, 1]} : vector<2x128xf32> to vector<2x32xf32>
    %495 = math.tanh %494 : vector<2x32xf32>
    %496 = vector.extract_strided_slice %481 {offsets = [0, 96], sizes = [2, 32], strides = [1, 1]} : vector<2x128xf32> to vector<2x32xf32>
    %497 = arith.negf %496 : vector<2x32xf32>
    %498 = math.exp %497 : vector<2x32xf32>
    %cst_149 = arith.constant 1.000000e+00 : f32
    %499 = vector.broadcast %cst_149 : f32 to vector<2x32xf32>
    %500 = arith.addf %499, %498 : vector<2x32xf32>
    %501 = arith.divf %499, %500 : vector<2x32xf32>
    %502 = arith.mulf %493, %448 : vector<2x32xf32>
    %503 = arith.mulf %487, %495 : vector<2x32xf32>
    %504 = arith.addf %502, %503 : vector<2x32xf32>
    %505 = math.tanh %504 : vector<2x32xf32>
    %506 = arith.mulf %501, %505 : vector<2x32xf32>
    %cst_150 = arith.constant dense<0.000000e+00> : vector<2x128xf32>
    %507 = tpu.matmul %506, %305, %cst_150 {dimension_numbers = #tpu.dot_dimension_numbers<[1], [0], [0], [1], [0, 0, 1, 1], [], []>} : vector<2x32xf32>, vector<32x128xf32>, vector<2x128xf32> -> vector<2x128xf32>
    %508 = vector.broadcast %306 : vector<1x128xf32> to vector<2x128xf32>
    %509 = arith.addf %507, %508 : vector<2x128xf32>
    %cst_151 = arith.constant dense<0xFF800000> : vector<2xf32>
    %510 = vector.multi_reduction <maximumf>, %509, %cst_151 [1] : vector<2x128xf32> to vector<2xf32>
    %511 = vector.shape_cast %510 : vector<2xf32> to vector<2x1xf32>
    %512 = vector.broadcast %511 : vector<2x1xf32> to vector<2x128xf32>
    %513 = arith.subf %509, %512 : vector<2x128xf32>
    %514 = math.exp %513 : vector<2x128xf32>
    %cst_152 = arith.constant dense<0.000000e+00> : vector<2xf32>
    %515 = vector.multi_reduction <add>, %514, %cst_152 [1] : vector<2x128xf32> to vector<2xf32>
    %516 = vector.shape_cast %515 : vector<2xf32> to vector<2x1xf32>
    %517 = math.log %516 : vector<2x1xf32>
    %518 = arith.addf %517, %511 : vector<2x1xf32>
    %519 = vector.broadcast %518 : vector<2x1xf32> to vector<2x128xf32>
    %520 = arith.subf %509, %519 : vector<2x128xf32>
    %c3_153 = arith.constant 3 : index
    %c0_154 = arith.constant 0 : index
    %c0_155 = arith.constant 0 : index
    %521 = vector.load %arg18[%c3_153, %c0_154, %c0_155] : memref<8x2x128xf32, #tpu.memory_space<vmem>>, vector<1x2x128xf32>
    %522 = vector.shape_cast %521 : vector<1x2x128xf32> to vector<2x128xf32>
    %523 = vector.shape_cast %520 : vector<2x128xf32> to vector<1x2x128xf32>
    tpu.vector_store %arg18[%c3_153, %c0_154, %c0_155], %523 {strides = array<i32>} : memref<8x2x128xf32, #tpu.memory_space<vmem>>, vector<1x2x128xf32>,
    %524 = tpu.iota {dimensions = array<i32: 1>} : vector<2x128xi32>
    %525 = vector.broadcast %511 : vector<2x1xf32> to vector<2x128xf32>
    %526 = arith.cmpf oeq, %509, %525 : vector<2x128xf32>
    %c128_i32_156 = arith.constant 128 : i32
    %527 = vector.broadcast %c128_i32_156 : i32 to vector<2x128xi32>
    %528 = arith.select %526, %524, %527 : vector<2x128xi1>, vector<2x128xi32>
    %cst_157 = arith.constant dense<2147483647> : vector<2xi32>
    %529 = vector.multi_reduction <minsi>, %528, %cst_157 [1] : vector<2x128xi32> to vector<2xi32>
    %530 = vector.shape_cast %529 : vector<2xi32> to vector<2x1xi32>
    %c4_158 = arith.constant 4 : index
    %c0_159 = arith.constant 0 : index
    %c0_160 = arith.constant 0 : index
    %531 = vector.load %arg1[%c4_158, %c0_159, %c0_160] : memref<8x2x32xf32, #tpu.memory_space<vmem>>, vector<1x2x32xf32>
    %532 = vector.shape_cast %531 : vector<1x2x32xf32> to vector<2x32xf32>
    %cst_161 = arith.constant dense<0.000000e+00> : vector<2x128xf32>
    %533 = tpu.matmul %532, %302, %cst_161 {dimension_numbers = #tpu.dot_dimension_numbers<[1], [0], [0], [1], [0, 0, 1, 1], [], []>} : vector<2x32xf32>, vector<32x128xf32>, vector<2x128xf32> -> vector<2x128xf32>
    %cst_162 = arith.constant dense<0.000000e+00> : vector<2x128xf32>
    %534 = tpu.matmul %506, %303, %cst_162 {dimension_numbers = #tpu.dot_dimension_numbers<[1], [0], [0], [1], [0, 0, 1, 1], [], []>} : vector<2x32xf32>, vector<32x128xf32>, vector<2x128xf32> -> vector<2x128xf32>
    %535 = arith.addf %533, %534 : vector<2x128xf32>
    %536 = vector.broadcast %304 : vector<1x128xf32> to vector<2x128xf32>
    %537 = arith.addf %535, %536 : vector<2x128xf32>
    %538 = vector.extract_strided_slice %537 {offsets = [0, 0], sizes = [2, 32], strides = [1, 1]} : vector<2x128xf32> to vector<2x32xf32>
    %539 = arith.negf %538 : vector<2x32xf32>
    %540 = math.exp %539 : vector<2x32xf32>
    %cst_163 = arith.constant 1.000000e+00 : f32
    %541 = vector.broadcast %cst_163 : f32 to vector<2x32xf32>
    %542 = arith.addf %541, %540 : vector<2x32xf32>
    %543 = arith.divf %541, %542 : vector<2x32xf32>
    %544 = vector.extract_strided_slice %537 {offsets = [0, 32], sizes = [2, 32], strides = [1, 1]} : vector<2x128xf32> to vector<2x32xf32>
    %545 = arith.negf %544 : vector<2x32xf32>
    %546 = math.exp %545 : vector<2x32xf32>
    %cst_164 = arith.constant 1.000000e+00 : f32
    %547 = vector.broadcast %cst_164 : f32 to vector<2x32xf32>
    %548 = arith.addf %547, %546 : vector<2x32xf32>
    %549 = arith.divf %547, %548 : vector<2x32xf32>
    %550 = vector.extract_strided_slice %537 {offsets = [0, 64], sizes = [2, 32], strides = [1, 1]} : vector<2x128xf32> to vector<2x32xf32>
    %551 = math.tanh %550 : vector<2x32xf32>
    %552 = vector.extract_strided_slice %537 {offsets = [0, 96], sizes = [2, 32], strides = [1, 1]} : vector<2x128xf32> to vector<2x32xf32>
    %553 = arith.negf %552 : vector<2x32xf32>
    %554 = math.exp %553 : vector<2x32xf32>
    %cst_165 = arith.constant 1.000000e+00 : f32
    %555 = vector.broadcast %cst_165 : f32 to vector<2x32xf32>
    %556 = arith.addf %555, %554 : vector<2x32xf32>
    %557 = arith.divf %555, %556 : vector<2x32xf32>
    %558 = arith.mulf %549, %504 : vector<2x32xf32>
    %559 = arith.mulf %543, %551 : vector<2x32xf32>
    %560 = arith.addf %558, %559 : vector<2x32xf32>
    %561 = math.tanh %560 : vector<2x32xf32>
    %562 = arith.mulf %557, %561 : vector<2x32xf32>
    %cst_166 = arith.constant dense<0.000000e+00> : vector<2x128xf32>
    %563 = tpu.matmul %562, %305, %cst_166 {dimension_numbers = #tpu.dot_dimension_numbers<[1], [0], [0], [1], [0, 0, 1, 1], [], []>} : vector<2x32xf32>, vector<32x128xf32>, vector<2x128xf32> -> vector<2x128xf32>
    %564 = vector.broadcast %306 : vector<1x128xf32> to vector<2x128xf32>
    %565 = arith.addf %563, %564 : vector<2x128xf32>
    %cst_167 = arith.constant dense<0xFF800000> : vector<2xf32>
    %566 = vector.multi_reduction <maximumf>, %565, %cst_167 [1] : vector<2x128xf32> to vector<2xf32>
    %567 = vector.shape_cast %566 : vector<2xf32> to vector<2x1xf32>
    %568 = vector.broadcast %567 : vector<2x1xf32> to vector<2x128xf32>
    %569 = arith.subf %565, %568 : vector<2x128xf32>
    %570 = math.exp %569 : vector<2x128xf32>
    %cst_168 = arith.constant dense<0.000000e+00> : vector<2xf32>
    %571 = vector.multi_reduction <add>, %570, %cst_168 [1] : vector<2x128xf32> to vector<2xf32>
    %572 = vector.shape_cast %571 : vector<2xf32> to vector<2x1xf32>
    %573 = math.log %572 : vector<2x1xf32>
    %574 = arith.addf %573, %567 : vector<2x1xf32>
    %575 = vector.broadcast %574 : vector<2x1xf32> to vector<2x128xf32>
    %576 = arith.subf %565, %575 : vector<2x128xf32>
    %c4_169 = arith.constant 4 : index
    %c0_170 = arith.constant 0 : index
    %c0_171 = arith.constant 0 : index
    %577 = vector.load %arg18[%c4_169, %c0_170, %c0_171] : memref<8x2x128xf32, #tpu.memory_space<vmem>>, vector<1x2x128xf32>
    %578 = vector.shape_cast %577 : vector<1x2x128xf32> to vector<2x128xf32>
    %579 = vector.shape_cast %576 : vector<2x128xf32> to vector<1x2x128xf32>
    tpu.vector_store %arg18[%c4_169, %c0_170, %c0_171], %579 {strides = array<i32>} : memref<8x2x128xf32, #tpu.memory_space<vmem>>, vector<1x2x128xf32>,
    %580 = tpu.iota {dimensions = array<i32: 1>} : vector<2x128xi32>
    %581 = vector.broadcast %567 : vector<2x1xf32> to vector<2x128xf32>
    %582 = arith.cmpf oeq, %565, %581 : vector<2x128xf32>
    %c128_i32_172 = arith.constant 128 : i32
    %583 = vector.broadcast %c128_i32_172 : i32 to vector<2x128xi32>
    %584 = arith.select %582, %580, %583 : vector<2x128xi1>, vector<2x128xi32>
    %cst_173 = arith.constant dense<2147483647> : vector<2xi32>
    %585 = vector.multi_reduction <minsi>, %584, %cst_173 [1] : vector<2x128xi32> to vector<2xi32>
    %586 = vector.shape_cast %585 : vector<2xi32> to vector<2x1xi32>
    %c5_174 = arith.constant 5 : index
    %c0_175 = arith.constant 0 : index
    %c0_176 = arith.constant 0 : index
    %587 = vector.load %arg1[%c5_174, %c0_175, %c0_176] : memref<8x2x32xf32, #tpu.memory_space<vmem>>, vector<1x2x32xf32>
    %588 = vector.shape_cast %587 : vector<1x2x32xf32> to vector<2x32xf32>
    %cst_177 = arith.constant dense<0.000000e+00> : vector<2x128xf32>
    %589 = tpu.matmul %588, %302, %cst_177 {dimension_numbers = #tpu.dot_dimension_numbers<[1], [0], [0], [1], [0, 0, 1, 1], [], []>} : vector<2x32xf32>, vector<32x128xf32>, vector<2x128xf32> -> vector<2x128xf32>
    %cst_178 = arith.constant dense<0.000000e+00> : vector<2x128xf32>
    %590 = tpu.matmul %562, %303, %cst_178 {dimension_numbers = #tpu.dot_dimension_numbers<[1], [0], [0], [1], [0, 0, 1, 1], [], []>} : vector<2x32xf32>, vector<32x128xf32>, vector<2x128xf32> -> vector<2x128xf32>
    %591 = arith.addf %589, %590 : vector<2x128xf32>
    %592 = vector.broadcast %304 : vector<1x128xf32> to vector<2x128xf32>
    %593 = arith.addf %591, %592 : vector<2x128xf32>
    %594 = vector.extract_strided_slice %593 {offsets = [0, 0], sizes = [2, 32], strides = [1, 1]} : vector<2x128xf32> to vector<2x32xf32>
    %595 = arith.negf %594 : vector<2x32xf32>
    %596 = math.exp %595 : vector<2x32xf32>
    %cst_179 = arith.constant 1.000000e+00 : f32
    %597 = vector.broadcast %cst_179 : f32 to vector<2x32xf32>
    %598 = arith.addf %597, %596 : vector<2x32xf32>
    %599 = arith.divf %597, %598 : vector<2x32xf32>
    %600 = vector.extract_strided_slice %593 {offsets = [0, 32], sizes = [2, 32], strides = [1, 1]} : vector<2x128xf32> to vector<2x32xf32>
    %601 = arith.negf %600 : vector<2x32xf32>
    %602 = math.exp %601 : vector<2x32xf32>
    %cst_180 = arith.constant 1.000000e+00 : f32
    %603 = vector.broadcast %cst_180 : f32 to vector<2x32xf32>
    %604 = arith.addf %603, %602 : vector<2x32xf32>
    %605 = arith.divf %603, %604 : vector<2x32xf32>
    %606 = vector.extract_strided_slice %593 {offsets = [0, 64], sizes = [2, 32], strides = [1, 1]} : vector<2x128xf32> to vector<2x32xf32>
    %607 = math.tanh %606 : vector<2x32xf32>
    %608 = vector.extract_strided_slice %593 {offsets = [0, 96], sizes = [2, 32], strides = [1, 1]} : vector<2x128xf32> to vector<2x32xf32>
    %609 = arith.negf %608 : vector<2x32xf32>
    %610 = math.exp %609 : vector<2x32xf32>
    %cst_181 = arith.constant 1.000000e+00 : f32
    %611 = vector.broadcast %cst_181 : f32 to vector<2x32xf32>
    %612 = arith.addf %611, %610 : vector<2x32xf32>
    %613 = arith.divf %611, %612 : vector<2x32xf32>
    %614 = arith.mulf %605, %560 : vector<2x32xf32>
    %615 = arith.mulf %599, %607 : vector<2x32xf32>
    %616 = arith.addf %614, %615 : vector<2x32xf32>
    %617 = math.tanh %616 : vector<2x32xf32>
    %618 = arith.mulf %613, %617 : vector<2x32xf32>
    %cst_182 = arith.constant dense<0.000000e+00> : vector<2x128xf32>
    %619 = tpu.matmul %618, %305, %cst_182 {dimension_numbers = #tpu.dot_dimension_numbers<[1], [0], [0], [1], [0, 0, 1, 1], [], []>} : vector<2x32xf32>, vector<32x128xf32>, vector<2x128xf32> -> vector<2x128xf32>
    %620 = vector.broadcast %306 : vector<1x128xf32> to vector<2x128xf32>
    %621 = arith.addf %619, %620 : vector<2x128xf32>
    %cst_183 = arith.constant dense<0xFF800000> : vector<2xf32>
    %622 = vector.multi_reduction <maximumf>, %621, %cst_183 [1] : vector<2x128xf32> to vector<2xf32>
    %623 = vector.shape_cast %622 : vector<2xf32> to vector<2x1xf32>
    %624 = vector.broadcast %623 : vector<2x1xf32> to vector<2x128xf32>
    %625 = arith.subf %621, %624 : vector<2x128xf32>
    %626 = math.exp %625 : vector<2x128xf32>
    %cst_184 = arith.constant dense<0.000000e+00> : vector<2xf32>
    %627 = vector.multi_reduction <add>, %626, %cst_184 [1] : vector<2x128xf32> to vector<2xf32>
    %628 = vector.shape_cast %627 : vector<2xf32> to vector<2x1xf32>
    %629 = math.log %628 : vector<2x1xf32>
    %630 = arith.addf %629, %623 : vector<2x1xf32>
    %631 = vector.broadcast %630 : vector<2x1xf32> to vector<2x128xf32>
    %632 = arith.subf %621, %631 : vector<2x128xf32>
    %c5_185 = arith.constant 5 : index
    %c0_186 = arith.constant 0 : index
    %c0_187 = arith.constant 0 : index
    %633 = vector.load %arg18[%c5_185, %c0_186, %c0_187] : memref<8x2x128xf32, #tpu.memory_space<vmem>>, vector<1x2x128xf32>
    %634 = vector.shape_cast %633 : vector<1x2x128xf32> to vector<2x128xf32>
    %635 = vector.shape_cast %632 : vector<2x128xf32> to vector<1x2x128xf32>
    tpu.vector_store %arg18[%c5_185, %c0_186, %c0_187], %635 {strides = array<i32>} : memref<8x2x128xf32, #tpu.memory_space<vmem>>, vector<1x2x128xf32>,
    %636 = tpu.iota {dimensions = array<i32: 1>} : vector<2x128xi32>
    %637 = vector.broadcast %623 : vector<2x1xf32> to vector<2x128xf32>
    %638 = arith.cmpf oeq, %621, %637 : vector<2x128xf32>
    %c128_i32_188 = arith.constant 128 : i32
    %639 = vector.broadcast %c128_i32_188 : i32 to vector<2x128xi32>
    %640 = arith.select %638, %636, %639 : vector<2x128xi1>, vector<2x128xi32>
    %cst_189 = arith.constant dense<2147483647> : vector<2xi32>
    %641 = vector.multi_reduction <minsi>, %640, %cst_189 [1] : vector<2x128xi32> to vector<2xi32>
    %642 = vector.shape_cast %641 : vector<2xi32> to vector<2x1xi32>
    %c6_190 = arith.constant 6 : index
    %c0_191 = arith.constant 0 : index
    %c0_192 = arith.constant 0 : index
    %643 = vector.load %arg1[%c6_190, %c0_191, %c0_192] : memref<8x2x32xf32, #tpu.memory_space<vmem>>, vector<1x2x32xf32>
    %644 = vector.shape_cast %643 : vector<1x2x32xf32> to vector<2x32xf32>
    %cst_193 = arith.constant dense<0.000000e+00> : vector<2x128xf32>
    %645 = tpu.matmul %644, %302, %cst_193 {dimension_numbers = #tpu.dot_dimension_numbers<[1], [0], [0], [1], [0, 0, 1, 1], [], []>} : vector<2x32xf32>, vector<32x128xf32>, vector<2x128xf32> -> vector<2x128xf32>
    %cst_194 = arith.constant dense<0.000000e+00> : vector<2x128xf32>
    %646 = tpu.matmul %618, %303, %cst_194 {dimension_numbers = #tpu.dot_dimension_numbers<[1], [0], [0], [1], [0, 0, 1, 1], [], []>} : vector<2x32xf32>, vector<32x128xf32>, vector<2x128xf32> -> vector<2x128xf32>
    %647 = arith.addf %645, %646 : vector<2x128xf32>
    %648 = vector.broadcast %304 : vector<1x128xf32> to vector<2x128xf32>
    %649 = arith.addf %647, %648 : vector<2x128xf32>
    %650 = vector.extract_strided_slice %649 {offsets = [0, 0], sizes = [2, 32], strides = [1, 1]} : vector<2x128xf32> to vector<2x32xf32>
    %651 = arith.negf %650 : vector<2x32xf32>
    %652 = math.exp %651 : vector<2x32xf32>
    %cst_195 = arith.constant 1.000000e+00 : f32
    %653 = vector.broadcast %cst_195 : f32 to vector<2x32xf32>
    %654 = arith.addf %653, %652 : vector<2x32xf32>
    %655 = arith.divf %653, %654 : vector<2x32xf32>
    %656 = vector.extract_strided_slice %649 {offsets = [0, 32], sizes = [2, 32], strides = [1, 1]} : vector<2x128xf32> to vector<2x32xf32>
    %657 = arith.negf %656 : vector<2x32xf32>
    %658 = math.exp %657 : vector<2x32xf32>
    %cst_196 = arith.constant 1.000000e+00 : f32
    %659 = vector.broadcast %cst_196 : f32 to vector<2x32xf32>
    %660 = arith.addf %659, %658 : vector<2x32xf32>
    %661 = arith.divf %659, %660 : vector<2x32xf32>
    %662 = vector.extract_strided_slice %649 {offsets = [0, 64], sizes = [2, 32], strides = [1, 1]} : vector<2x128xf32> to vector<2x32xf32>
    %663 = math.tanh %662 : vector<2x32xf32>
    %664 = vector.extract_strided_slice %649 {offsets = [0, 96], sizes = [2, 32], strides = [1, 1]} : vector<2x128xf32> to vector<2x32xf32>
    %665 = arith.negf %664 : vector<2x32xf32>
    %666 = math.exp %665 : vector<2x32xf32>
    %cst_197 = arith.constant 1.000000e+00 : f32
    %667 = vector.broadcast %cst_197 : f32 to vector<2x32xf32>
    %668 = arith.addf %667, %666 : vector<2x32xf32>
    %669 = arith.divf %667, %668 : vector<2x32xf32>
    %670 = arith.mulf %661, %616 : vector<2x32xf32>
    %671 = arith.mulf %655, %663 : vector<2x32xf32>
    %672 = arith.addf %670, %671 : vector<2x32xf32>
    %673 = math.tanh %672 : vector<2x32xf32>
    %674 = arith.mulf %669, %673 : vector<2x32xf32>
    %cst_198 = arith.constant dense<0.000000e+00> : vector<2x128xf32>
    %675 = tpu.matmul %674, %305, %cst_198 {dimension_numbers = #tpu.dot_dimension_numbers<[1], [0], [0], [1], [0, 0, 1, 1], [], []>} : vector<2x32xf32>, vector<32x128xf32>, vector<2x128xf32> -> vector<2x128xf32>
    %676 = vector.broadcast %306 : vector<1x128xf32> to vector<2x128xf32>
    %677 = arith.addf %675, %676 : vector<2x128xf32>
    %cst_199 = arith.constant dense<0xFF800000> : vector<2xf32>
    %678 = vector.multi_reduction <maximumf>, %677, %cst_199 [1] : vector<2x128xf32> to vector<2xf32>
    %679 = vector.shape_cast %678 : vector<2xf32> to vector<2x1xf32>
    %680 = vector.broadcast %679 : vector<2x1xf32> to vector<2x128xf32>
    %681 = arith.subf %677, %680 : vector<2x128xf32>
    %682 = math.exp %681 : vector<2x128xf32>
    %cst_200 = arith.constant dense<0.000000e+00> : vector<2xf32>
    %683 = vector.multi_reduction <add>, %682, %cst_200 [1] : vector<2x128xf32> to vector<2xf32>
    %684 = vector.shape_cast %683 : vector<2xf32> to vector<2x1xf32>
    %685 = math.log %684 : vector<2x1xf32>
    %686 = arith.addf %685, %679 : vector<2x1xf32>
    %687 = vector.broadcast %686 : vector<2x1xf32> to vector<2x128xf32>
    %688 = arith.subf %677, %687 : vector<2x128xf32>
    %c6_201 = arith.constant 6 : index
    %c0_202 = arith.constant 0 : index
    %c0_203 = arith.constant 0 : index
    %689 = vector.load %arg18[%c6_201, %c0_202, %c0_203] : memref<8x2x128xf32, #tpu.memory_space<vmem>>, vector<1x2x128xf32>
    %690 = vector.shape_cast %689 : vector<1x2x128xf32> to vector<2x128xf32>
    %691 = vector.shape_cast %688 : vector<2x128xf32> to vector<1x2x128xf32>
    tpu.vector_store %arg18[%c6_201, %c0_202, %c0_203], %691 {strides = array<i32>} : memref<8x2x128xf32, #tpu.memory_space<vmem>>, vector<1x2x128xf32>,
    %692 = tpu.iota {dimensions = array<i32: 1>} : vector<2x128xi32>
    %693 = vector.broadcast %679 : vector<2x1xf32> to vector<2x128xf32>
    %694 = arith.cmpf oeq, %677, %693 : vector<2x128xf32>
    %c128_i32_204 = arith.constant 128 : i32
    %695 = vector.broadcast %c128_i32_204 : i32 to vector<2x128xi32>
    %696 = arith.select %694, %692, %695 : vector<2x128xi1>, vector<2x128xi32>
    %cst_205 = arith.constant dense<2147483647> : vector<2xi32>
    %697 = vector.multi_reduction <minsi>, %696, %cst_205 [1] : vector<2x128xi32> to vector<2xi32>
    %698 = vector.shape_cast %697 : vector<2xi32> to vector<2x1xi32>
    %c7_206 = arith.constant 7 : index
    %c0_207 = arith.constant 0 : index
    %c0_208 = arith.constant 0 : index
    %699 = vector.load %arg1[%c7_206, %c0_207, %c0_208] : memref<8x2x32xf32, #tpu.memory_space<vmem>>, vector<1x2x32xf32>
    %700 = vector.shape_cast %699 : vector<1x2x32xf32> to vector<2x32xf32>
    %cst_209 = arith.constant dense<0.000000e+00> : vector<2x128xf32>
    %701 = tpu.matmul %700, %302, %cst_209 {dimension_numbers = #tpu.dot_dimension_numbers<[1], [0], [0], [1], [0, 0, 1, 1], [], []>} : vector<2x32xf32>, vector<32x128xf32>, vector<2x128xf32> -> vector<2x128xf32>
    %cst_210 = arith.constant dense<0.000000e+00> : vector<2x128xf32>
    %702 = tpu.matmul %674, %303, %cst_210 {dimension_numbers = #tpu.dot_dimension_numbers<[1], [0], [0], [1], [0, 0, 1, 1], [], []>} : vector<2x32xf32>, vector<32x128xf32>, vector<2x128xf32> -> vector<2x128xf32>
    %703 = arith.addf %701, %702 : vector<2x128xf32>
    %704 = vector.broadcast %304 : vector<1x128xf32> to vector<2x128xf32>
    %705 = arith.addf %703, %704 : vector<2x128xf32>
    %706 = vector.extract_strided_slice %705 {offsets = [0, 0], sizes = [2, 32], strides = [1, 1]} : vector<2x128xf32> to vector<2x32xf32>
    %707 = arith.negf %706 : vector<2x32xf32>
    %708 = math.exp %707 : vector<2x32xf32>
    %cst_211 = arith.constant 1.000000e+00 : f32
    %709 = vector.broadcast %cst_211 : f32 to vector<2x32xf32>
    %710 = arith.addf %709, %708 : vector<2x32xf32>
    %711 = arith.divf %709, %710 : vector<2x32xf32>
    %712 = vector.extract_strided_slice %705 {offsets = [0, 32], sizes = [2, 32], strides = [1, 1]} : vector<2x128xf32> to vector<2x32xf32>
    %713 = arith.negf %712 : vector<2x32xf32>
    %714 = math.exp %713 : vector<2x32xf32>
    %cst_212 = arith.constant 1.000000e+00 : f32
    %715 = vector.broadcast %cst_212 : f32 to vector<2x32xf32>
    %716 = arith.addf %715, %714 : vector<2x32xf32>
    %717 = arith.divf %715, %716 : vector<2x32xf32>
    %718 = vector.extract_strided_slice %705 {offsets = [0, 64], sizes = [2, 32], strides = [1, 1]} : vector<2x128xf32> to vector<2x32xf32>
    %719 = math.tanh %718 : vector<2x32xf32>
    %720 = vector.extract_strided_slice %705 {offsets = [0, 96], sizes = [2, 32], strides = [1, 1]} : vector<2x128xf32> to vector<2x32xf32>
    %721 = arith.negf %720 : vector<2x32xf32>
    %722 = math.exp %721 : vector<2x32xf32>
    %cst_213 = arith.constant 1.000000e+00 : f32
    %723 = vector.broadcast %cst_213 : f32 to vector<2x32xf32>
    %724 = arith.addf %723, %722 : vector<2x32xf32>
    %725 = arith.divf %723, %724 : vector<2x32xf32>
    %726 = arith.mulf %717, %672 : vector<2x32xf32>
    %727 = arith.mulf %711, %719 : vector<2x32xf32>
    %728 = arith.addf %726, %727 : vector<2x32xf32>
    %729 = math.tanh %728 : vector<2x32xf32>
    %730 = arith.mulf %725, %729 : vector<2x32xf32>
    %cst_214 = arith.constant dense<0.000000e+00> : vector<2x128xf32>
    %731 = tpu.matmul %730, %305, %cst_214 {dimension_numbers = #tpu.dot_dimension_numbers<[1], [0], [0], [1], [0, 0, 1, 1], [], []>} : vector<2x32xf32>, vector<32x128xf32>, vector<2x128xf32> -> vector<2x128xf32>
    %732 = vector.broadcast %306 : vector<1x128xf32> to vector<2x128xf32>
    %733 = arith.addf %731, %732 : vector<2x128xf32>
    %cst_215 = arith.constant dense<0xFF800000> : vector<2xf32>
    %734 = vector.multi_reduction <maximumf>, %733, %cst_215 [1] : vector<2x128xf32> to vector<2xf32>
    %735 = vector.shape_cast %734 : vector<2xf32> to vector<2x1xf32>
    %736 = vector.broadcast %735 : vector<2x1xf32> to vector<2x128xf32>
    %737 = arith.subf %733, %736 : vector<2x128xf32>
    %738 = math.exp %737 : vector<2x128xf32>
    %cst_216 = arith.constant dense<0.000000e+00> : vector<2xf32>
    %739 = vector.multi_reduction <add>, %738, %cst_216 [1] : vector<2x128xf32> to vector<2xf32>
    %740 = vector.shape_cast %739 : vector<2xf32> to vector<2x1xf32>
    %741 = math.log %740 : vector<2x1xf32>
    %742 = arith.addf %741, %735 : vector<2x1xf32>
    %743 = vector.broadcast %742 : vector<2x1xf32> to vector<2x128xf32>
    %744 = arith.subf %733, %743 : vector<2x128xf32>
    %c7_217 = arith.constant 7 : index
    %c0_218 = arith.constant 0 : index
    %c0_219 = arith.constant 0 : index
    %745 = vector.load %arg18[%c7_217, %c0_218, %c0_219] : memref<8x2x128xf32, #tpu.memory_space<vmem>>, vector<1x2x128xf32>
    %746 = vector.shape_cast %745 : vector<1x2x128xf32> to vector<2x128xf32>
    %747 = vector.shape_cast %744 : vector<2x128xf32> to vector<1x2x128xf32>
    tpu.vector_store %arg18[%c7_217, %c0_218, %c0_219], %747 {strides = array<i32>} : memref<8x2x128xf32, #tpu.memory_space<vmem>>, vector<1x2x128xf32>,
    %748 = tpu.iota {dimensions = array<i32: 1>} : vector<2x128xi32>
    %749 = vector.broadcast %735 : vector<2x1xf32> to vector<2x128xf32>
    %750 = arith.cmpf oeq, %733, %749 : vector<2x128xf32>
    %c128_i32_220 = arith.constant 128 : i32
    %751 = vector.broadcast %c128_i32_220 : i32 to vector<2x128xi32>
    %752 = arith.select %750, %748, %751 : vector<2x128xi1>, vector<2x128xi32>
    %cst_221 = arith.constant dense<2147483647> : vector<2xi32>
    %753 = vector.multi_reduction <minsi>, %752, %cst_221 [1] : vector<2x128xi32> to vector<2xi32>
    %754 = vector.shape_cast %753 : vector<2xi32> to vector<2x1xi32>
    %755 = tpu.concatenate %362, %418, %474, %530, %586, %642, %698, %754 in 1 : vector<2x1xi32>, vector<2x1xi32>, vector<2x1xi32>, vector<2x1xi32>, vector<2x1xi32>, vector<2x1xi32>, vector<2x1xi32>, vector<2x1xi32> -> vector<2x8xi32>
    %c0_222 = arith.constant 0 : index
    %c0_223 = arith.constant 0 : index
    %756 = vector.load %arg19[%c0_222, %c0_223] : memref<2x8xi32, #tpu.memory_space<vmem>>, vector<2x8xi32>
    tpu.vector_store %arg19[%c0_222, %c0_223], %755 {strides = array<i32>} : memref<2x8xi32, #tpu.memory_space<vmem>>, vector<2x8xi32>,
    return
  }
}

</mosaic_0001>

<llo_original>
// kernel: _cvae_forward_jit.1
$region0: #{_cvae_forward_jit.1}
  #allocation0 [shape = 'u32[]', space=smem, size = 0x4, offset = 0x4, fixed_abs, tag = 'smem constant byte address 0x4 - core index']
  #allocation1 [shape = 'u32[144,128]{1,0:T(1,128)}', space=vmem, size = 0x12000, scoped, tag = 'internal scratch']
  %s0 = inlined_call_operand.vmem [shape: f32[8,2,32], index: 0, kind: input, shape index: {}]
  %s1 = inlined_call_operand.vmem [shape: f32[8,2,32], index: 1, kind: input, shape index: {}]
  %s2 = inlined_call_operand.vmem [shape: f32[2,8], index: 2, kind: input, shape index: {}]
  %s3 = inlined_call_operand.vmem [shape: f32[2,64], index: 3, kind: input, shape index: {}]
  %s4 = inlined_call_operand.vmem [shape: f32[2,32], index: 4, kind: input, shape index: {}]
  %s5 = inlined_call_operand.vmem [shape: f32[32,128], index: 5, kind: input, shape index: {}]
  %s6 = inlined_call_operand.vmem [shape: f32[32,128], index: 6, kind: input, shape index: {}]
  %s7 = inlined_call_operand.vmem [shape: f32[1,128], index: 7, kind: input, shape index: {}]
  %s8 = inlined_call_operand.vmem [shape: f32[32,128], index: 8, kind: input, shape index: {}]
  %s9 = inlined_call_operand.vmem [shape: f32[32,128], index: 9, kind: input, shape index: {}]
  %s10 = inlined_call_operand.vmem [shape: f32[1,128], index: 10, kind: input, shape index: {}]
  %s11 = inlined_call_operand.vmem [shape: f32[64,128], index: 11, kind: input, shape index: {}]
  %s12 = inlined_call_operand.vmem [shape: f32[1,128], index: 12, kind: input, shape index: {}]
  %s13 = inlined_call_operand.vmem [shape: f32[64,48], index: 13, kind: input, shape index: {}]
  %s14 = inlined_call_operand.vmem [shape: f32[1,48], index: 14, kind: input, shape index: {}]
  %s15 = inlined_call_operand.vmem [shape: f32[32,128], index: 15, kind: input, shape index: {}]
  %s16 = inlined_call_operand.vmem [shape: f32[1,128], index: 16, kind: input, shape index: {}]
  %s17 = inlined_call_operand.vmem [shape: f32[2,128], index: 17, kind: output, shape index: {0}]
  %s18 = inlined_call_operand.vmem [shape: f32[8,2,128], index: 18, kind: output, shape index: {1}]
  %s19 = inlined_call_operand.hbm [shape: s32[2,8], index: 19, kind: output, shape index: {2}]
  %20 = xla_tuple %s17, %s18, %s19
  %s21 = sld [smem:[#allocation0]]
  $region94: #{_cvae_forward_jit.1} parent=0
    _
  %s23 = ssub.s32 1, %s21
  %s24 = scalar_select 0, %s23, %s21
  $region1: #{_cvae_forward_jit.1} parent=0
    #allocation2 [shape = 'u8[1024]{0}', space=vmem, size = 0x400, scoped, tag = 'output window, operand 2, single buffered']
    #allocation3 [shape = 's32[1]{0}', space=sflag, size = 0x4, scoped, tag = 'scoped memory for _cvae_forward_jit.1']
    %25 = vsyncpa [#allocation3], 0
    // Predicated region
    $region2: #{_cvae_forward_jit.1} parent=1 // pred_check
      _
    $region3: #{_cvae_forward_jit.1} parent=1 // pred_check_branch
      %27 = sbr.rel (0) target = $region5
    $region4: #{_cvae_forward_jit.1} parent=1 // pred_region
      _
    $region5: #{_cvae_forward_jit.1} parent=1 // pred_fallthru
      _
    // Predicated region
    $region6: #{_cvae_forward_jit.1} parent=1 // pred_check
      _
    $region7: #{_cvae_forward_jit.1} parent=1 // pred_check_branch
      %29 = sbr.rel (0) target = $region9
    $region8: #{_cvae_forward_jit.1} parent=1 // pred_region
      _
    $region9: #{_cvae_forward_jit.1} parent=1 // pred_fallthru
      _
    // Predicated region
    $region10: #{_cvae_forward_jit.1} parent=1 // pred_check
      _
    $region11: #{_cvae_forward_jit.1} parent=1 // pred_check_branch
      %31 = sbr.rel (0) target = $region13
    $region12: #{_cvae_forward_jit.1} parent=1 // pred_region
      _
    $region13: #{_cvae_forward_jit.1} parent=1 // pred_fallthru
      _
    // Predicated region
    $region14: #{_cvae_forward_jit.1} parent=1 // pred_check
      _
    $region15: #{_cvae_forward_jit.1} parent=1 // pred_check_branch
      %33 = sbr.rel (0) target = $region17
    $region16: #{_cvae_forward_jit.1} parent=1 // pred_region
      _
    $region17: #{_cvae_forward_jit.1} parent=1 // pred_fallthru
      _
    // Predicated region
    $region18: #{_cvae_forward_jit.1} parent=1 // pred_check
      _
    $region19: #{_cvae_forward_jit.1} parent=1 // pred_check_branch
      %35 = sbr.rel (0) target = $region21
    $region20: #{_cvae_forward_jit.1} parent=1 // pred_region
      _
    $region21: #{_cvae_forward_jit.1} parent=1 // pred_fallthru
      _
    // Predicated region
    $region22: #{_cvae_forward_jit.1} parent=1 // pred_check
      _
    $region23: #{_cvae_forward_jit.1} parent=1 // pred_check_branch
      %37 = sbr.rel (0) target = $region25
    $region24: #{_cvae_forward_jit.1} parent=1 // pred_region
      _
    $region25: #{_cvae_forward_jit.1} parent=1 // pred_fallthru
      _
    // Predicated region
    $region26: #{_cvae_forward_jit.1} parent=1 // pred_check
      _
    $region27: #{_cvae_forward_jit.1} parent=1 // pred_check_branch
      %39 = sbr.rel (0) target = $region29
    $region28: #{_cvae_forward_jit.1} parent=1 // pred_region
      _
    $region29: #{_cvae_forward_jit.1} parent=1 // pred_fallthru
      _
    // Predicated region
    $region30: #{_cvae_forward_jit.1} parent=1 // pred_check
      _
    $region31: #{_cvae_forward_jit.1} parent=1 // pred_check_branch
      %41 = sbr.rel (0) target = $region33
    $region32: #{_cvae_forward_jit.1} parent=1 // pred_region
      _
    $region33: #{_cvae_forward_jit.1} parent=1 // pred_fallthru
      _
    // Predicated region
    $region34: #{_cvae_forward_jit.1} parent=1 // pred_check
      _
    $region35: #{_cvae_forward_jit.1} parent=1 // pred_check_branch
      %43 = sbr.rel (0) target = $region37
    $region36: #{_cvae_forward_jit.1} parent=1 // pred_region
      _
    $region37: #{_cvae_forward_jit.1} parent=1 // pred_fallthru
      _
    // Predicated region
    $region38: #{_cvae_forward_jit.1} parent=1 // pred_check
      _
    $region39: #{_cvae_forward_jit.1} parent=1 // pred_check_branch
      %45 = sbr.rel (0) target = $region41
    $region40: #{_cvae_forward_jit.1} parent=1 // pred_region
      _
    $region41: #{_cvae_forward_jit.1} parent=1 // pred_fallthru
      _
    // Predicated region
    $region42: #{_cvae_forward_jit.1} parent=1 // pred_check
      _
    $region43: #{_cvae_forward_jit.1} parent=1 // pred_check_branch
      %47 = sbr.rel (0) target = $region45
    $region44: #{_cvae_forward_jit.1} parent=1 // pred_region
      _
    $region45: #{_cvae_forward_jit.1} parent=1 // pred_fallthru
      _
    // Predicated region
    $region46: #{_cvae_forward_jit.1} parent=1 // pred_check
      _
    $region47: #{_cvae_forward_jit.1} parent=1 // pred_check_branch
      %49 = sbr.rel (0) target = $region49
    $region48: #{_cvae_forward_jit.1} parent=1 // pred_region
      _
    $region49: #{_cvae_forward_jit.1} parent=1 // pred_fallthru
      _
    // Predicated region
    $region50: #{_cvae_forward_jit.1} parent=1 // pred_check
      _
    $region51: #{_cvae_forward_jit.1} parent=1 // pred_check_branch
      %51 = sbr.rel (0) target = $region53
    $region52: #{_cvae_forward_jit.1} parent=1 // pred_region
      _
    $region53: #{_cvae_forward_jit.1} parent=1 // pred_fallthru
      _
    // Predicated region
    $region54: #{_cvae_forward_jit.1} parent=1 // pred_check
      _
    $region55: #{_cvae_forward_jit.1} parent=1 // pred_check_branch
      %53 = sbr.rel (0) target = $region57
    $region56: #{_cvae_forward_jit.1} parent=1 // pred_region
      _
    $region57: #{_cvae_forward_jit.1} parent=1 // pred_fallthru
      _
    // Predicated region
    $region58: #{_cvae_forward_jit.1} parent=1 // pred_check
      _
    $region59: #{_cvae_forward_jit.1} parent=1 // pred_check_branch
      %55 = sbr.rel (0) target = $region61
    $region60: #{_cvae_forward_jit.1} parent=1 // pred_region
      _
    $region61: #{_cvae_forward_jit.1} parent=1 // pred_fallthru
      _
    // Predicated region
    $region62: #{_cvae_forward_jit.1} parent=1 // pred_check
      _
    $region63: #{_cvae_forward_jit.1} parent=1 // pred_check_branch
      %57 = sbr.rel (0) target = $region65
    $region64: #{_cvae_forward_jit.1} parent=1 // pred_region
      _
    $region65: #{_cvae_forward_jit.1} parent=1 // pred_fallthru
      _
    // Predicated region
    $region66: #{_cvae_forward_jit.1} parent=1 // pred_check
      _
    $region67: #{_cvae_forward_jit.1} parent=1 // pred_check_branch
      %59 = sbr.rel (0) target = $region69
    $region68: #{_cvae_forward_jit.1} parent=1 // pred_region
      _
    $region69: #{_cvae_forward_jit.1} parent=1 // pred_fallthru
      _
    %v60 = vld [vmem:[%s5] sm:$0xff]
    %v61 = vld [vmem:[%s5 + $0x8] sm:$0xff]
    %v62 = vld [vmem:[%s5 + $0x10] sm:$0xff]
    %v63 = vld [vmem:[%s5 + $0x18] sm:$0xff]
    %v64 = vld [vmem:[%s6] sm:$0xff]
    %v65 = vld [vmem:[%s6 + $0x8] sm:$0xff]
    %v66 = vld [vmem:[%s6 + $0x10] sm:$0xff]
    %v67 = vld [vmem:[%s6 + $0x18] sm:$0xff]
    %v68 = vld [vmem:[%s7] sm:$0x1]
    %v69 = vld [vmem:[%s4] sm:$0x3]
    %v70 = vld [vmem:[%s0] sm:$0x3]
    %vm71 = vcmask 261120
    %v73 = vsel %vm71, %v69, 0
    %75 = vmatprep.subr.mxu0 0.0
    %76 = vmatpush1.msra.mxu0 %v64
    %77 = vmatprep.subr.mxu0 0.0
    %78 = vmatpush1.msra.mxu0 %v65
    %79 = vmatprep.subr.mxu0 0.0
    %80 = vmatpush1.msra.mxu0 %v66
    %81 = vmatprep.subr.mxu0 0.0
    %82 = vmatpush1.msra.mxu0 %v67
    %83 = vmatprep.subr.mxu0 0.0
    %84 = vmatpush1.msra.mxu0 0.0
    %85 = vmatprep.subr.mxu0 0.0
    %86 = vmatpush1.msra.mxu0 0.0
    %87 = vmatprep.subr.mxu0 0.0
    %88 = vmatpush1.msra.mxu0 0.0
    %89 = vmatprep.subr.mxu0 0.0
    %90 = vmatpush1.msra.mxu0 0.0
    %91 = vmatprep.subr.mxu0 0.0
    %92 = vmatpush1.msra.mxu0 0.0
    %93 = vmatprep.subr.mxu0 0.0
    %94 = vmatpush1.msra.mxu0 0.0
    %95 = vmatprep.subr.mxu0 0.0
    %96 = vmatpush1.msra.mxu0 0.0
    %97 = vmatprep.subr.mxu0 0.0
    %98 = vmatpush1.msra.mxu0 0.0
    %99 = vmatprep.subr.mxu0 0.0
    %100 = vmatpush1.msra.mxu0 0.0
    %101 = vmatprep.subr.mxu0 0.0
    %102 = vmatpush1.msra.mxu0 0.0
    %103 = vmatprep.subr.mxu0 0.0
    %104 = vmatpush1.msra.mxu0 0.0
    %105 = vmatprep.subr.mxu0 0.0
    %106 = vmatpush1.msra.mxu0 0.0
    %107 = vmatprep.subr.mxu0 0.0
    %108 = vmatpush1.msra.mxu0 0.0
    %109 = vmatprep.subr.mxu0 0.0
    %110 = vmatpush1.msra.mxu0 0.0
    %111 = vmatprep.subr.mxu0 0.0
    %112 = vmatpush1.msra.mxu0 0.0
    %113 = vmatprep.subr.mxu0 0.0
    %114 = vmatpush1.msra.mxu0 0.0
    %115 = vmatprep.subr.mxu0 0.0
    %116 = vmatpush1.msra.mxu0 0.0
    %117 = vmatprep.subr.mxu0 0.0
    %118 = vmatpush1.msra.mxu0 0.0
    %119 = vmatprep.subr.mxu0 0.0
    %120 = vmatpush1.msra.mxu0 0.0
    %121 = vmatprep.subr.mxu0 0.0
    %122 = vmatpush1.msra.mxu0 0.0
    %123 = vmatprep.subr.mxu0 0.0
    %124 = vmatpush1.msra.mxu0 0.0
    %125 = vmatprep.subr.mxu0 0.0
    %126 = vmatpush1.msra.mxu0 0.0
    %127 = vmatprep.subr.mxu0 0.0
    %128 = vmatpush1.msra.mxu0 0.0
    %129 = vmatprep.subr.mxu0 0.0
    %130 = vmatpush1.msra.mxu0 0.0
    %131 = vmatprep.subr.mxu0 0.0
    %132 = vmatpush1.msra.mxu0 0.0
    %133 = vmatprep.subr.mxu0 0.0
    %134 = vmatpush1.msra.mxu0 0.0
    %135 = vmatprep.subr.mxu0 0.0
    %136 = vmatpush1.msra.mxu0 0.0
    %137 = vmatprep.subr.mxu0 0.0
    %138 = vmatpush1.msra.mxu0 0.0
    %139 = vmatprep.mubr.f32.mxu0 0.0
    %140 = vmatmul.mubr.f32.gmra.mrb[0].mxu0 %v73
    %v141 = vpop.f32.mrb[0].mxu0
    %v142 = vadd.f32 0.0, %v141
    %v143 = vpop.f32.mrb[0].mxu0
    %144 = vdwg.mxu0
    %v146 = vsel %vm71, %v70, 0
    %148 = vmatprep.subr.mxu0 0.0
    %149 = vmatpush1.msra.mxu0 %v60
    %150 = vmatprep.subr.mxu0 0.0
    %151 = vmatpush1.msra.mxu0 %v61
    %152 = vmatprep.subr.mxu0 0.0
    %153 = vmatpush1.msra.mxu0 %v62
    %154 = vmatprep.subr.mxu0 0.0
    %155 = vmatpush1.msra.mxu0 %v63
    %156 = vmatprep.subr.mxu0 0.0
    %157 = vmatpush1.msra.mxu0 0.0
    %158 = vmatprep.subr.mxu0 0.0
    %159 = vmatpush1.msra.mxu0 0.0
    %160 = vmatprep.subr.mxu0 0.0
    %161 = vmatpush1.msra.mxu0 0.0
    %162 = vmatprep.subr.mxu0 0.0
    %163 = vmatpush1.msra.mxu0 0.0
    %164 = vmatprep.subr.mxu0 0.0
    %165 = vmatpush1.msra.mxu0 0.0
    %166 = vmatprep.subr.mxu0 0.0
    %167 = vmatpush1.msra.mxu0 0.0
    %168 = vmatprep.subr.mxu0 0.0
    %169 = vmatpush1.msra.mxu0 0.0
    %170 = vmatprep.subr.mxu0 0.0
    %171 = vmatpush1.msra.mxu0 0.0
    %172 = vmatprep.subr.mxu0 0.0
    %173 = vmatpush1.msra.mxu0 0.0
    %174 = vmatprep.subr.mxu0 0.0
    %175 = vmatpush1.msra.mxu0 0.0
    %176 = vmatprep.subr.mxu0 0.0
    %177 = vmatpush1.msra.mxu0 0.0
    %178 = vmatprep.subr.mxu0 0.0
    %179 = vmatpush1.msra.mxu0 0.0
    %180 = vmatprep.subr.mxu0 0.0
    %181 = vmatpush1.msra.mxu0 0.0
    %182 = vmatprep.subr.mxu0 0.0
    %183 = vmatpush1.msra.mxu0 0.0
    %184 = vmatprep.subr.mxu0 0.0
    %185 = vmatpush1.msra.mxu0 0.0
    %186 = vmatprep.subr.mxu0 0.0
    %187 = vmatpush1.msra.mxu0 0.0
    %188 = vmatprep.subr.mxu0 0.0
    %189 = vmatpush1.msra.mxu0 0.0
    %190 = vmatprep.subr.mxu0 0.0
    %191 = vmatpush1.msra.mxu0 0.0
    %192 = vmatprep.subr.mxu0 0.0
    %193 = vmatpush1.msra.mxu0 0.0
    %194 = vmatprep.subr.mxu0 0.0
    %195 = vmatpush1.msra.mxu0 0.0
    %196 = vmatprep.subr.mxu0 0.0
    %197 = vmatpush1.msra.mxu0 0.0
    %198 = vmatprep.subr.mxu0 0.0
    %199 = vmatpush1.msra.mxu0 0.0
    %200 = vmatprep.subr.mxu0 0.0
    %201 = vmatpush1.msra.mxu0 0.0
    %202 = vmatprep.subr.mxu0 0.0
    %203 = vmatpush1.msra.mxu0 0.0
    %204 = vmatprep.subr.mxu0 0.0
    %205 = vmatpush1.msra.mxu0 0.0
    %206 = vmatprep.subr.mxu0 0.0
    %207 = vmatpush1.msra.mxu0 0.0
    %208 = vmatprep.subr.mxu0 0.0
    %209 = vmatpush1.msra.mxu0 0.0
    %210 = vmatprep.subr.mxu0 0.0
    %211 = vmatpush1.msra.mxu0 0.0
    %212 = vmatprep.mubr.f32.mxu0 0.0
    %213 = vmatmul.mubr.f32.gmra.mrb[0].mxu0 %v146
    %v214 = vpop.f32.mrb[0].mxu0
    %v215 = vadd.f32 %v142, %v214
    %v216 = vpop.f32.mrb[0].mxu0
    %217 = vdwg.mxu0
    %v219 = vlaneseq
    %v220 = vshrl.u32 %v219, 7
    %v221 = vsub.s32 0, %v220
    %v222 = vrot.slane %v68, %v221
    %v224 = vadd.f32 %v215, %v222
    %v225 = vxor.u32 %v224, 2147483648
    %v226 = vmul.f32 %v225, 1.442695
    %v227 = vpow.pop %v226
    %v228 = vadd.f32 %v227, 1.0
    %v229 = vrcp.pop %v228
    %v230 = vmul.f32 1.0, %v229
    %v231 = vtanh.pop %v224
    %232 = vrot.lane.b32.xlu0 %v69, 32
    %v233 = vpop.permute.xlu0 %232
    %v235 = vmul.f32 %v230, %v233
    %237 = vrot.lane.b32.xlu0 %v231, 64
    %v238 = vpop.permute.xlu0 %237
    %v240 = vmul.f32 %v230, %v238
    %242 = vrot.lane.b32.xlu0 %v240, 32
    %v243 = vpop.permute.xlu0 %242
    %v245 = vadd.f32 %v235, %v243
    %v246 = vtanh.pop %v245
    %248 = vrot.lane.b32.xlu0 %v246, 64
    %v249 = vpop.permute.xlu0 %248
    %v251 = vmul.f32 %v230, %v249
    %s252 = scalar_lea.vmem %s0, 2
    %v253 = vld [vmem:[%s252] sm:$0x3]
    %255 = vrot.lane.b32.xlu0 %v251, 32
    %v256 = vpop.permute.xlu0 %255
    %v257 = vsel %vm71, %v256, 0
    %259 = vmatprep.subr.mxu0 0.0
    %260 = vmatpush1.msra.mxu0 %v64
    %261 = vmatprep.subr.mxu0 0.0
    %262 = vmatpush1.msra.mxu0 %v65
    %263 = vmatprep.subr.mxu0 0.0
    %264 = vmatpush1.msra.mxu0 %v66
    %265 = vmatprep.subr.mxu0 0.0
    %266 = vmatpush1.msra.mxu0 %v67
    %267 = vmatprep.subr.mxu0 0.0
    %268 = vmatpush1.msra.mxu0 0.0
    %269 = vmatprep.subr.mxu0 0.0
    %270 = vmatpush1.msra.mxu0 0.0
    %271 = vmatprep.subr.mxu0 0.0
    %272 = vmatpush1.msra.mxu0 0.0
    %273 = vmatprep.subr.mxu0 0.0
    %274 = vmatpush1.msra.mxu0 0.0
    %275 = vmatprep.subr.mxu0 0.0
    %276 = vmatpush1.msra.mxu0 0.0
    %277 = vmatprep.subr.mxu0 0.0
    %278 = vmatpush1.msra.mxu0 0.0
    %279 = vmatprep.subr.mxu0 0.0
    %280 = vmatpush1.msra.mxu0 0.0
    %281 = vmatprep.subr.mxu0 0.0
    %282 = vmatpush1.msra.mxu0 0.0
    %283 = vmatprep.subr.mxu0 0.0
    %284 = vmatpush1.msra.mxu0 0.0
    %285 = vmatprep.subr.mxu0 0.0
    %286 = vmatpush1.msra.mxu0 0.0
    %287 = vmatprep.subr.mxu0 0.0
    %288 = vmatpush1.msra.mxu0 0.0
    %289 = vmatprep.subr.mxu0 0.0
    %290 = vmatpush1.msra.mxu0 0.0
    %291 = vmatprep.subr.mxu0 0.0
    %292 = vmatpush1.msra.mxu0 0.0
    %293 = vmatprep.subr.mxu0 0.0
    %294 = vmatpush1.msra.mxu0 0.0
    %295 = vmatprep.subr.mxu0 0.0
    %296 = vmatpush1.msra.mxu0 0.0
    %297 = vmatprep.subr.mxu0 0.0
    %298 = vmatpush1.msra.mxu0 0.0
    %299 = vmatprep.subr.mxu0 0.0
    %300 = vmatpush1.msra.mxu0 0.0
    %301 = vmatprep.subr.mxu0 0.0
    %302 = vmatpush1.msra.mxu0 0.0
    %303 = vmatprep.subr.mxu0 0.0
    %304 = vmatpush1.msra.mxu0 0.0
    %305 = vmatprep.subr.mxu0 0.0
    %306 = vmatpush1.msra.mxu0 0.0
    %307 = vmatprep.subr.mxu0 0.0
    %308 = vmatpush1.msra.mxu0 0.0
    %309 = vmatprep.subr.mxu0 0.0
    %310 = vmatpush1.msra.mxu0 0.0
    %311 = vmatprep.subr.mxu0 0.0
    %312 = vmatpush1.msra.mxu0 0.0
    %313 = vmatprep.subr.mxu0 0.0
    %314 = vmatpush1.msra.mxu0 0.0
    %315 = vmatprep.subr.mxu0 0.0
    %316 = vmatpush1.msra.mxu0 0.0
    %317 = vmatprep.subr.mxu0 0.0
    %318 = vmatpush1.msra.mxu0 0.0
    %319 = vmatprep.subr.mxu0 0.0
    %320 = vmatpush1.msra.mxu0 0.0
    %321 = vmatprep.subr.mxu0 0.0
    %322 = vmatpush1.msra.mxu0 0.0
    %323 = vmatprep.mubr.f32.mxu0 0.0
    %324 = vmatmul.mubr.f32.gmra.mrb[0].mxu0 %v257
    %v325 = vpop.f32.mrb[0].mxu0
    %v326 = vadd.f32 0.0, %v325
    %v327 = vpop.f32.mrb[0].mxu0
    %328 = vdwg.mxu0
    %v330 = vsel %vm71, %v253, 0
    %332 = vmatprep.subr.mxu0 0.0
    %333 = vmatpush1.msra.mxu0 %v60
    %334 = vmatprep.subr.mxu0 0.0
    %335 = vmatpush1.msra.mxu0 %v61
    %336 = vmatprep.subr.mxu0 0.0
    %337 = vmatpush1.msra.mxu0 %v62
    %338 = vmatprep.subr.mxu0 0.0
    %339 = vmatpush1.msra.mxu0 %v63
    %340 = vmatprep.subr.mxu0 0.0
    %341 = vmatpush1.msra.mxu0 0.0
    %342 = vmatprep.subr.mxu0 0.0
    %343 = vmatpush1.msra.mxu0 0.0
    %344 = vmatprep.subr.mxu0 0.0
    %345 = vmatpush1.msra.mxu0 0.0
    %346 = vmatprep.subr.mxu0 0.0
    %347 = vmatpush1.msra.mxu0 0.0
    %348 = vmatprep.subr.mxu0 0.0
    %349 = vmatpush1.msra.mxu0 0.0
    %350 = vmatprep.subr.mxu0 0.0
    %351 = vmatpush1.msra.mxu0 0.0
    %352 = vmatprep.subr.mxu0 0.0
    %353 = vmatpush1.msra.mxu0 0.0
    %354 = vmatprep.subr.mxu0 0.0
    %355 = vmatpush1.msra.mxu0 0.0
    %356 = vmatprep.subr.mxu0 0.0
    %357 = vmatpush1.msra.mxu0 0.0
    %358 = vmatprep.subr.mxu0 0.0
    %359 = vmatpush1.msra.mxu0 0.0
    %360 = vmatprep.subr.mxu0 0.0
    %361 = vmatpush1.msra.mxu0 0.0
    %362 = vmatprep.subr.mxu0 0.0
    %363 = vmatpush1.msra.mxu0 0.0
    %364 = vmatprep.subr.mxu0 0.0
    %365 = vmatpush1.msra.mxu0 0.0
    %366 = vmatprep.subr.mxu0 0.0
    %367 = vmatpush1.msra.mxu0 0.0
    %368 = vmatprep.subr.mxu0 0.0
    %369 = vmatpush1.msra.mxu0 0.0
    %370 = vmatprep.subr.mxu0 0.0
    %371 = vmatpush1.msra.mxu0 0.0
    %372 = vmatprep.subr.mxu0 0.0
    %373 = vmatpush1.msra.mxu0 0.0
    %374 = vmatprep.subr.mxu0 0.0
    %375 = vmatpush1.msra.mxu0 0.0
    %376 = vmatprep.subr.mxu0 0.0
    %377 = vmatpush1.msra.mxu0 0.0
    %378 = vmatprep.subr.mxu0 0.0
    %379 = vmatpush1.msra.mxu0 0.0
    %380 = vmatprep.subr.mxu0 0.0
    %381 = vmatpush1.msra.mxu0 0.0
    %382 = vmatprep.subr.mxu0 0.0
    %383 = vmatpush1.msra.mxu0 0.0
    %384 = vmatprep.subr.mxu0 0.0
    %385 = vmatpush1.msra.mxu0 0.0
    %386 = vmatprep.subr.mxu0 0.0
    %387 = vmatpush1.msra.mxu0 0.0
    %388 = vmatprep.subr.mxu0 0.0
    %389 = vmatpush1.msra.mxu0 0.0
    %390 = vmatprep.subr.mxu0 0.0
    %391 = vmatpush1.msra.mxu0 0.0
    %392 = vmatprep.subr.mxu0 0.0
    %393 = vmatpush1.msra.mxu0 0.0
    %394 = vmatprep.subr.mxu0 0.0
    %395 = vmatpush1.msra.mxu0 0.0
    %396 = vmatprep.mubr.f32.mxu0 0.0
    %397 = vmatmul.mubr.f32.gmra.mrb[0].mxu0 %v330
    %v398 = vpop.f32.mrb[0].mxu0
    %v399 = vadd.f32 %v326, %v398
    %v400 = vpop.f32.mrb[0].mxu0
    %401 = vdwg.mxu0
    %v402 = vadd.f32 %v399, %v222
    %v403 = vxor.u32 %v402, 2147483648
    %v404 = vmul.f32 %v403, 1.442695
    %v405 = vpow.pop %v404
    %v406 = vadd.f32 %v405, 1.0
    %v407 = vrcp.pop %v406
    %v408 = vmul.f32 1.0, %v407
    %v409 = vtanh.pop %v402
    %v410 = vmul.f32 %v408, %v245
    %412 = vrot.lane.b32.xlu0 %v409, 64
    %v413 = vpop.permute.xlu0 %412
    %v415 = vmul.f32 %v408, %v413
    %417 = vrot.lane.b32.xlu0 %v415, 32
    %v418 = vpop.permute.xlu0 %417
    %v420 = vadd.f32 %v410, %v418
    %v421 = vtanh.pop %v420
    %423 = vrot.lane.b32.xlu0 %v421, 64
    %v424 = vpop.permute.xlu0 %423
    %v426 = vmul.f32 %v408, %v424
    %s427 = scalar_lea.vmem %s0, 4
    %v428 = vld [vmem:[%s427] sm:$0x3]
    %430 = vrot.lane.b32.xlu0 %v426, 32
    %v431 = vpop.permute.xlu0 %430
    %v432 = vsel %vm71, %v431, 0
    %434 = vmatprep.subr.mxu0 0.0
    %435 = vmatpush1.msra.mxu0 %v64
    %436 = vmatprep.subr.mxu0 0.0
    %437 = vmatpush1.msra.mxu0 %v65
    %438 = vmatprep.subr.mxu0 0.0
    %439 = vmatpush1.msra.mxu0 %v66
    %440 = vmatprep.subr.mxu0 0.0
    %441 = vmatpush1.msra.mxu0 %v67
    %442 = vmatprep.subr.mxu0 0.0
    %443 = vmatpush1.msra.mxu0 0.0
    %444 = vmatprep.subr.mxu0 0.0
    %445 = vmatpush1.msra.mxu0 0.0
    %446 = vmatprep.subr.mxu0 0.0
    %447 = vmatpush1.msra.mxu0 0.0
    %448 = vmatprep.subr.mxu0 0.0
    %449 = vmatpush1.msra.mxu0 0.0
    %450 = vmatprep.subr.mxu0 0.0
    %451 = vmatpush1.msra.mxu0 0.0
    %452 = vmatprep.subr.mxu0 0.0
    %453 = vmatpush1.msra.mxu0 0.0
    %454 = vmatprep.subr.mxu0 0.0
    %455 = vmatpush1.msra.mxu0 0.0
    %456 = vmatprep.subr.mxu0 0.0
    %457 = vmatpush1.msra.mxu0 0.0
    %458 = vmatprep.subr.mxu0 0.0
    %459 = vmatpush1.msra.mxu0 0.0
    %460 = vmatprep.subr.mxu0 0.0
    %461 = vmatpush1.msra.mxu0 0.0
    %462 = vmatprep.subr.mxu0 0.0
    %463 = vmatpush1.msra.mxu0 0.0
    %464 = vmatprep.subr.mxu0 0.0
    %465 = vmatpush1.msra.mxu0 0.0
    %466 = vmatprep.subr.mxu0 0.0
    %467 = vmatpush1.msra.mxu0 0.0
    %468 = vmatprep.subr.mxu0 0.0
    %469 = vmatpush1.msra.mxu0 0.0
    %470 = vmatprep.subr.mxu0 0.0
    %471 = vmatpush1.msra.mxu0 0.0
    %472 = vmatprep.subr.mxu0 0.0
    %473 = vmatpush1.msra.mxu0 0.0
    %474 = vmatprep.subr.mxu0 0.0
    %475 = vmatpush1.msra.mxu0 0.0
    %476 = vmatprep.subr.mxu0 0.0
    %477 = vmatpush1.msra.mxu0 0.0
    %478 = vmatprep.subr.mxu0 0.0
    %479 = vmatpush1.msra.mxu0 0.0
    %480 = vmatprep.subr.mxu0 0.0
    %481 = vmatpush1.msra.mxu0 0.0
    %482 = vmatprep.subr.mxu0 0.0
    %483 = vmatpush1.msra.mxu0 0.0
    %484 = vmatprep.subr.mxu0 0.0
    %485 = vmatpush1.msra.mxu0 0.0
    %486 = vmatprep.subr.mxu0 0.0
    %487 = vmatpush1.msra.mxu0 0.0
    %488 = vmatprep.subr.mxu0 0.0
    %489 = vmatpush1.msra.mxu0 0.0
    %490 = vmatprep.subr.mxu0 0.0
    %491 = vmatpush1.msra.mxu0 0.0
    %492 = vmatprep.subr.mxu0 0.0
    %493 = vmatpush1.msra.mxu0 0.0
    %494 = vmatprep.subr.mxu0 0.0
    %495 = vmatpush1.msra.mxu0 0.0
    %496 = vmatprep.subr.mxu0 0.0
    %497 = vmatpush1.msra.mxu0 0.0
    %498 = vmatprep.mubr.f32.mxu0 0.0
    %499 = vmatmul.mubr.f32.gmra.mrb[0].mxu0 %v432
    %v500 = vpop.f32.mrb[0].mxu0
    %v501 = vadd.f32 0.0, %v500
    %v502 = vpop.f32.mrb[0].mxu0
    %503 = vdwg.mxu0
    %v505 = vsel %vm71, %v428, 0
    %507 = vmatprep.subr.mxu0 0.0
    %508 = vmatpush1.msra.mxu0 %v60
    %509 = vmatprep.subr.mxu0 0.0
    %510 = vmatpush1.msra.mxu0 %v61
    %511 = vmatprep.subr.mxu0 0.0
    %512 = vmatpush1.msra.mxu0 %v62
    %513 = vmatprep.subr.mxu0 0.0
    %514 = vmatpush1.msra.mxu0 %v63
    %515 = vmatprep.subr.mxu0 0.0
    %516 = vmatpush1.msra.mxu0 0.0
    %517 = vmatprep.subr.mxu0 0.0
    %518 = vmatpush1.msra.mxu0 0.0
    %519 = vmatprep.subr.mxu0 0.0
    %520 = vmatpush1.msra.mxu0 0.0
    %521 = vmatprep.subr.mxu0 0.0
    %522 = vmatpush1.msra.mxu0 0.0
    %523 = vmatprep.subr.mxu0 0.0
    %524 = vmatpush1.msra.mxu0 0.0
    %525 = vmatprep.subr.mxu0 0.0
    %526 = vmatpush1.msra.mxu0 0.0
    %527 = vmatprep.subr.mxu0 0.0
    %528 = vmatpush1.msra.mxu0 0.0
    %529 = vmatprep.subr.mxu0 0.0
    %530 = vmatpush1.msra.mxu0 0.0
    %531 = vmatprep.subr.mxu0 0.0
    %532 = vmatpush1.msra.mxu0 0.0
    %533 = vmatprep.subr.mxu0 0.0
    %534 = vmatpush1.msra.mxu0 0.0
    %535 = vmatprep.subr.mxu0 0.0
    %536 = vmatpush1.msra.mxu0 0.0
    %537 = vmatprep.subr.mxu0 0.0
    %538 = vmatpush1.msra.mxu0 0.0
    %539 = vmatprep.subr.mxu0 0.0
    %540 = vmatpush1.msra.mxu0 0.0
    %541 = vmatprep.subr.mxu0 0.0
    %542 = vmatpush1.msra.mxu0 0.0
    %543 = vmatprep.subr.mxu0 0.0
    %544 = vmatpush1.msra.mxu0 0.0
    %545 = vmatprep.subr.mxu0 0.0
    %546 = vmatpush1.msra.mxu0 0.0
    %547 = vmatprep.subr.mxu0 0.0
    %548 = vmatpush1.msra.mxu0 0.0
    %549 = vmatprep.subr.mxu0 0.0
    %550 = vmatpush1.msra.mxu0 0.0
    %551 = vmatprep.subr.mxu0 0.0
    %552 = vmatpush1.msra.mxu0 0.0
    %553 = vmatprep.subr.mxu0 0.0
    %554 = vmatpush1.msra.mxu0 0.0
    %555 = vmatprep.subr.mxu0 0.0
    %556 = vmatpush1.msra.mxu0 0.0
    %557 = vmatprep.subr.mxu0 0.0
    %558 = vmatpush1.msra.mxu0 0.0
    %559 = vmatprep.subr.mxu0 0.0
    %560 = vmatpush1.msra.mxu0 0.0
    %561 = vmatprep.subr.mxu0 0.0
    %562 = vmatpush1.msra.mxu0 0.0
    %563 = vmatprep.subr.mxu0 0.0
    %564 = vmatpush1.msra.mxu0 0.0
    %565 = vmatprep.subr.mxu0 0.0
    %566 = vmatpush1.msra.mxu0 0.0
    %567 = vmatprep.subr.mxu0 0.0
    %568 = vmatpush1.msra.mxu0 0.0
    %569 = vmatprep.subr.mxu0 0.0
    %570 = vmatpush1.msra.mxu0 0.0
    %571 = vmatprep.mubr.f32.mxu0 0.0
    %572 = vmatmul.mubr.f32.gmra.mrb[0].mxu0 %v505
    %v573 = vpop.f32.mrb[0].mxu0
    %v574 = vadd.f32 %v501, %v573
    %v575 = vpop.f32.mrb[0].mxu0
    %576 = vdwg.mxu0
    %v577 = vadd.f32 %v574, %v222
    %v578 = vxor.u32 %v577, 2147483648
    %v579 = vmul.f32 %v578, 1.442695
    %v580 = vpow.pop %v579
    %v581 = vadd.f32 %v580, 1.0
    %v582 = vrcp.pop %v581
    %v583 = vmul.f32 1.0, %v582
    %v584 = vtanh.pop %v577
    %v585 = vmul.f32 %v583, %v420
    %587 = vrot.lane.b32.xlu0 %v584, 64
    %v588 = vpop.permute.xlu0 %587
    %v590 = vmul.f32 %v583, %v588
    %592 = vrot.lane.b32.xlu0 %v590, 32
    %v593 = vpop.permute.xlu0 %592
    %v595 = vadd.f32 %v585, %v593
    %v596 = vtanh.pop %v595
    %598 = vrot.lane.b32.xlu0 %v596, 64
    %v599 = vpop.permute.xlu0 %598
    %v601 = vmul.f32 %v583, %v599
    %s602 = scalar_lea.vmem %s0, 6
    %v603 = vld [vmem:[%s602] sm:$0x3]
    %605 = vrot.lane.b32.xlu0 %v601, 32
    %v606 = vpop.permute.xlu0 %605
    %v607 = vsel %vm71, %v606, 0
    %609 = vmatprep.subr.mxu0 0.0
    %610 = vmatpush1.msra.mxu0 %v64
    %611 = vmatprep.subr.mxu0 0.0
    %612 = vmatpush1.msra.mxu0 %v65
    %613 = vmatprep.subr.mxu0 0.0
    %614 = vmatpush1.msra.mxu0 %v66
    %615 = vmatprep.subr.mxu0 0.0
    %616 = vmatpush1.msra.mxu0 %v67
    %617 = vmatprep.subr.mxu0 0.0
    %618 = vmatpush1.msra.mxu0 0.0
    %619 = vmatprep.subr.mxu0 0.0
    %620 = vmatpush1.msra.mxu0 0.0
    %621 = vmatprep.subr.mxu0 0.0
    %622 = vmatpush1.msra.mxu0 0.0
    %623 = vmatprep.subr.mxu0 0.0
    %624 = vmatpush1.msra.mxu0 0.0
    %625 = vmatprep.subr.mxu0 0.0
    %626 = vmatpush1.msra.mxu0 0.0
    %627 = vmatprep.subr.mxu0 0.0
    %628 = vmatpush1.msra.mxu0 0.0
    %629 = vmatprep.subr.mxu0 0.0
    %630 = vmatpush1.msra.mxu0 0.0
    %631 = vmatprep.subr.mxu0 0.0
    %632 = vmatpush1.msra.mxu0 0.0
    %633 = vmatprep.subr.mxu0 0.0
    %634 = vmatpush1.msra.mxu0 0.0
    %635 = vmatprep.subr.mxu0 0.0
    %636 = vmatpush1.msra.mxu0 0.0
    %637 = vmatprep.subr.mxu0 0.0
    %638 = vmatpush1.msra.mxu0 0.0
    %639 = vmatprep.subr.mxu0 0.0
    %640 = vmatpush1.msra.mxu0 0.0
    %641 = vmatprep.subr.mxu0 0.0
    %642 = vmatpush1.msra.mxu0 0.0
    %643 = vmatprep.subr.mxu0 0.0
    %644 = vmatpush1.msra.mxu0 0.0
    %645 = vmatprep.subr.mxu0 0.0
    %646 = vmatpush1.msra.mxu0 0.0
    %647 = vmatprep.subr.mxu0 0.0
    %648 = vmatpush1.msra.mxu0 0.0
    %649 = vmatprep.subr.mxu0 0.0
    %650 = vmatpush1.msra.mxu0 0.0
    %651 = vmatprep.subr.mxu0 0.0
    %652 = vmatpush1.msra.mxu0 0.0
    %653 = vmatprep.subr.mxu0 0.0
    %654 = vmatpush1.msra.mxu0 0.0
    %655 = vmatprep.subr.mxu0 0.0
    %656 = vmatpush1.msra.mxu0 0.0
    %657 = vmatprep.subr.mxu0 0.0
    %658 = vmatpush1.msra.mxu0 0.0
    %659 = vmatprep.subr.mxu0 0.0
    %660 = vmatpush1.msra.mxu0 0.0
    %661 = vmatprep.subr.mxu0 0.0
    %662 = vmatpush1.msra.mxu0 0.0
    %663 = vmatprep.subr.mxu0 0.0
    %664 = vmatpush1.msra.mxu0 0.0
    %665 = vmatprep.subr.mxu0 0.0
    %666 = vmatpush1.msra.mxu0 0.0
    %667 = vmatprep.subr.mxu0 0.0
    %668 = vmatpush1.msra.mxu0 0.0
    %669 = vmatprep.subr.mxu0 0.0
    %670 = vmatpush1.msra.mxu0 0.0
    %671 = vmatprep.subr.mxu0 0.0
    %672 = vmatpush1.msra.mxu0 0.0
    %673 = vmatprep.mubr.f32.mxu0 0.0
    %674 = vmatmul.mubr.f32.gmra.mrb[0].mxu0 %v607
    %v675 = vpop.f32.mrb[0].mxu0
    %v676 = vadd.f32 0.0, %v675
    %v677 = vpop.f32.mrb[0].mxu0
    %678 = vdwg.mxu0
    %v680 = vsel %vm71, %v603, 0
    %682 = vmatprep.subr.mxu0 0.0
    %683 = vmatpush1.msra.mxu0 %v60
    %684 = vmatprep.subr.mxu0 0.0
    %685 = vmatpush1.msra.mxu0 %v61
    %686 = vmatprep.subr.mxu0 0.0
    %687 = vmatpush1.msra.mxu0 %v62
    %688 = vmatprep.subr.mxu0 0.0
    %689 = vmatpush1.msra.mxu0 %v63
    %690 = vmatprep.subr.mxu0 0.0
    %691 = vmatpush1.msra.mxu0 0.0
    %692 = vmatprep.subr.mxu0 0.0
    %693 = vmatpush1.msra.mxu0 0.0
    %694 = vmatprep.subr.mxu0 0.0
    %695 = vmatpush1.msra.mxu0 0.0
    %696 = vmatprep.subr.mxu0 0.0
    %697 = vmatpush1.msra.mxu0 0.0
    %698 = vmatprep.subr.mxu0 0.0
    %699 = vmatpush1.msra.mxu0 0.0
    %700 = vmatprep.subr.mxu0 0.0
    %701 = vmatpush1.msra.mxu0 0.0
    %702 = vmatprep.subr.mxu0 0.0
    %703 = vmatpush1.msra.mxu0 0.0
    %704 = vmatprep.subr.mxu0 0.0
    %705 = vmatpush1.msra.mxu0 0.0
    %706 = vmatprep.subr.mxu0 0.0
    %707 = vmatpush1.msra.mxu0 0.0
    %708 = vmatprep.subr.mxu0 0.0
    %709 = vmatpush1.msra.mxu0 0.0
    %710 = vmatprep.subr.mxu0 0.0
    %711 = vmatpush1.msra.mxu0 0.0
    %712 = vmatprep.subr.mxu0 0.0
    %713 = vmatpush1.msra.mxu0 0.0
    %714 = vmatprep.subr.mxu0 0.0
    %715 = vmatpush1.msra.mxu0 0.0
    %716 = vmatprep.subr.mxu0 0.0
    %717 = vmatpush1.msra.mxu0 0.0
    %718 = vmatprep.subr.mxu0 0.0
    %719 = vmatpush1.msra.mxu0 0.0
    %720 = vmatprep.subr.mxu0 0.0
    %721 = vmatpush1.msra.mxu0 0.0
    %722 = vmatprep.subr.mxu0 0.0
    %723 = vmatpush1.msra.mxu0 0.0
    %724 = vmatprep.subr.mxu0 0.0
    %725 = vmatpush1.msra.mxu0 0.0
    %726 = vmatprep.subr.mxu0 0.0
    %727 = vmatpush1.msra.mxu0 0.0
    %728 = vmatprep.subr.mxu0 0.0
    %729 = vmatpush1.msra.mxu0 0.0
    %730 = vmatprep.subr.mxu0 0.0
    %731 = vmatpush1.msra.mxu0 0.0
    %732 = vmatprep.subr.mxu0 0.0
    %733 = vmatpush1.msra.mxu0 0.0
    %734 = vmatprep.subr.mxu0 0.0
    %735 = vmatpush1.msra.mxu0 0.0
    %736 = vmatprep.subr.mxu0 0.0
    %737 = vmatpush1.msra.mxu0 0.0
    %738 = vmatprep.subr.mxu0 0.0
    %739 = vmatpush1.msra.mxu0 0.0
    %740 = vmatprep.subr.mxu0 0.0
    %741 = vmatpush1.msra.mxu0 0.0
    %742 = vmatprep.subr.mxu0 0.0
    %743 = vmatpush1.msra.mxu0 0.0
    %744 = vmatprep.subr.mxu0 0.0
    %745 = vmatpush1.msra.mxu0 0.0
    %746 = vmatprep.mubr.f32.mxu0 0.0
    %747 = vmatmul.mubr.f32.gmra.mrb[0].mxu0 %v680
    %v748 = vpop.f32.mrb[0].mxu0
    %v749 = vadd.f32 %v676, %v748
    %v750 = vpop.f32.mrb[0].mxu0
    %751 = vdwg.mxu0
    %v752 = vadd.f32 %v749, %v222
    %v753 = vxor.u32 %v752, 2147483648
    %v754 = vmul.f32 %v753, 1.442695
    %v755 = vpow.pop %v754
    %v756 = vadd.f32 %v755, 1.0
    %v757 = vrcp.pop %v756
    %v758 = vmul.f32 1.0, %v757
    %v759 = vtanh.pop %v752
    %v760 = vmul.f32 %v758, %v595
    %762 = vrot.lane.b32.xlu0 %v759, 64
    %v763 = vpop.permute.xlu0 %762
    %v765 = vmul.f32 %v758, %v763
    %767 = vrot.lane.b32.xlu0 %v765, 32
    %v768 = vpop.permute.xlu0 %767
    %v770 = vadd.f32 %v760, %v768
    %v771 = vtanh.pop %v770
    %773 = vrot.lane.b32.xlu0 %v771, 64
    %v774 = vpop.permute.xlu0 %773
    %v776 = vmul.f32 %v758, %v774
    %s777 = scalar_lea.vmem %s0, 8
    %v778 = vld [vmem:[%s777] sm:$0x3]
    %780 = vrot.lane.b32.xlu0 %v776, 32
    %v781 = vpop.permute.xlu0 %780
    %v782 = vsel %vm71, %v781, 0
    %784 = vmatprep.subr.mxu0 0.0
    %785 = vmatpush1.msra.mxu0 %v64
    %786 = vmatprep.subr.mxu0 0.0
    %787 = vmatpush1.msra.mxu0 %v65
    %788 = vmatprep.subr.mxu0 0.0
    %789 = vmatpush1.msra.mxu0 %v66
    %790 = vmatprep.subr.mxu0 0.0
    %791 = vmatpush1.msra.mxu0 %v67
    %792 = vmatprep.subr.mxu0 0.0
    %793 = vmatpush1.msra.mxu0 0.0
    %794 = vmatprep.subr.mxu0 0.0
    %795 = vmatpush1.msra.mxu0 0.0
    %796 = vmatprep.subr.mxu0 0.0
    %797 = vmatpush1.msra.mxu0 0.0
    %798 = vmatprep.subr.mxu0 0.0
    %799 = vmatpush1.msra.mxu0 0.0
    %800 = vmatprep.subr.mxu0 0.0
    %801 = vmatpush1.msra.mxu0 0.0
    %802 = vmatprep.subr.mxu0 0.0
    %803 = vmatpush1.msra.mxu0 0.0
    %804 = vmatprep.subr.mxu0 0.0
    %805 = vmatpush1.msra.mxu0 0.0
    %806 = vmatprep.subr.mxu0 0.0
    %807 = vmatpush1.msra.mxu0 0.0
    %808 = vmatprep.subr.mxu0 0.0
    %809 = vmatpush1.msra.mxu0 0.0
    %810 = vmatprep.subr.mxu0 0.0
    %811 = vmatpush1.msra.mxu0 0.0
    %812 = vmatprep.subr.mxu0 0.0
    %813 = vmatpush1.msra.mxu0 0.0
    %814 = vmatprep.subr.mxu0 0.0
    %815 = vmatpush1.msra.mxu0 0.0
    %816 = vmatprep.subr.mxu0 0.0
    %817 = vmatpush1.msra.mxu0 0.0
    %818 = vmatprep.subr.mxu0 0.0
    %819 = vmatpush1.msra.mxu0 0.0
    %820 = vmatprep.subr.mxu0 0.0
    %821 = vmatpush1.msra.mxu0 0.0
    %822 = vmatprep.subr.mxu0 0.0
    %823 = vmatpush1.msra.mxu0 0.0
    %824 = vmatprep.subr.mxu0 0.0
    %825 = vmatpush1.msra.mxu0 0.0
    %826 = vmatprep.subr.mxu0 0.0
    %827 = vmatpush1.msra.mxu0 0.0
    %828 = vmatprep.subr.mxu0 0.0
    %829 = vmatpush1.msra.mxu0 0.0
    %830 = vmatprep.subr.mxu0 0.0
    %831 = vmatpush1.msra.mxu0 0.0
    %832 = vmatprep.subr.mxu0 0.0
    %833 = vmatpush1.msra.mxu0 0.0
    %834 = vmatprep.subr.mxu0 0.0
    %835 = vmatpush1.msra.mxu0 0.0
    %836 = vmatprep.subr.mxu0 0.0
    %837 = vmatpush1.msra.mxu0 0.0
    %838 = vmatprep.subr.mxu0 0.0
    %839 = vmatpush1.msra.mxu0 0.0
    %840 = vmatprep.subr.mxu0 0.0
    %841 = vmatpush1.msra.mxu0 0.0
    %842 = vmatprep.subr.mxu0 0.0
    %843 = vmatpush1.msra.mxu0 0.0
    %844 = vmatprep.subr.mxu0 0.0
    %845 = vmatpush1.msra.mxu0 0.0
    %846 = vmatprep.subr.mxu0 0.0
    %847 = vmatpush1.msra.mxu0 0.0
    %848 = vmatprep.mubr.f32.mxu0 0.0
    %849 = vmatmul.mubr.f32.gmra.mrb[0].mxu0 %v782
    %v850 = vpop.f32.mrb[0].mxu0
    %v851 = vadd.f32 0.0, %v850
    %v852 = vpop.f32.mrb[0].mxu0
    %853 = vdwg.mxu0
    %v855 = vsel %vm71, %v778, 0
    %857 = vmatprep.subr.mxu0 0.0
    %858 = vmatpush1.msra.mxu0 %v60
    %859 = vmatprep.subr.mxu0 0.0
    %860 = vmatpush1.msra.mxu0 %v61
    %861 = vmatprep.subr.mxu0 0.0
    %862 = vmatpush1.msra.mxu0 %v62
    %863 = vmatprep.subr.mxu0 0.0
    %864 = vmatpush1.msra.mxu0 %v63
    %865 = vmatprep.subr.mxu0 0.0
    %866 = vmatpush1.msra.mxu0 0.0
    %867 = vmatprep.subr.mxu0 0.0
    %868 = vmatpush1.msra.mxu0 0.0
    %869 = vmatprep.subr.mxu0 0.0
    %870 = vmatpush1.msra.mxu0 0.0
    %871 = vmatprep.subr.mxu0 0.0
    %872 = vmatpush1.msra.mxu0 0.0
    %873 = vmatprep.subr.mxu0 0.0
    %874 = vmatpush1.msra.mxu0 0.0
    %875 = vmatprep.subr.mxu0 0.0
    %876 = vmatpush1.msra.mxu0 0.0
    %877 = vmatprep.subr.mxu0 0.0
    %878 = vmatpush1.msra.mxu0 0.0
    %879 = vmatprep.subr.mxu0 0.0
    %880 = vmatpush1.msra.mxu0 0.0
    %881 = vmatprep.subr.mxu0 0.0
    %882 = vmatpush1.msra.mxu0 0.0
    %883 = vmatprep.subr.mxu0 0.0
    %884 = vmatpush1.msra.mxu0 0.0
    %885 = vmatprep.subr.mxu0 0.0
    %886 = vmatpush1.msra.mxu0 0.0
    %887 = vmatprep.subr.mxu0 0.0
    %888 = vmatpush1.msra.mxu0 0.0
    %889 = vmatprep.subr.mxu0 0.0
    %890 = vmatpush1.msra.mxu0 0.0
    %891 = vmatprep.subr.mxu0 0.0
    %892 = vmatpush1.msra.mxu0 0.0
    %893 = vmatprep.subr.mxu0 0.0
    %894 = vmatpush1.msra.mxu0 0.0
    %895 = vmatprep.subr.mxu0 0.0
    %896 = vmatpush1.msra.mxu0 0.0
    %897 = vmatprep.subr.mxu0 0.0
    %898 = vmatpush1.msra.mxu0 0.0
    %899 = vmatprep.subr.mxu0 0.0
    %900 = vmatpush1.msra.mxu0 0.0
    %901 = vmatprep.subr.mxu0 0.0
    %902 = vmatpush1.msra.mxu0 0.0
    %903 = vmatprep.subr.mxu0 0.0
    %904 = vmatpush1.msra.mxu0 0.0
    %905 = vmatprep.subr.mxu0 0.0
    %906 = vmatpush1.msra.mxu0 0.0
    %907 = vmatprep.subr.mxu0 0.0
    %908 = vmatpush1.msra.mxu0 0.0
    %909 = vmatprep.subr.mxu0 0.0
    %910 = vmatpush1.msra.mxu0 0.0
    %911 = vmatprep.subr.mxu0 0.0
    %912 = vmatpush1.msra.mxu0 0.0
    %913 = vmatprep.subr.mxu0 0.0
    %914 = vmatpush1.msra.mxu0 0.0
    %915 = vmatprep.subr.mxu0 0.0
    %916 = vmatpush1.msra.mxu0 0.0
    %917 = vmatprep.subr.mxu0 0.0
    %918 = vmatpush1.msra.mxu0 0.0
    %919 = vmatprep.subr.mxu0 0.0
    %920 = vmatpush1.msra.mxu0 0.0
    %921 = vmatprep.mubr.f32.mxu0 0.0
    %922 = vmatmul.mubr.f32.gmra.mrb[0].mxu0 %v855
    %v923 = vpop.f32.mrb[0].mxu0
    %v924 = vadd.f32 %v851, %v923
    %v925 = vpop.f32.mrb[0].mxu0
    %926 = vdwg.mxu0
    %v927 = vadd.f32 %v924, %v222
    %v928 = vxor.u32 %v927, 2147483648
    %v929 = vmul.f32 %v928, 1.442695
    %v930 = vpow.pop %v929
    %v931 = vadd.f32 %v930, 1.0
    %v932 = vrcp.pop %v931
    %v933 = vmul.f32 1.0, %v932
    %v934 = vtanh.pop %v927
    %v935 = vmul.f32 %v933, %v770
    %937 = vrot.lane.b32.xlu0 %v934, 64
    %v938 = vpop.permute.xlu0 %937
    %v940 = vmul.f32 %v933, %v938
    %942 = vrot.lane.b32.xlu0 %v940, 32
    %v943 = vpop.permute.xlu0 %942
    %v945 = vadd.f32 %v935, %v943
    %v946 = vtanh.pop %v945
    %948 = vrot.lane.b32.xlu0 %v946, 64
    %v949 = vpop.permute.xlu0 %948
    %v951 = vmul.f32 %v933, %v949
    %s952 = scalar_lea.vmem %s0, 10
    %v953 = vld [vmem:[%s952] sm:$0x3]
    %955 = vrot.lane.b32.xlu0 %v951, 32
    %v956 = vpop.permute.xlu0 %955
    %v957 = vsel %vm71, %v956, 0
    %959 = vmatprep.subr.mxu0 0.0
    %960 = vmatpush1.msra.mxu0 %v64
    %961 = vmatprep.subr.mxu0 0.0
    %962 = vmatpush1.msra.mxu0 %v65
    %963 = vmatprep.subr.mxu0 0.0
    %964 = vmatpush1.msra.mxu0 %v66
    %965 = vmatprep.subr.mxu0 0.0
    %966 = vmatpush1.msra.mxu0 %v67
    %967 = vmatprep.subr.mxu0 0.0
    %968 = vmatpush1.msra.mxu0 0.0
    %969 = vmatprep.subr.mxu0 0.0
    %970 = vmatpush1.msra.mxu0 0.0
    %971 = vmatprep.subr.mxu0 0.0
    %972 = vmatpush1.msra.mxu0 0.0
    %973 = vmatprep.subr.mxu0 0.0
    %974 = vmatpush1.msra.mxu0 0.0
    %975 = vmatprep.subr.mxu0 0.0
    %976 = vmatpush1.msra.mxu0 0.0
    %977 = vmatprep.subr.mxu0 0.0
    %978 = vmatpush1.msra.mxu0 0.0
    %979 = vmatprep.subr.mxu0 0.0
    %980 = vmatpush1.msra.mxu0 0.0
    %981 = vmatprep.subr.mxu0 0.0
    %982 = vmatpush1.msra.mxu0 0.0
    %983 = vmatprep.subr.mxu0 0.0
    %984 = vmatpush1.msra.mxu0 0.0
    %985 = vmatprep.subr.mxu0 0.0
    %986 = vmatpush1.msra.mxu0 0.0
    %987 = vmatprep.subr.mxu0 0.0
    %988 = vmatpush1.msra.mxu0 0.0
    %989 = vmatprep.subr.mxu0 0.0
    %990 = vmatpush1.msra.mxu0 0.0
    %991 = vmatprep.subr.mxu0 0.0
    %992 = vmatpush1.msra.mxu0 0.0
    %993 = vmatprep.subr.mxu0 0.0
    %994 = vmatpush1.msra.mxu0 0.0
    %995 = vmatprep.subr.mxu0 0.0
    %996 = vmatpush1.msra.mxu0 0.0
    %997 = vmatprep.subr.mxu0 0.0
    %998 = vmatpush1.msra.mxu0 0.0
    %999 = vmatprep.subr.mxu0 0.0
    %1000 = vmatpush1.msra.mxu0 0.0
    %1001 = vmatprep.subr.mxu0 0.0
    %1002 = vmatpush1.msra.mxu0 0.0
    %1003 = vmatprep.subr.mxu0 0.0
    %1004 = vmatpush1.msra.mxu0 0.0
    %1005 = vmatprep.subr.mxu0 0.0
    %1006 = vmatpush1.msra.mxu0 0.0
    %1007 = vmatprep.subr.mxu0 0.0
    %1008 = vmatpush1.msra.mxu0 0.0
    %1009 = vmatprep.subr.mxu0 0.0
    %1010 = vmatpush1.msra.mxu0 0.0
    %1011 = vmatprep.subr.mxu0 0.0
    %1012 = vmatpush1.msra.mxu0 0.0
    %1013 = vmatprep.subr.mxu0 0.0
    %1014 = vmatpush1.msra.mxu0 0.0
    %1015 = vmatprep.subr.mxu0 0.0
    %1016 = vmatpush1.msra.mxu0 0.0
    %1017 = vmatprep.subr.mxu0 0.0
    %1018 = vmatpush1.msra.mxu0 0.0
    %1019 = vmatprep.subr.mxu0 0.0
    %1020 = vmatpush1.msra.mxu0 0.0
    %1021 = vmatprep.subr.mxu0 0.0
    %1022 = vmatpush1.msra.mxu0 0.0
    %1023 = vmatprep.mubr.f32.mxu0 0.0
    %1024 = vmatmul.mubr.f32.gmra.mrb[0].mxu0 %v957
    %v1025 = vpop.f32.mrb[0].mxu0
    %v1026 = vadd.f32 0.0, %v1025
    %v1027 = vpop.f32.mrb[0].mxu0
    %1028 = vdwg.mxu0
    %v1030 = vsel %vm71, %v953, 0
    %1032 = vmatprep.subr.mxu0 0.0
    %1033 = vmatpush1.msra.mxu0 %v60
    %1034 = vmatprep.subr.mxu0 0.0
    %1035 = vmatpush1.msra.mxu0 %v61
    %1036 = vmatprep.subr.mxu0 0.0
    %1037 = vmatpush1.msra.mxu0 %v62
    %1038 = vmatprep.subr.mxu0 0.0
    %1039 = vmatpush1.msra.mxu0 %v63
    %1040 = vmatprep.subr.mxu0 0.0
    %1041 = vmatpush1.msra.mxu0 0.0
    %1042 = vmatprep.subr.mxu0 0.0
    %1043 = vmatpush1.msra.mxu0 0.0
    %1044 = vmatprep.subr.mxu0 0.0
    %1045 = vmatpush1.msra.mxu0 0.0
    %1046 = vmatprep.subr.mxu0 0.0
    %1047 = vmatpush1.msra.mxu0 0.0
    %1048 = vmatprep.subr.mxu0 0.0
    %1049 = vmatpush1.msra.mxu0 0.0
    %1050 = vmatprep.subr.mxu0 0.0
    %1051 = vmatpush1.msra.mxu0 0.0
    %1052 = vmatprep.subr.mxu0 0.0
    %1053 = vmatpush1.msra.mxu0 0.0
    %1054 = vmatprep.subr.mxu0 0.0
    %1055 = vmatpush1.msra.mxu0 0.0
    %1056 = vmatprep.subr.mxu0 0.0
    %1057 = vmatpush1.msra.mxu0 0.0
    %1058 = vmatprep.subr.mxu0 0.0
    %1059 = vmatpush1.msra.mxu0 0.0
    %1060 = vmatprep.subr.mxu0 0.0
    %1061 = vmatpush1.msra.mxu0 0.0
    %1062 = vmatprep.subr.mxu0 0.0
    %1063 = vmatpush1.msra.mxu0 0.0
    %1064 = vmatprep.subr.mxu0 0.0
    %1065 = vmatpush1.msra.mxu0 0.0
    %1066 = vmatprep.subr.mxu0 0.0
    %1067 = vmatpush1.msra.mxu0 0.0
    %1068 = vmatprep.subr.mxu0 0.0
    %1069 = vmatpush1.msra.mxu0 0.0
    %1070 = vmatprep.subr.mxu0 0.0
    %1071 = vmatpush1.msra.mxu0 0.0
    %1072 = vmatprep.subr.mxu0 0.0
    %1073 = vmatpush1.msra.mxu0 0.0
    %1074 = vmatprep.subr.mxu0 0.0
    %1075 = vmatpush1.msra.mxu0 0.0
    %1076 = vmatprep.subr.mxu0 0.0
    %1077 = vmatpush1.msra.mxu0 0.0
    %1078 = vmatprep.subr.mxu0 0.0
    %1079 = vmatpush1.msra.mxu0 0.0
    %1080 = vmatprep.subr.mxu0 0.0
    %1081 = vmatpush1.msra.mxu0 0.0
    %1082 = vmatprep.subr.mxu0 0.0
    %1083 = vmatpush1.msra.mxu0 0.0
    %1084 = vmatprep.subr.mxu0 0.0
    %1085 = vmatpush1.msra.mxu0 0.0
    %1086 = vmatprep.subr.mxu0 0.0
    %1087 = vmatpush1.msra.mxu0 0.0
    %1088 = vmatprep.subr.mxu0 0.0
    %1089 = vmatpush1.msra.mxu0 0.0
    %1090 = vmatprep.subr.mxu0 0.0
    %1091 = vmatpush1.msra.mxu0 0.0
    %1092 = vmatprep.subr.mxu0 0.0
    %1093 = vmatpush1.msra.mxu0 0.0
    %1094 = vmatprep.subr.mxu0 0.0
    %1095 = vmatpush1.msra.mxu0 0.0
    %1096 = vmatprep.mubr.f32.mxu0 0.0
    %1097 = vmatmul.mubr.f32.gmra.mrb[0].mxu0 %v1030
    %v1098 = vpop.f32.mrb[0].mxu0
    %v1099 = vadd.f32 %v1026, %v1098
    %v1100 = vpop.f32.mrb[0].mxu0
    %1101 = vdwg.mxu0
    %v1102 = vadd.f32 %v1099, %v222
    %v1103 = vxor.u32 %v1102, 2147483648
    %v1104 = vmul.f32 %v1103, 1.442695
    %v1105 = vpow.pop %v1104
    %v1106 = vadd.f32 %v1105, 1.0
    %v1107 = vrcp.pop %v1106
    %v1108 = vmul.f32 1.0, %v1107
    %v1109 = vtanh.pop %v1102
    %v1110 = vmul.f32 %v1108, %v945
    %1112 = vrot.lane.b32.xlu0 %v1109, 64
    %v1113 = vpop.permute.xlu0 %1112
    %v1115 = vmul.f32 %v1108, %v1113
    %1117 = vrot.lane.b32.xlu0 %v1115, 32
    %v1118 = vpop.permute.xlu0 %1117
    %v1120 = vadd.f32 %v1110, %v1118
    %v1121 = vtanh.pop %v1120
    %1123 = vrot.lane.b32.xlu0 %v1121, 64
    %v1124 = vpop.permute.xlu0 %1123
    %v1126 = vmul.f32 %v1108, %v1124
    %s1127 = scalar_lea.vmem %s0, 12
    %v1128 = vld [vmem:[%s1127] sm:$0x3]
    %1130 = vrot.lane.b32.xlu0 %v1126, 32
    %v1131 = vpop.permute.xlu0 %1130
    %v1132 = vsel %vm71, %v1131, 0
    %1134 = vmatprep.subr.mxu0 0.0
    %1135 = vmatpush1.msra.mxu0 %v64
    %1136 = vmatprep.subr.mxu0 0.0
    %1137 = vmatpush1.msra.mxu0 %v65
    %1138 = vmatprep.subr.mxu0 0.0
    %1139 = vmatpush1.msra.mxu0 %v66
    %1140 = vmatprep.subr.mxu0 0.0
    %1141 = vmatpush1.msra.mxu0 %v67
    %1142 = vmatprep.subr.mxu0 0.0
    %1143 = vmatpush1.msra.mxu0 0.0
    %1144 = vmatprep.subr.mxu0 0.0
    %1145 = vmatpush1.msra.mxu0 0.0
    %1146 = vmatprep.subr.mxu0 0.0
    %1147 = vmatpush1.msra.mxu0 0.0
    %1148 = vmatprep.subr.mxu0 0.0
    %1149 = vmatpush1.msra.mxu0 0.0
    %1150 = vmatprep.subr.mxu0 0.0
    %1151 = vmatpush1.msra.mxu0 0.0
    %1152 = vmatprep.subr.mxu0 0.0
    %1153 = vmatpush1.msra.mxu0 0.0
    %1154 = vmatprep.subr.mxu0 0.0
    %1155 = vmatpush1.msra.mxu0 0.0
    %1156 = vmatprep.subr.mxu0 0.0
    %1157 = vmatpush1.msra.mxu0 0.0
    %1158 = vmatprep.subr.mxu0 0.0
    %1159 = vmatpush1.msra.mxu0 0.0
    %1160 = vmatprep.subr.mxu0 0.0
    %1161 = vmatpush1.msra.mxu0 0.0
    %1162 = vmatprep.subr.mxu0 0.0
    %1163 = vmatpush1.msra.mxu0 0.0
    %1164 = vmatprep.subr.mxu0 0.0
    %1165 = vmatpush1.msra.mxu0 0.0
    %1166 = vmatprep.subr.mxu0 0.0
    %1167 = vmatpush1.msra.mxu0 0.0
    %1168 = vmatprep.subr.mxu0 0.0
    %1169 = vmatpush1.msra.mxu0 0.0
    %1170 = vmatprep.subr.mxu0 0.0
    %1171 = vmatpush1.msra.mxu0 0.0
    %1172 = vmatprep.subr.mxu0 0.0
    %1173 = vmatpush1.msra.mxu0 0.0
    %1174 = vmatprep.subr.mxu0 0.0
    %1175 = vmatpush1.msra.mxu0 0.0
    %1176 = vmatprep.subr.mxu0 0.0
    %1177 = vmatpush1.msra.mxu0 0.0
    %1178 = vmatprep.subr.mxu0 0.0
    %1179 = vmatpush1.msra.mxu0 0.0
    %1180 = vmatprep.subr.mxu0 0.0
    %1181 = vmatpush1.msra.mxu0 0.0
    %1182 = vmatprep.subr.mxu0 0.0
    %1183 = vmatpush1.msra.mxu0 0.0
    %1184 = vmatprep.subr.mxu0 0.0
    %1185 = vmatpush1.msra.mxu0 0.0
    %1186 = vmatprep.subr.mxu0 0.0
    %1187 = vmatpush1.msra.mxu0 0.0
    %1188 = vmatprep.subr.mxu0 0.0
    %1189 = vmatpush1.msra.mxu0 0.0
    %1190 = vmatprep.subr.mxu0 0.0
    %1191 = vmatpush1.msra.mxu0 0.0
    %1192 = vmatprep.subr.mxu0 0.0
    %1193 = vmatpush1.msra.mxu0 0.0
    %1194 = vmatprep.subr.mxu0 0.0
    %1195 = vmatpush1.msra.mxu0 0.0
    %1196 = vmatprep.subr.mxu0 0.0
    %1197 = vmatpush1.msra.mxu0 0.0
    %1198 = vmatprep.mubr.f32.mxu0 0.0
    %1199 = vmatmul.mubr.f32.gmra.mrb[0].mxu0 %v1132
    %v1200 = vpop.f32.mrb[0].mxu0
    %v1201 = vadd.f32 0.0, %v1200
    %v1202 = vpop.f32.mrb[0].mxu0
    %1203 = vdwg.mxu0
    %v1205 = vsel %vm71, %v1128, 0
    %1207 = vmatprep.subr.mxu0 0.0
    %1208 = vmatpush1.msra.mxu0 %v60
    %1209 = vmatprep.subr.mxu0 0.0
    %1210 = vmatpush1.msra.mxu0 %v61
    %1211 = vmatprep.subr.mxu0 0.0
    %1212 = vmatpush1.msra.mxu0 %v62
    %1213 = vmatprep.subr.mxu0 0.0
    %1214 = vmatpush1.msra.mxu0 %v63
    %1215 = vmatprep.subr.mxu0 0.0
    %1216 = vmatpush1.msra.mxu0 0.0
    %1217 = vmatprep.subr.mxu0 0.0
    %1218 = vmatpush1.msra.mxu0 0.0
    %1219 = vmatprep.subr.mxu0 0.0
    %1220 = vmatpush1.msra.mxu0 0.0
    %1221 = vmatprep.subr.mxu0 0.0
    %1222 = vmatpush1.msra.mxu0 0.0
    %1223 = vmatprep.subr.mxu0 0.0
    %1224 = vmatpush1.msra.mxu0 0.0
    %1225 = vmatprep.subr.mxu0 0.0
    %1226 = vmatpush1.msra.mxu0 0.0
    %1227 = vmatprep.subr.mxu0 0.0
    %1228 = vmatpush1.msra.mxu0 0.0
    %1229 = vmatprep.subr.mxu0 0.0
    %1230 = vmatpush1.msra.mxu0 0.0
    %1231 = vmatprep.subr.mxu0 0.0
    %1232 = vmatpush1.msra.mxu0 0.0
    %1233 = vmatprep.subr.mxu0 0.0
    %1234 = vmatpush1.msra.mxu0 0.0
    %1235 = vmatprep.subr.mxu0 0.0
    %1236 = vmatpush1.msra.mxu0 0.0
    %1237 = vmatprep.subr.mxu0 0.0
    %1238 = vmatpush1.msra.mxu0 0.0
    %1239 = vmatprep.subr.mxu0 0.0
    %1240 = vmatpush1.msra.mxu0 0.0
    %1241 = vmatprep.subr.mxu0 0.0
    %1242 = vmatpush1.msra.mxu0 0.0
    %1243 = vmatprep.subr.mxu0 0.0
    %1244 = vmatpush1.msra.mxu0 0.0
    %1245 = vmatprep.subr.mxu0 0.0
    %1246 = vmatpush1.msra.mxu0 0.0
    %1247 = vmatprep.subr.mxu0 0.0
    %1248 = vmatpush1.msra.mxu0 0.0
    %1249 = vmatprep.subr.mxu0 0.0
    %1250 = vmatpush1.msra.mxu0 0.0
    %1251 = vmatprep.subr.mxu0 0.0
    %1252 = vmatpush1.msra.mxu0 0.0
    %1253 = vmatprep.subr.mxu0 0.0
    %1254 = vmatpush1.msra.mxu0 0.0
    %1255 = vmatprep.subr.mxu0 0.0
    %1256 = vmatpush1.msra.mxu0 0.0
    %1257 = vmatprep.subr.mxu0 0.0
    %1258 = vmatpush1.msra.mxu0 0.0
    %1259 = vmatprep.subr.mxu0 0.0
    %1260 = vmatpush1.msra.mxu0 0.0
    %1261 = vmatprep.subr.mxu0 0.0
    %1262 = vmatpush1.msra.mxu0 0.0
    %1263 = vmatprep.subr.mxu0 0.0
    %1264 = vmatpush1.msra.mxu0 0.0
    %1265 = vmatprep.subr.mxu0 0.0
    %1266 = vmatpush1.msra.mxu0 0.0
    %1267 = vmatprep.subr.mxu0 0.0
    %1268 = vmatpush1.msra.mxu0 0.0
    %1269 = vmatprep.subr.mxu0 0.0
    %1270 = vmatpush1.msra.mxu0 0.0
    %1271 = vmatprep.mubr.f32.mxu0 0.0
    %1272 = vmatmul.mubr.f32.gmra.mrb[0].mxu0 %v1205
    %v1273 = vpop.f32.mrb[0].mxu0
    %v1274 = vadd.f32 %v1201, %v1273
    %v1275 = vpop.f32.mrb[0].mxu0
    %1276 = vdwg.mxu0
    %v1277 = vadd.f32 %v1274, %v222
    %v1278 = vxor.u32 %v1277, 2147483648
    %v1279 = vmul.f32 %v1278, 1.442695
    %v1280 = vpow.pop %v1279
    %v1281 = vadd.f32 %v1280, 1.0
    %v1282 = vrcp.pop %v1281
    %v1283 = vmul.f32 1.0, %v1282
    %v1284 = vtanh.pop %v1277
    %v1285 = vmul.f32 %v1283, %v1120
    %1287 = vrot.lane.b32.xlu0 %v1284, 64
    %v1288 = vpop.permute.xlu0 %1287
    %v1290 = vmul.f32 %v1283, %v1288
    %1292 = vrot.lane.b32.xlu0 %v1290, 32
    %v1293 = vpop.permute.xlu0 %1292
    %v1295 = vadd.f32 %v1285, %v1293
    %v1296 = vtanh.pop %v1295
    %1298 = vrot.lane.b32.xlu0 %v1296, 64
    %v1299 = vpop.permute.xlu0 %1298
    %v1301 = vmul.f32 %v1283, %v1299
    %s1302 = scalar_lea.vmem %s0, 14
    %v1303 = vld [vmem:[%s1302] sm:$0x3]
    %1305 = vrot.lane.b32.xlu0 %v1301, 32
    %v1306 = vpop.permute.xlu0 %1305
    %v1307 = vsel %vm71, %v1306, 0
    %1309 = vmatprep.subr.mxu0 0.0
    %1310 = vmatpush1.msra.mxu0 %v64
    %1311 = vmatprep.subr.mxu0 0.0
    %1312 = vmatpush1.msra.mxu0 %v65
    %1313 = vmatprep.subr.mxu0 0.0
    %1314 = vmatpush1.msra.mxu0 %v66
    %1315 = vmatprep.subr.mxu0 0.0
    %1316 = vmatpush1.msra.mxu0 %v67
    %1317 = vmatprep.subr.mxu0 0.0
    %1318 = vmatpush1.msra.mxu0 0.0
    %1319 = vmatprep.subr.mxu0 0.0
    %1320 = vmatpush1.msra.mxu0 0.0
    %1321 = vmatprep.subr.mxu0 0.0
    %1322 = vmatpush1.msra.mxu0 0.0
    %1323 = vmatprep.subr.mxu0 0.0
    %1324 = vmatpush1.msra.mxu0 0.0
    %1325 = vmatprep.subr.mxu0 0.0
    %1326 = vmatpush1.msra.mxu0 0.0
    %1327 = vmatprep.subr.mxu0 0.0
    %1328 = vmatpush1.msra.mxu0 0.0
    %1329 = vmatprep.subr.mxu0 0.0
    %1330 = vmatpush1.msra.mxu0 0.0
    %1331 = vmatprep.subr.mxu0 0.0
    %1332 = vmatpush1.msra.mxu0 0.0
    %1333 = vmatprep.subr.mxu0 0.0
    %1334 = vmatpush1.msra.mxu0 0.0
    %1335 = vmatprep.subr.mxu0 0.0
    %1336 = vmatpush1.msra.mxu0 0.0
    %1337 = vmatprep.subr.mxu0 0.0
    %1338 = vmatpush1.msra.mxu0 0.0
    %1339 = vmatprep.subr.mxu0 0.0
    %1340 = vmatpush1.msra.mxu0 0.0
    %1341 = vmatprep.subr.mxu0 0.0
    %1342 = vmatpush1.msra.mxu0 0.0
    %1343 = vmatprep.subr.mxu0 0.0
    %1344 = vmatpush1.msra.mxu0 0.0
    %1345 = vmatprep.subr.mxu0 0.0
    %1346 = vmatpush1.msra.mxu0 0.0
    %1347 = vmatprep.subr.mxu0 0.0
    %1348 = vmatpush1.msra.mxu0 0.0
    %1349 = vmatprep.subr.mxu0 0.0
    %1350 = vmatpush1.msra.mxu0 0.0
    %1351 = vmatprep.subr.mxu0 0.0
    %1352 = vmatpush1.msra.mxu0 0.0
    %1353 = vmatprep.subr.mxu0 0.0
    %1354 = vmatpush1.msra.mxu0 0.0
    %1355 = vmatprep.subr.mxu0 0.0
    %1356 = vmatpush1.msra.mxu0 0.0
    %1357 = vmatprep.subr.mxu0 0.0
    %1358 = vmatpush1.msra.mxu0 0.0
    %1359 = vmatprep.subr.mxu0 0.0
    %1360 = vmatpush1.msra.mxu0 0.0
    %1361 = vmatprep.subr.mxu0 0.0
    %1362 = vmatpush1.msra.mxu0 0.0
    %1363 = vmatprep.subr.mxu0 0.0
    %1364 = vmatpush1.msra.mxu0 0.0
    %1365 = vmatprep.subr.mxu0 0.0
    %1366 = vmatpush1.msra.mxu0 0.0
    %1367 = vmatprep.subr.mxu0 0.0
    %1368 = vmatpush1.msra.mxu0 0.0
    %1369 = vmatprep.subr.mxu0 0.0
    %1370 = vmatpush1.msra.mxu0 0.0
    %1371 = vmatprep.subr.mxu0 0.0
    %1372 = vmatpush1.msra.mxu0 0.0
    %1373 = vmatprep.mubr.f32.mxu0 0.0
    %1374 = vmatmul.mubr.f32.gmra.mrb[0].mxu0 %v1307
    %v1375 = vpop.f32.mrb[0].mxu0
    %v1376 = vadd.f32 0.0, %v1375
    %v1377 = vpop.f32.mrb[0].mxu0
    %1378 = vdwg.mxu0
    %v1380 = vsel %vm71, %v1303, 0
    %1382 = vmatprep.subr.mxu0 0.0
    %1383 = vmatpush1.msra.mxu0 %v60
    %1384 = vmatprep.subr.mxu0 0.0
    %1385 = vmatpush1.msra.mxu0 %v61
    %1386 = vmatprep.subr.mxu0 0.0
    %1387 = vmatpush1.msra.mxu0 %v62
    %1388 = vmatprep.subr.mxu0 0.0
    %1389 = vmatpush1.msra.mxu0 %v63
    %1390 = vmatprep.subr.mxu0 0.0
    %1391 = vmatpush1.msra.mxu0 0.0
    %1392 = vmatprep.subr.mxu0 0.0
    %1393 = vmatpush1.msra.mxu0 0.0
    %1394 = vmatprep.subr.mxu0 0.0
    %1395 = vmatpush1.msra.mxu0 0.0
    %1396 = vmatprep.subr.mxu0 0.0
    %1397 = vmatpush1.msra.mxu0 0.0
    %1398 = vmatprep.subr.mxu0 0.0
    %1399 = vmatpush1.msra.mxu0 0.0
    %1400 = vmatprep.subr.mxu0 0.0
    %1401 = vmatpush1.msra.mxu0 0.0
    %1402 = vmatprep.subr.mxu0 0.0
    %1403 = vmatpush1.msra.mxu0 0.0
    %1404 = vmatprep.subr.mxu0 0.0
    %1405 = vmatpush1.msra.mxu0 0.0
    %1406 = vmatprep.subr.mxu0 0.0
    %1407 = vmatpush1.msra.mxu0 0.0
    %1408 = vmatprep.subr.mxu0 0.0
    %1409 = vmatpush1.msra.mxu0 0.0
    %1410 = vmatprep.subr.mxu0 0.0
    %1411 = vmatpush1.msra.mxu0 0.0
    %1412 = vmatprep.subr.mxu0 0.0
    %1413 = vmatpush1.msra.mxu0 0.0
    %1414 = vmatprep.subr.mxu0 0.0
    %1415 = vmatpush1.msra.mxu0 0.0
    %1416 = vmatprep.subr.mxu0 0.0
    %1417 = vmatpush1.msra.mxu0 0.0
    %1418 = vmatprep.subr.mxu0 0.0
    %1419 = vmatpush1.msra.mxu0 0.0
    %1420 = vmatprep.subr.mxu0 0.0
    %1421 = vmatpush1.msra.mxu0 0.0
    %1422 = vmatprep.subr.mxu0 0.0
    %1423 = vmatpush1.msra.mxu0 0.0
    %1424 = vmatprep.subr.mxu0 0.0
    %1425 = vmatpush1.msra.mxu0 0.0
    %1426 = vmatprep.subr.mxu0 0.0
    %1427 = vmatpush1.msra.mxu0 0.0
    %1428 = vmatprep.subr.mxu0 0.0
    %1429 = vmatpush1.msra.mxu0 0.0
    %1430 = vmatprep.subr.mxu0 0.0
    %1431 = vmatpush1.msra.mxu0 0.0
    %1432 = vmatprep.subr.mxu0 0.0
    %1433 = vmatpush1.msra.mxu0 0.0
    %1434 = vmatprep.subr.mxu0 0.0
    %1435 = vmatpush1.msra.mxu0 0.0
    %1436 = vmatprep.subr.mxu0 0.0
    %1437 = vmatpush1.msra.mxu0 0.0
    %1438 = vmatprep.subr.mxu0 0.0
    %1439 = vmatpush1.msra.mxu0 0.0
    %1440 = vmatprep.subr.mxu0 0.0
    %1441 = vmatpush1.msra.mxu0 0.0
    %1442 = vmatprep.subr.mxu0 0.0
    %1443 = vmatpush1.msra.mxu0 0.0
    %1444 = vmatprep.subr.mxu0 0.0
    %1445 = vmatpush1.msra.mxu0 0.0
    %1446 = vmatprep.mubr.f32.mxu0 0.0
    %1447 = vmatmul.mubr.f32.gmra.mrb[0].mxu0 %v1380
    %v1448 = vpop.f32.mrb[0].mxu0
    %v1449 = vadd.f32 %v1376, %v1448
    %v1450 = vpop.f32.mrb[0].mxu0
    %1451 = vdwg.mxu0
    %v1452 = vadd.f32 %v1449, %v222
    %v1453 = vxor.u32 %v1452, 2147483648
    %v1454 = vmul.f32 %v1453, 1.442695
    %v1455 = vpow.pop %v1454
    %v1456 = vadd.f32 %v1455, 1.0
    %v1457 = vrcp.pop %v1456
    %v1458 = vmul.f32 1.0, %v1457
    %v1459 = vtanh.pop %v1452
    %v1460 = vmul.f32 %v1458, %v1295
    %1462 = vrot.lane.b32.xlu0 %v1459, 64
    %v1463 = vpop.permute.xlu0 %1462
    %v1465 = vmul.f32 %v1458, %v1463
    %1467 = vrot.lane.b32.xlu0 %v1465, 32
    %v1468 = vpop.permute.xlu0 %1467
    %v1470 = vadd.f32 %v1460, %v1468
    %v1471 = vtanh.pop %v1470
    %1473 = vrot.lane.b32.xlu0 %v1471, 64
    %v1474 = vpop.permute.xlu0 %1473
    %v1476 = vmul.f32 %v1458, %v1474
    %v1477 = vld [vmem:[%s11] sm:$0xff]
    %v1478 = vld [vmem:[%s11 + $0x8] sm:$0xff]
    %v1479 = vld [vmem:[%s11 + $0x10] sm:$0xff]
    %v1480 = vld [vmem:[%s11 + $0x18] sm:$0xff]
    %v1481 = vld [vmem:[%s11 + $0x20] sm:$0xff]
    %v1482 = vld [vmem:[%s11 + $0x28] sm:$0xff]
    %v1483 = vld [vmem:[%s11 + $0x30] sm:$0xff]
    %v1484 = vld [vmem:[%s11 + $0x38] sm:$0xff]
    %1486 = vrot.lane.b32.xlu0 %v1470, 96
    %v1487 = vpop.permute.xlu0 %1486
    %v1488 = vsel %vm71, %v1487, 0
    %1490 = vmatprep.subr.mxu0 0.0
    %1491 = vmatpush1.msra.mxu0 %v1481
    %1492 = vmatprep.subr.mxu0 0.0
    %1493 = vmatpush1.msra.mxu0 %v1482
    %1494 = vmatprep.subr.mxu0 0.0
    %1495 = vmatpush1.msra.mxu0 %v1483
    %1496 = vmatprep.subr.mxu0 0.0
    %1497 = vmatpush1.msra.mxu0 %v1484
    %1498 = vmatprep.subr.mxu0 0.0
    %1499 = vmatpush1.msra.mxu0 0.0
    %1500 = vmatprep.subr.mxu0 0.0
    %1501 = vmatpush1.msra.mxu0 0.0
    %1502 = vmatprep.subr.mxu0 0.0
    %1503 = vmatpush1.msra.mxu0 0.0
    %1504 = vmatprep.subr.mxu0 0.0
    %1505 = vmatpush1.msra.mxu0 0.0
    %1506 = vmatprep.subr.mxu0 0.0
    %1507 = vmatpush1.msra.mxu0 0.0
    %1508 = vmatprep.subr.mxu0 0.0
    %1509 = vmatpush1.msra.mxu0 0.0
    %1510 = vmatprep.subr.mxu0 0.0
    %1511 = vmatpush1.msra.mxu0 0.0
    %1512 = vmatprep.subr.mxu0 0.0
    %1513 = vmatpush1.msra.mxu0 0.0
    %1514 = vmatprep.subr.mxu0 0.0
    %1515 = vmatpush1.msra.mxu0 0.0
    %1516 = vmatprep.subr.mxu0 0.0
    %1517 = vmatpush1.msra.mxu0 0.0
    %1518 = vmatprep.subr.mxu0 0.0
    %1519 = vmatpush1.msra.mxu0 0.0
    %1520 = vmatprep.subr.mxu0 0.0
    %1521 = vmatpush1.msra.mxu0 0.0
    %1522 = vmatprep.subr.mxu0 0.0
    %1523 = vmatpush1.msra.mxu0 0.0
    %1524 = vmatprep.subr.mxu0 0.0
    %1525 = vmatpush1.msra.mxu0 0.0
    %1526 = vmatprep.subr.mxu0 0.0
    %1527 = vmatpush1.msra.mxu0 0.0
    %1528 = vmatprep.subr.mxu0 0.0
    %1529 = vmatpush1.msra.mxu0 0.0
    %1530 = vmatprep.subr.mxu0 0.0
    %1531 = vmatpush1.msra.mxu0 0.0
    %1532 = vmatprep.subr.mxu0 0.0
    %1533 = vmatpush1.msra.mxu0 0.0
    %1534 = vmatprep.subr.mxu0 0.0
    %1535 = vmatpush1.msra.mxu0 0.0
    %1536 = vmatprep.subr.mxu0 0.0
    %1537 = vmatpush1.msra.mxu0 0.0
    %1538 = vmatprep.subr.mxu0 0.0
    %1539 = vmatpush1.msra.mxu0 0.0
    %1540 = vmatprep.subr.mxu0 0.0
    %1541 = vmatpush1.msra.mxu0 0.0
    %1542 = vmatprep.subr.mxu0 0.0
    %1543 = vmatpush1.msra.mxu0 0.0
    %1544 = vmatprep.subr.mxu0 0.0
    %1545 = vmatpush1.msra.mxu0 0.0
    %1546 = vmatprep.subr.mxu0 0.0
    %1547 = vmatpush1.msra.mxu0 0.0
    %1548 = vmatprep.subr.mxu0 0.0
    %1549 = vmatpush1.msra.mxu0 0.0
    %1550 = vmatprep.subr.mxu0 0.0
    %1551 = vmatpush1.msra.mxu0 0.0
    %1552 = vmatprep.subr.mxu0 0.0
    %1553 = vmatpush1.msra.mxu0 0.0
    %1554 = vmatprep.mubr.f32.mxu0 0.0
    %1555 = vmatmul.mubr.f32.gmra.mrb[0].mxu0 %v1488
    %v1556 = vpop.f32.mrb[0].mxu0
    %v1557 = vadd.f32 0.0, %v1556
    %v1558 = vpop.f32.mrb[0].mxu0
    %1559 = vdwg.mxu0
    %1561 = vrot.lane.b32.xlu0 %v1476, 32
    %v1562 = vpop.permute.xlu0 %1561
    %v1563 = vsel %vm71, %v1562, 0
    %1565 = vmatprep.subr.mxu0 0.0
    %1566 = vmatpush1.msra.mxu0 %v1477
    %1567 = vmatprep.subr.mxu0 0.0
    %1568 = vmatpush1.msra.mxu0 %v1478
    %1569 = vmatprep.subr.mxu0 0.0
    %1570 = vmatpush1.msra.mxu0 %v1479
    %1571 = vmatprep.subr.mxu0 0.0
    %1572 = vmatpush1.msra.mxu0 %v1480
    %1573 = vmatprep.subr.mxu0 0.0
    %1574 = vmatpush1.msra.mxu0 0.0
    %1575 = vmatprep.subr.mxu0 0.0
    %1576 = vmatpush1.msra.mxu0 0.0
    %1577 = vmatprep.subr.mxu0 0.0
    %1578 = vmatpush1.msra.mxu0 0.0
    %1579 = vmatprep.subr.mxu0 0.0
    %1580 = vmatpush1.msra.mxu0 0.0
    %1581 = vmatprep.subr.mxu0 0.0
    %1582 = vmatpush1.msra.mxu0 0.0
    %1583 = vmatprep.subr.mxu0 0.0
    %1584 = vmatpush1.msra.mxu0 0.0
    %1585 = vmatprep.subr.mxu0 0.0
    %1586 = vmatpush1.msra.mxu0 0.0
    %1587 = vmatprep.subr.mxu0 0.0
    %1588 = vmatpush1.msra.mxu0 0.0
    %1589 = vmatprep.subr.mxu0 0.0
    %1590 = vmatpush1.msra.mxu0 0.0
    %1591 = vmatprep.subr.mxu0 0.0
    %1592 = vmatpush1.msra.mxu0 0.0
    %1593 = vmatprep.subr.mxu0 0.0
    %1594 = vmatpush1.msra.mxu0 0.0
    %1595 = vmatprep.subr.mxu0 0.0
    %1596 = vmatpush1.msra.mxu0 0.0
    %1597 = vmatprep.subr.mxu0 0.0
    %1598 = vmatpush1.msra.mxu0 0.0
    %1599 = vmatprep.subr.mxu0 0.0
    %1600 = vmatpush1.msra.mxu0 0.0
    %1601 = vmatprep.subr.mxu0 0.0
    %1602 = vmatpush1.msra.mxu0 0.0
    %1603 = vmatprep.subr.mxu0 0.0
    %1604 = vmatpush1.msra.mxu0 0.0
    %1605 = vmatprep.subr.mxu0 0.0
    %1606 = vmatpush1.msra.mxu0 0.0
    %1607 = vmatprep.subr.mxu0 0.0
    %1608 = vmatpush1.msra.mxu0 0.0
    %1609 = vmatprep.subr.mxu0 0.0
    %1610 = vmatpush1.msra.mxu0 0.0
    %1611 = vmatprep.subr.mxu0 0.0
    %1612 = vmatpush1.msra.mxu0 0.0
    %1613 = vmatprep.subr.mxu0 0.0
    %1614 = vmatpush1.msra.mxu0 0.0
    %1615 = vmatprep.subr.mxu0 0.0
    %1616 = vmatpush1.msra.mxu0 0.0
    %1617 = vmatprep.subr.mxu0 0.0
    %1618 = vmatpush1.msra.mxu0 0.0
    %1619 = vmatprep.subr.mxu0 0.0
    %1620 = vmatpush1.msra.mxu0 0.0
    %1621 = vmatprep.subr.mxu0 0.0
    %1622 = vmatpush1.msra.mxu0 0.0
    %1623 = vmatprep.subr.mxu0 0.0
    %1624 = vmatpush1.msra.mxu0 0.0
    %1625 = vmatprep.subr.mxu0 0.0
    %1626 = vmatpush1.msra.mxu0 0.0
    %1627 = vmatprep.subr.mxu0 0.0
    %1628 = vmatpush1.msra.mxu0 0.0
    %1629 = vmatprep.mubr.f32.mxu0 0.0
    %1630 = vmatmul.mubr.f32.gmra.mrb[0].mxu0 %v1563
    %v1631 = vpop.f32.mrb[0].mxu0
    %v1632 = vadd.f32 %v1557, %v1631
    %v1633 = vpop.f32.mrb[0].mxu0
    %1634 = vdwg.mxu0
    %v1635 = vld [vmem:[%s12] sm:$0x1]
    %v1637 = vlaneseq
    %v1638 = vshrl.u32 %v1637, 7
    %v1639 = vsub.s32 0, %v1638
    %v1640 = vrot.slane %v1635, %v1639
    %v1642 = vadd.f32 %v1632, %v1640
    %1643 = vst [vmem:[%s17] sm:$0x3] %v1642
    %v1644 = vld [vmem:[%s3] sm:$0x3]
    %v1645 = vmul.f32 %v1642, 0.5
    %v1646 = vmul.f32 %v1645, 1.442695
    %v1647 = vpow.pop %v1646
    %1649 = vrot.lane.b32.xlu0 %v1647, 96
    %v1650 = vpop.permute.xlu0 %1649
    %v1652 = vmul.f32 %v1644, %v1650
    %v1653 = vadd.f32 %v1642, %v1652
    %1654 = vrot.lane.b32.xlu0 %v1647, 64
    %v1655 = vpop.permute.xlu0 %1654
    %v1657 = vmul.f32 %v1644, %v1655
    %1659 = vrot.lane.b32.xlu0 %v1657, 32
    %v1660 = vpop.permute.xlu0 %1659
    %v1662 = vadd.f32 %v1642, %v1660
    %v1663 = vld [vmem:[%s13] sm:$0xff]
    %v1664 = vld [vmem:[%s13 + $0x8] sm:$0xff]
    %v1665 = vld [vmem:[%s13 + $0x10] sm:$0xff]
    %v1666 = vld [vmem:[%s13 + $0x18] sm:$0xff]
    %v1667 = vld [vmem:[%s13 + $0x20] sm:$0xff]
    %v1668 = vld [vmem:[%s13 + $0x28] sm:$0xff]
    %v1669 = vld [vmem:[%s13 + $0x30] sm:$0xff]
    %v1670 = vld [vmem:[%s13 + $0x38] sm:$0xff]
    %1672 = vrot.lane.b32.xlu0 %v1662, 64
    %v1673 = vpop.permute.xlu0 %1672
    %v1674 = vsel %vm71, %v1673, 0
    %1676 = vmatprep.subr.mxu0 0.0
    %1677 = vmatpush1.msra.mxu0 %v1667
    %1678 = vmatprep.subr.mxu0 0.0
    %1679 = vmatpush1.msra.mxu0 %v1668
    %1680 = vmatprep.subr.mxu0 0.0
    %1681 = vmatpush1.msra.mxu0 %v1669
    %1682 = vmatprep.subr.mxu0 0.0
    %1683 = vmatpush1.msra.mxu0 %v1670
    %1684 = vmatprep.subr.mxu0 0.0
    %1685 = vmatpush1.msra.mxu0 0.0
    %1686 = vmatprep.subr.mxu0 0.0
    %1687 = vmatpush1.msra.mxu0 0.0
    %1688 = vmatprep.subr.mxu0 0.0
    %1689 = vmatpush1.msra.mxu0 0.0
    %1690 = vmatprep.subr.mxu0 0.0
    %1691 = vmatpush1.msra.mxu0 0.0
    %1692 = vmatprep.subr.mxu0 0.0
    %1693 = vmatpush1.msra.mxu0 0.0
    %1694 = vmatprep.subr.mxu0 0.0
    %1695 = vmatpush1.msra.mxu0 0.0
    %1696 = vmatprep.subr.mxu0 0.0
    %1697 = vmatpush1.msra.mxu0 0.0
    %1698 = vmatprep.subr.mxu0 0.0
    %1699 = vmatpush1.msra.mxu0 0.0
    %1700 = vmatprep.subr.mxu0 0.0
    %1701 = vmatpush1.msra.mxu0 0.0
    %1702 = vmatprep.subr.mxu0 0.0
    %1703 = vmatpush1.msra.mxu0 0.0
    %1704 = vmatprep.subr.mxu0 0.0
    %1705 = vmatpush1.msra.mxu0 0.0
    %1706 = vmatprep.subr.mxu0 0.0
    %1707 = vmatpush1.msra.mxu0 0.0
    %1708 = vmatprep.subr.mxu0 0.0
    %1709 = vmatpush1.msra.mxu0 0.0
    %1710 = vmatprep.subr.mxu0 0.0
    %1711 = vmatpush1.msra.mxu0 0.0
    %1712 = vmatprep.subr.mxu0 0.0
    %1713 = vmatpush1.msra.mxu0 0.0
    %1714 = vmatprep.subr.mxu0 0.0
    %1715 = vmatpush1.msra.mxu0 0.0
    %1716 = vmatprep.subr.mxu0 0.0
    %1717 = vmatpush1.msra.mxu0 0.0
    %1718 = vmatprep.subr.mxu0 0.0
    %1719 = vmatpush1.msra.mxu0 0.0
    %1720 = vmatprep.subr.mxu0 0.0
    %1721 = vmatpush1.msra.mxu0 0.0
    %1722 = vmatprep.subr.mxu0 0.0
    %1723 = vmatpush1.msra.mxu0 0.0
    %1724 = vmatprep.subr.mxu0 0.0
    %1725 = vmatpush1.msra.mxu0 0.0
    %1726 = vmatprep.subr.mxu0 0.0
    %1727 = vmatpush1.msra.mxu0 0.0
    %1728 = vmatprep.subr.mxu0 0.0
    %1729 = vmatpush1.msra.mxu0 0.0
    %1730 = vmatprep.subr.mxu0 0.0
    %1731 = vmatpush1.msra.mxu0 0.0
    %1732 = vmatprep.subr.mxu0 0.0
    %1733 = vmatpush1.msra.mxu0 0.0
    %1734 = vmatprep.subr.mxu0 0.0
    %1735 = vmatpush1.msra.mxu0 0.0
    %1736 = vmatprep.subr.mxu0 0.0
    %1737 = vmatpush1.msra.mxu0 0.0
    %1738 = vmatprep.subr.mxu0 0.0
    %1739 = vmatpush1.msra.mxu0 0.0
    %1740 = vmatprep.mubr.f32.mxu0 0.0
    %1741 = vmatmul.mubr.f32.gmra.mrb[0].mxu0 %v1674
    %v1742 = vpop.f32.mrb[0].mxu0
    %v1743 = vadd.f32 0.0, %v1742
    %v1744 = vpop.f32.mrb[0].mxu0
    %1745 = vdwg.mxu0
    %v1747 = vsel %vm71, %v1653, 0
    %1749 = vmatprep.subr.mxu0 0.0
    %1750 = vmatpush1.msra.mxu0 %v1663
    %1751 = vmatprep.subr.mxu0 0.0
    %1752 = vmatpush1.msra.mxu0 %v1664
    %1753 = vmatprep.subr.mxu0 0.0
    %1754 = vmatpush1.msra.mxu0 %v1665
    %1755 = vmatprep.subr.mxu0 0.0
    %1756 = vmatpush1.msra.mxu0 %v1666
    %1757 = vmatprep.subr.mxu0 0.0
    %1758 = vmatpush1.msra.mxu0 0.0
    %1759 = vmatprep.subr.mxu0 0.0
    %1760 = vmatpush1.msra.mxu0 0.0
    %1761 = vmatprep.subr.mxu0 0.0
    %1762 = vmatpush1.msra.mxu0 0.0
    %1763 = vmatprep.subr.mxu0 0.0
    %1764 = vmatpush1.msra.mxu0 0.0
    %1765 = vmatprep.subr.mxu0 0.0
    %1766 = vmatpush1.msra.mxu0 0.0
    %1767 = vmatprep.subr.mxu0 0.0
    %1768 = vmatpush1.msra.mxu0 0.0
    %1769 = vmatprep.subr.mxu0 0.0
    %1770 = vmatpush1.msra.mxu0 0.0
    %1771 = vmatprep.subr.mxu0 0.0
    %1772 = vmatpush1.msra.mxu0 0.0
    %1773 = vmatprep.subr.mxu0 0.0
    %1774 = vmatpush1.msra.mxu0 0.0
    %1775 = vmatprep.subr.mxu0 0.0
    %1776 = vmatpush1.msra.mxu0 0.0
    %1777 = vmatprep.subr.mxu0 0.0
    %1778 = vmatpush1.msra.mxu0 0.0
    %1779 = vmatprep.subr.mxu0 0.0
    %1780 = vmatpush1.msra.mxu0 0.0
    %1781 = vmatprep.subr.mxu0 0.0
    %1782 = vmatpush1.msra.mxu0 0.0
    %1783 = vmatprep.subr.mxu0 0.0
    %1784 = vmatpush1.msra.mxu0 0.0
    %1785 = vmatprep.subr.mxu0 0.0
    %1786 = vmatpush1.msra.mxu0 0.0
    %1787 = vmatprep.subr.mxu0 0.0
    %1788 = vmatpush1.msra.mxu0 0.0
    %1789 = vmatprep.subr.mxu0 0.0
    %1790 = vmatpush1.msra.mxu0 0.0
    %1791 = vmatprep.subr.mxu0 0.0
    %1792 = vmatpush1.msra.mxu0 0.0
    %1793 = vmatprep.subr.mxu0 0.0
    %1794 = vmatpush1.msra.mxu0 0.0
    %1795 = vmatprep.subr.mxu0 0.0
    %1796 = vmatpush1.msra.mxu0 0.0
    %1797 = vmatprep.subr.mxu0 0.0
    %1798 = vmatpush1.msra.mxu0 0.0
    %1799 = vmatprep.subr.mxu0 0.0
    %1800 = vmatpush1.msra.mxu0 0.0
    %1801 = vmatprep.subr.mxu0 0.0
    %1802 = vmatpush1.msra.mxu0 0.0
    %1803 = vmatprep.subr.mxu0 0.0
    %1804 = vmatpush1.msra.mxu0 0.0
    %1805 = vmatprep.subr.mxu0 0.0
    %1806 = vmatpush1.msra.mxu0 0.0
    %1807 = vmatprep.subr.mxu0 0.0
    %1808 = vmatpush1.msra.mxu0 0.0
    %1809 = vmatprep.subr.mxu0 0.0
    %1810 = vmatpush1.msra.mxu0 0.0
    %1811 = vmatprep.subr.mxu0 0.0
    %1812 = vmatpush1.msra.mxu0 0.0
    %1813 = vmatprep.mubr.f32.mxu0 0.0
    %1814 = vmatmul.mubr.f32.gmra.mrb[0].mxu0 %v1747
    %v1815 = vpop.f32.mrb[0].mxu0
    %v1816 = vadd.f32 %v1743, %v1815
    %v1817 = vpop.f32.mrb[0].mxu0
    %1818 = vdwg.mxu0
    %v1819 = vld [vmem:[%s14] sm:$0x1]
    %v1821 = vlaneseq
    %v1822 = vshrl.u32 %v1821, 7
    %v1823 = vsub.s32 0, %v1822
    %v1824 = vrot.slane %v1819, %v1823
    %v1826 = vadd.f32 %v1816, %v1824
    %v1827 = vld [vmem:[%s2] sm:$0x3]
    %1829 = vrot.lane.b32.xlu0 %v1827, 24
    %v1830 = vpop.permute.xlu0 %1829
    %vm1832 = vcmask 195584
    %v1833 = vsel %vm1832, %v1826, %v1830
    %1835 = vrot.lane.b32.xlu0 %v1826, 104
    %v1836 = vpop.permute.xlu0 %1835
    %v1838 = vsel %vm1832, %v1836, %v1830
    %v1839 = vld [vmem:[%s8] sm:$0xff]
    %v1840 = vld [vmem:[%s8 + $0x8] sm:$0xff]
    %v1841 = vld [vmem:[%s8 + $0x10] sm:$0xff]
    %v1842 = vld [vmem:[%s8 + $0x18] sm:$0xff]
    %v1843 = vld [vmem:[%s9] sm:$0xff]
    %v1844 = vld [vmem:[%s9 + $0x8] sm:$0xff]
    %v1845 = vld [vmem:[%s9 + $0x10] sm:$0xff]
    %v1846 = vld [vmem:[%s9 + $0x18] sm:$0xff]
    %v1847 = vld [vmem:[%s10] sm:$0x1]
    %v1848 = vld [vmem:[%s15] sm:$0xff]
    %v1849 = vld [vmem:[%s15 + $0x8] sm:$0xff]
    %v1850 = vld [vmem:[%s15 + $0x10] sm:$0xff]
    %v1851 = vld [vmem:[%s15 + $0x18] sm:$0xff]
    %v1852 = vld [vmem:[%s16] sm:$0x1]
    %v1853 = vld [vmem:[%s1] sm:$0x3]
    %v1855 = vsel %vm71, %v1833, 0
    %1857 = vmatprep.subr.mxu0 0.0
    %1858 = vmatpush1.msra.mxu0 %v1843
    %1859 = vmatprep.subr.mxu0 0.0
    %1860 = vmatpush1.msra.mxu0 %v1844
    %1861 = vmatprep.subr.mxu0 0.0
    %1862 = vmatpush1.msra.mxu0 %v1845
    %1863 = vmatprep.subr.mxu0 0.0
    %1864 = vmatpush1.msra.mxu0 %v1846
    %1865 = vmatprep.subr.mxu0 0.0
    %1866 = vmatpush1.msra.mxu0 0.0
    %1867 = vmatprep.subr.mxu0 0.0
    %1868 = vmatpush1.msra.mxu0 0.0
    %1869 = vmatprep.subr.mxu0 0.0
    %1870 = vmatpush1.msra.mxu0 0.0
    %1871 = vmatprep.subr.mxu0 0.0
    %1872 = vmatpush1.msra.mxu0 0.0
    %1873 = vmatprep.subr.mxu0 0.0
    %1874 = vmatpush1.msra.mxu0 0.0
    %1875 = vmatprep.subr.mxu0 0.0
    %1876 = vmatpush1.msra.mxu0 0.0
    %1877 = vmatprep.subr.mxu0 0.0
    %1878 = vmatpush1.msra.mxu0 0.0
    %1879 = vmatprep.subr.mxu0 0.0
    %1880 = vmatpush1.msra.mxu0 0.0
    %1881 = vmatprep.subr.mxu0 0.0
    %1882 = vmatpush1.msra.mxu0 0.0
    %1883 = vmatprep.subr.mxu0 0.0
    %1884 = vmatpush1.msra.mxu0 0.0
    %1885 = vmatprep.subr.mxu0 0.0
    %1886 = vmatpush1.msra.mxu0 0.0
    %1887 = vmatprep.subr.mxu0 0.0
    %1888 = vmatpush1.msra.mxu0 0.0
    %1889 = vmatprep.subr.mxu0 0.0
    %1890 = vmatpush1.msra.mxu0 0.0
    %1891 = vmatprep.subr.mxu0 0.0
    %1892 = vmatpush1.msra.mxu0 0.0
    %1893 = vmatprep.subr.mxu0 0.0
    %1894 = vmatpush1.msra.mxu0 0.0
    %1895 = vmatprep.subr.mxu0 0.0
    %1896 = vmatpush1.msra.mxu0 0.0
    %1897 = vmatprep.subr.mxu0 0.0
    %1898 = vmatpush1.msra.mxu0 0.0
    %1899 = vmatprep.subr.mxu0 0.0
    %1900 = vmatpush1.msra.mxu0 0.0
    %1901 = vmatprep.subr.mxu0 0.0
    %1902 = vmatpush1.msra.mxu0 0.0
    %1903 = vmatprep.subr.mxu0 0.0
    %1904 = vmatpush1.msra.mxu0 0.0
    %1905 = vmatprep.subr.mxu0 0.0
    %1906 = vmatpush1.msra.mxu0 0.0
    %1907 = vmatprep.subr.mxu0 0.0
    %1908 = vmatpush1.msra.mxu0 0.0
    %1909 = vmatprep.subr.mxu0 0.0
    %1910 = vmatpush1.msra.mxu0 0.0
    %1911 = vmatprep.subr.mxu0 0.0
    %1912 = vmatpush1.msra.mxu0 0.0
    %1913 = vmatprep.subr.mxu0 0.0
    %1914 = vmatpush1.msra.mxu0 0.0
    %1915 = vmatprep.subr.mxu0 0.0
    %1916 = vmatpush1.msra.mxu0 0.0
    %1917 = vmatprep.subr.mxu0 0.0
    %1918 = vmatpush1.msra.mxu0 0.0
    %1919 = vmatprep.subr.mxu0 0.0
    %1920 = vmatpush1.msra.mxu0 0.0
    %1921 = vmatprep.mubr.f32.mxu0 0.0
    %1922 = vmatmul.mubr.f32.gmra.mrb[0].mxu0 %v1855
    %v1923 = vpop.f32.mrb[0].mxu0
    %v1924 = vadd.f32 0.0, %v1923
    %v1925 = vpop.f32.mrb[0].mxu0
    %1926 = vdwg.mxu0
    %v1928 = vsel %vm71, %v1853, 0
    %1930 = vmatprep.subr.mxu0 0.0
    %1931 = vmatpush1.msra.mxu0 %v1839
    %1932 = vmatprep.subr.mxu0 0.0
    %1933 = vmatpush1.msra.mxu0 %v1840
    %1934 = vmatprep.subr.mxu0 0.0
    %1935 = vmatpush1.msra.mxu0 %v1841
    %1936 = vmatprep.subr.mxu0 0.0
    %1937 = vmatpush1.msra.mxu0 %v1842
    %1938 = vmatprep.subr.mxu0 0.0
    %1939 = vmatpush1.msra.mxu0 0.0
    %1940 = vmatprep.subr.mxu0 0.0
    %1941 = vmatpush1.msra.mxu0 0.0
    %1942 = vmatprep.subr.mxu0 0.0
    %1943 = vmatpush1.msra.mxu0 0.0
    %1944 = vmatprep.subr.mxu0 0.0
    %1945 = vmatpush1.msra.mxu0 0.0
    %1946 = vmatprep.subr.mxu0 0.0
    %1947 = vmatpush1.msra.mxu0 0.0
    %1948 = vmatprep.subr.mxu0 0.0
    %1949 = vmatpush1.msra.mxu0 0.0
    %1950 = vmatprep.subr.mxu0 0.0
    %1951 = vmatpush1.msra.mxu0 0.0
    %1952 = vmatprep.subr.mxu0 0.0
    %1953 = vmatpush1.msra.mxu0 0.0
    %1954 = vmatprep.subr.mxu0 0.0
    %1955 = vmatpush1.msra.mxu0 0.0
    %1956 = vmatprep.subr.mxu0 0.0
    %1957 = vmatpush1.msra.mxu0 0.0
    %1958 = vmatprep.subr.mxu0 0.0
    %1959 = vmatpush1.msra.mxu0 0.0
    %1960 = vmatprep.subr.mxu0 0.0
    %1961 = vmatpush1.msra.mxu0 0.0
    %1962 = vmatprep.subr.mxu0 0.0
    %1963 = vmatpush1.msra.mxu0 0.0
    %1964 = vmatprep.subr.mxu0 0.0
    %1965 = vmatpush1.msra.mxu0 0.0
    %1966 = vmatprep.subr.mxu0 0.0
    %1967 = vmatpush1.msra.mxu0 0.0
    %1968 = vmatprep.subr.mxu0 0.0
    %1969 = vmatpush1.msra.mxu0 0.0
    %1970 = vmatprep.subr.mxu0 0.0
    %1971 = vmatpush1.msra.mxu0 0.0
    %1972 = vmatprep.subr.mxu0 0.0
    %1973 = vmatpush1.msra.mxu0 0.0
    %1974 = vmatprep.subr.mxu0 0.0
    %1975 = vmatpush1.msra.mxu0 0.0
    %1976 = vmatprep.subr.mxu0 0.0
    %1977 = vmatpush1.msra.mxu0 0.0
    %1978 = vmatprep.subr.mxu0 0.0
    %1979 = vmatpush1.msra.mxu0 0.0
    %1980 = vmatprep.subr.mxu0 0.0
    %1981 = vmatpush1.msra.mxu0 0.0
    %1982 = vmatprep.subr.mxu0 0.0
    %1983 = vmatpush1.msra.mxu0 0.0
    %1984 = vmatprep.subr.mxu0 0.0
    %1985 = vmatpush1.msra.mxu0 0.0
    %1986 = vmatprep.subr.mxu0 0.0
    %1987 = vmatpush1.msra.mxu0 0.0
    %1988 = vmatprep.subr.mxu0 0.0
    %1989 = vmatpush1.msra.mxu0 0.0
    %1990 = vmatprep.subr.mxu0 0.0
    %1991 = vmatpush1.msra.mxu0 0.0
    %1992 = vmatprep.subr.mxu0 0.0
    %1993 = vmatpush1.msra.mxu0 0.0
    %1994 = vmatprep.mubr.f32.mxu0 0.0
    %1995 = vmatmul.mubr.f32.gmra.mrb[0].mxu0 %v1928
    %v1996 = vpop.f32.mrb[0].mxu0
    %v1997 = vadd.f32 %v1924, %v1996
    %v1998 = vpop.f32.mrb[0].mxu0
    %1999 = vdwg.mxu0
    %v2001 = vlaneseq
    %v2002 = vshrl.u32 %v2001, 7
    %v2003 = vsub.s32 0, %v2002
    %v2004 = vrot.slane %v1847, %v2003
    %v2006 = vadd.f32 %v1997, %v2004
    %v2007 = vxor.u32 %v2006, 2147483648
    %v2008 = vmul.f32 %v2007, 1.442695
    %v2009 = vpow.pop %v2008
    %v2010 = vadd.f32 %v2009, 1.0
    %v2011 = vrcp.pop %v2010
    %v2012 = vmul.f32 1.0, %v2011
    %v2013 = vtanh.pop %v2006
    %2015 = vrot.lane.b32.xlu0 %v1838, 32
    %v2016 = vpop.permute.xlu0 %2015
    %v2018 = vmul.f32 %v2012, %v2016
    %2020 = vrot.lane.b32.xlu0 %v2013, 64
    %v2021 = vpop.permute.xlu0 %2020
    %v2023 = vmul.f32 %v2012, %v2021
    %2025 = vrot.lane.b32.xlu0 %v2023, 32
    %v2026 = vpop.permute.xlu0 %2025
    %v2028 = vadd.f32 %v2018, %v2026
    %v2029 = vtanh.pop %v2028
    %2031 = vrot.lane.b32.xlu0 %v2029, 64
    %v2032 = vpop.permute.xlu0 %2031
    %v2034 = vmul.f32 %v2012, %v2032
    %v2036 = vlaneseq
    %v2037 = vshrl.u32 %v2036, 7
    %v2038 = vsub.s32 0, %v2037
    %v2039 = vrot.slane %v1852, %v2038
    %2042 = vrot.lane.b32.xlu0 %v2034, 32
    %v2043 = vpop.permute.xlu0 %2042
    %v2044 = vsel %vm71, %v2043, 0
    %2046 = vmatprep.subr.mxu0 0.0
    %2047 = vmatpush1.msra.mxu0 %v1848
    %2048 = vmatprep.subr.mxu0 0.0
    %2049 = vmatpush1.msra.mxu0 %v1849
    %2050 = vmatprep.subr.mxu0 0.0
    %2051 = vmatpush1.msra.mxu0 %v1850
    %2052 = vmatprep.subr.mxu0 0.0
    %2053 = vmatpush1.msra.mxu0 %v1851
    %2054 = vmatprep.subr.mxu0 0.0
    %2055 = vmatpush1.msra.mxu0 0.0
    %2056 = vmatprep.subr.mxu0 0.0
    %2057 = vmatpush1.msra.mxu0 0.0
    %2058 = vmatprep.subr.mxu0 0.0
    %2059 = vmatpush1.msra.mxu0 0.0
    %2060 = vmatprep.subr.mxu0 0.0
    %2061 = vmatpush1.msra.mxu0 0.0
    %2062 = vmatprep.subr.mxu0 0.0
    %2063 = vmatpush1.msra.mxu0 0.0
    %2064 = vmatprep.subr.mxu0 0.0
    %2065 = vmatpush1.msra.mxu0 0.0
    %2066 = vmatprep.subr.mxu0 0.0
    %2067 = vmatpush1.msra.mxu0 0.0
    %2068 = vmatprep.subr.mxu0 0.0
    %2069 = vmatpush1.msra.mxu0 0.0
    %2070 = vmatprep.subr.mxu0 0.0
    %2071 = vmatpush1.msra.mxu0 0.0
    %2072 = vmatprep.subr.mxu0 0.0
    %2073 = vmatpush1.msra.mxu0 0.0
    %2074 = vmatprep.subr.mxu0 0.0
    %2075 = vmatpush1.msra.mxu0 0.0
    %2076 = vmatprep.subr.mxu0 0.0
    %2077 = vmatpush1.msra.mxu0 0.0
    %2078 = vmatprep.subr.mxu0 0.0
    %2079 = vmatpush1.msra.mxu0 0.0
    %2080 = vmatprep.subr.mxu0 0.0
    %2081 = vmatpush1.msra.mxu0 0.0
    %2082 = vmatprep.subr.mxu0 0.0
    %2083 = vmatpush1.msra.mxu0 0.0
    %2084 = vmatprep.subr.mxu0 0.0
    %2085 = vmatpush1.msra.mxu0 0.0
    %2086 = vmatprep.subr.mxu0 0.0
    %2087 = vmatpush1.msra.mxu0 0.0
    %2088 = vmatprep.subr.mxu0 0.0
    %2089 = vmatpush1.msra.mxu0 0.0
    %2090 = vmatprep.subr.mxu0 0.0
    %2091 = vmatpush1.msra.mxu0 0.0
    %2092 = vmatprep.subr.mxu0 0.0
    %2093 = vmatpush1.msra.mxu0 0.0
    %2094 = vmatprep.subr.mxu0 0.0
    %2095 = vmatpush1.msra.mxu0 0.0
    %2096 = vmatprep.subr.mxu0 0.0
    %2097 = vmatpush1.msra.mxu0 0.0
    %2098 = vmatprep.subr.mxu0 0.0
    %2099 = vmatpush1.msra.mxu0 0.0
    %2100 = vmatprep.subr.mxu0 0.0
    %2101 = vmatpush1.msra.mxu0 0.0
    %2102 = vmatprep.subr.mxu0 0.0
    %2103 = vmatpush1.msra.mxu0 0.0
    %2104 = vmatprep.subr.mxu0 0.0
    %2105 = vmatpush1.msra.mxu0 0.0
    %2106 = vmatprep.subr.mxu0 0.0
    %2107 = vmatpush1.msra.mxu0 0.0
    %2108 = vmatprep.subr.mxu0 0.0
    %2109 = vmatpush1.msra.mxu0 0.0
    %2110 = vmatprep.mubr.f32.mxu0 0.0
    %2111 = vmatmul.mubr.f32.gmra.mrb[0].mxu0 %v2044
    %v2112 = vpop.f32.mrb[0].mxu0
    %v2113 = vadd.f32 %v2039, %v2112
    %v2114 = vpop.f32.mrb[0].mxu0
    %2115 = vdwg.mxu0
    %vm2116 = vcmask 1041408
    %v2117 = vsel %vm2116, %v2113, -inf
    %2118 = vmax.xlane.f32.xlu0 %v2117
    %v2119 = vpop.xlane.xlu0 %2118
    %v2120 = vsub.f32 %v2113, %v2119
    %v2121 = vmul.f32 %v2120, 1.442695
    %v2122 = vpow.pop %v2121
    %v2123 = vsel %vm2116, %v2122, 0.0
    %2124 = vadd.xlane.f32.xlu0 %v2123
    %v2125 = vpop.xlane.xlu0 %2124
    %v2126 = vlog2.pop %v2125
    %v2127 = vmul.f32 %v2126, 0.6931472
    %v2128 = vadd.f32 %v2127, %v2119
    %v2129 = vsub.f32 %v2113, %v2128
    %2130 = vst [vmem:[%s18] sm:$0x3] %v2129
    %v2131 = vlaneseq
    %v2132 = vand.u32 %v2131, 127
    %vm2133 = vcmp.eq.f32.partialorder %v2113, %v2119
    %v2134 = vsel %vm2133, %v2132, 128
    %v2135 = vsel %vm2116, %v2134, 2147483647
    %v2136 = vand.u32 %v2135, 65535
    %v2137 = vshra.s32 %v2135, 16
    %v2138 = vcvt.s32.f32 %v2136
    %v2139 = vcvt.s32.f32 %v2137
    %2140 = vmin.xlane.f32.xlu0 %v2139
    %v2141 = vpop.xlane.xlu0 %2140
    %vm2142 = vcmp.eq.f32.partialorder %v2139, %v2141
    %v2143 = vsel %vm2142, %v2138, inf
    %2144 = vmin.xlane.f32.xlu0 %v2143
    %v2145 = vpop.xlane.xlu0 %2144
    %v2146 = vcvt.f32.s32 %v2145
    %v2147 = vcvt.f32.s32 %v2141
    %v2148 = vshll.u32 %v2147, 16
    %v2149 = vadd.s32 %v2148, %v2146
    %s2150 = scalar_lea.vmem %s1, 2
    %v2151 = vld [vmem:[%s2150] sm:$0x3]
    %2152 = vmatprep.subr.mxu0 0.0
    %2153 = vmatpush1.msra.mxu0 %v1843
    %2154 = vmatprep.subr.mxu0 0.0
    %2155 = vmatpush1.msra.mxu0 %v1844
    %2156 = vmatprep.subr.mxu0 0.0
    %2157 = vmatpush1.msra.mxu0 %v1845
    %2158 = vmatprep.subr.mxu0 0.0
    %2159 = vmatpush1.msra.mxu0 %v1846
    %2160 = vmatprep.subr.mxu0 0.0
    %2161 = vmatpush1.msra.mxu0 0.0
    %2162 = vmatprep.subr.mxu0 0.0
    %2163 = vmatpush1.msra.mxu0 0.0
    %2164 = vmatprep.subr.mxu0 0.0
    %2165 = vmatpush1.msra.mxu0 0.0
    %2166 = vmatprep.subr.mxu0 0.0
    %2167 = vmatpush1.msra.mxu0 0.0
    %2168 = vmatprep.subr.mxu0 0.0
    %2169 = vmatpush1.msra.mxu0 0.0
    %2170 = vmatprep.subr.mxu0 0.0
    %2171 = vmatpush1.msra.mxu0 0.0
    %2172 = vmatprep.subr.mxu0 0.0
    %2173 = vmatpush1.msra.mxu0 0.0
    %2174 = vmatprep.subr.mxu0 0.0
    %2175 = vmatpush1.msra.mxu0 0.0
    %2176 = vmatprep.subr.mxu0 0.0
    %2177 = vmatpush1.msra.mxu0 0.0
    %2178 = vmatprep.subr.mxu0 0.0
    %2179 = vmatpush1.msra.mxu0 0.0
    %2180 = vmatprep.subr.mxu0 0.0
    %2181 = vmatpush1.msra.mxu0 0.0
    %2182 = vmatprep.subr.mxu0 0.0
    %2183 = vmatpush1.msra.mxu0 0.0
    %2184 = vmatprep.subr.mxu0 0.0
    %2185 = vmatpush1.msra.mxu0 0.0
    %2186 = vmatprep.subr.mxu0 0.0
    %2187 = vmatpush1.msra.mxu0 0.0
    %2188 = vmatprep.subr.mxu0 0.0
    %2189 = vmatpush1.msra.mxu0 0.0
    %2190 = vmatprep.subr.mxu0 0.0
    %2191 = vmatpush1.msra.mxu0 0.0
    %2192 = vmatprep.subr.mxu0 0.0
    %2193 = vmatpush1.msra.mxu0 0.0
    %2194 = vmatprep.subr.mxu0 0.0
    %2195 = vmatpush1.msra.mxu0 0.0
    %2196 = vmatprep.subr.mxu0 0.0
    %2197 = vmatpush1.msra.mxu0 0.0
    %2198 = vmatprep.subr.mxu0 0.0
    %2199 = vmatpush1.msra.mxu0 0.0
    %2200 = vmatprep.subr.mxu0 0.0
    %2201 = vmatpush1.msra.mxu0 0.0
    %2202 = vmatprep.subr.mxu0 0.0
    %2203 = vmatpush1.msra.mxu0 0.0
    %2204 = vmatprep.subr.mxu0 0.0
    %2205 = vmatpush1.msra.mxu0 0.0
    %2206 = vmatprep.subr.mxu0 0.0
    %2207 = vmatpush1.msra.mxu0 0.0
    %2208 = vmatprep.subr.mxu0 0.0
    %2209 = vmatpush1.msra.mxu0 0.0
    %2210 = vmatprep.subr.mxu0 0.0
    %2211 = vmatpush1.msra.mxu0 0.0
    %2212 = vmatprep.subr.mxu0 0.0
    %2213 = vmatpush1.msra.mxu0 0.0
    %2214 = vmatprep.subr.mxu0 0.0
    %2215 = vmatpush1.msra.mxu0 0.0
    %2216 = vmatprep.mubr.f32.mxu0 0.0
    %2217 = vmatmul.mubr.f32.gmra.mrb[0].mxu0 %v2044
    %v2218 = vpop.f32.mrb[0].mxu0
    %v2219 = vadd.f32 0.0, %v2218
    %v2220 = vpop.f32.mrb[0].mxu0
    %2221 = vdwg.mxu0
    %v2223 = vsel %vm71, %v2151, 0
    %2225 = vmatprep.subr.mxu0 0.0
    %2226 = vmatpush1.msra.mxu0 %v1839
    %2227 = vmatprep.subr.mxu0 0.0
    %2228 = vmatpush1.msra.mxu0 %v1840
    %2229 = vmatprep.subr.mxu0 0.0
    %2230 = vmatpush1.msra.mxu0 %v1841
    %2231 = vmatprep.subr.mxu0 0.0
    %2232 = vmatpush1.msra.mxu0 %v1842
    %2233 = vmatprep.subr.mxu0 0.0
    %2234 = vmatpush1.msra.mxu0 0.0
    %2235 = vmatprep.subr.mxu0 0.0
    %2236 = vmatpush1.msra.mxu0 0.0
    %2237 = vmatprep.subr.mxu0 0.0
    %2238 = vmatpush1.msra.mxu0 0.0
    %2239 = vmatprep.subr.mxu0 0.0
    %2240 = vmatpush1.msra.mxu0 0.0
    %2241 = vmatprep.subr.mxu0 0.0
    %2242 = vmatpush1.msra.mxu0 0.0
    %2243 = vmatprep.subr.mxu0 0.0
    %2244 = vmatpush1.msra.mxu0 0.0
    %2245 = vmatprep.subr.mxu0 0.0
    %2246 = vmatpush1.msra.mxu0 0.0
    %2247 = vmatprep.subr.mxu0 0.0
    %2248 = vmatpush1.msra.mxu0 0.0
    %2249 = vmatprep.subr.mxu0 0.0
    %2250 = vmatpush1.msra.mxu0 0.0
    %2251 = vmatprep.subr.mxu0 0.0
    %2252 = vmatpush1.msra.mxu0 0.0
    %2253 = vmatprep.subr.mxu0 0.0
    %2254 = vmatpush1.msra.mxu0 0.0
    %2255 = vmatprep.subr.mxu0 0.0
    %2256 = vmatpush1.msra.mxu0 0.0
    %2257 = vmatprep.subr.mxu0 0.0
    %2258 = vmatpush1.msra.mxu0 0.0
    %2259 = vmatprep.subr.mxu0 0.0
    %2260 = vmatpush1.msra.mxu0 0.0
    %2261 = vmatprep.subr.mxu0 0.0
    %2262 = vmatpush1.msra.mxu0 0.0
    %2263 = vmatprep.subr.mxu0 0.0
    %2264 = vmatpush1.msra.mxu0 0.0
    %2265 = vmatprep.subr.mxu0 0.0
    %2266 = vmatpush1.msra.mxu0 0.0
    %2267 = vmatprep.subr.mxu0 0.0
    %2268 = vmatpush1.msra.mxu0 0.0
    %2269 = vmatprep.subr.mxu0 0.0
    %2270 = vmatpush1.msra.mxu0 0.0
    %2271 = vmatprep.subr.mxu0 0.0
    %2272 = vmatpush1.msra.mxu0 0.0
    %2273 = vmatprep.subr.mxu0 0.0
    %2274 = vmatpush1.msra.mxu0 0.0
    %2275 = vmatprep.subr.mxu0 0.0
    %2276 = vmatpush1.msra.mxu0 0.0
    %2277 = vmatprep.subr.mxu0 0.0
    %2278 = vmatpush1.msra.mxu0 0.0
    %2279 = vmatprep.subr.mxu0 0.0
    %2280 = vmatpush1.msra.mxu0 0.0
    %2281 = vmatprep.subr.mxu0 0.0
    %2282 = vmatpush1.msra.mxu0 0.0
    %2283 = vmatprep.subr.mxu0 0.0
    %2284 = vmatpush1.msra.mxu0 0.0
    %2285 = vmatprep.subr.mxu0 0.0
    %2286 = vmatpush1.msra.mxu0 0.0
    %2287 = vmatprep.subr.mxu0 0.0
    %2288 = vmatpush1.msra.mxu0 0.0
    %2289 = vmatprep.mubr.f32.mxu0 0.0
    %2290 = vmatmul.mubr.f32.gmra.mrb[0].mxu0 %v2223
    %v2291 = vpop.f32.mrb[0].mxu0
    %v2292 = vadd.f32 %v2219, %v2291
    %v2293 = vpop.f32.mrb[0].mxu0
    %2294 = vdwg.mxu0
    %v2295 = vadd.f32 %v2292, %v2004
    %v2296 = vxor.u32 %v2295, 2147483648
    %v2297 = vmul.f32 %v2296, 1.442695
    %v2298 = vpow.pop %v2297
    %v2299 = vadd.f32 %v2298, 1.0
    %v2300 = vrcp.pop %v2299
    %v2301 = vmul.f32 1.0, %v2300
    %v2302 = vtanh.pop %v2295
    %v2303 = vmul.f32 %v2301, %v2028
    %2305 = vrot.lane.b32.xlu0 %v2302, 64
    %v2306 = vpop.permute.xlu0 %2305
    %v2308 = vmul.f32 %v2301, %v2306
    %2310 = vrot.lane.b32.xlu0 %v2308, 32
    %v2311 = vpop.permute.xlu0 %2310
    %v2313 = vadd.f32 %v2303, %v2311
    %v2314 = vtanh.pop %v2313
    %2316 = vrot.lane.b32.xlu0 %v2314, 64
    %v2317 = vpop.permute.xlu0 %2316
    %v2319 = vmul.f32 %v2301, %v2317
    %2321 = vrot.lane.b32.xlu0 %v2319, 32
    %v2322 = vpop.permute.xlu0 %2321
    %v2323 = vsel %vm71, %v2322, 0
    %2325 = vmatprep.subr.mxu0 0.0
    %2326 = vmatpush1.msra.mxu0 %v1848
    %2327 = vmatprep.subr.mxu0 0.0
    %2328 = vmatpush1.msra.mxu0 %v1849
    %2329 = vmatprep.subr.mxu0 0.0
    %2330 = vmatpush1.msra.mxu0 %v1850
    %2331 = vmatprep.subr.mxu0 0.0
    %2332 = vmatpush1.msra.mxu0 %v1851
    %2333 = vmatprep.subr.mxu0 0.0
    %2334 = vmatpush1.msra.mxu0 0.0
    %2335 = vmatprep.subr.mxu0 0.0
    %2336 = vmatpush1.msra.mxu0 0.0
    %2337 = vmatprep.subr.mxu0 0.0
    %2338 = vmatpush1.msra.mxu0 0.0
    %2339 = vmatprep.subr.mxu0 0.0
    %2340 = vmatpush1.msra.mxu0 0.0
    %2341 = vmatprep.subr.mxu0 0.0
    %2342 = vmatpush1.msra.mxu0 0.0
    %2343 = vmatprep.subr.mxu0 0.0
    %2344 = vmatpush1.msra.mxu0 0.0
    %2345 = vmatprep.subr.mxu0 0.0
    %2346 = vmatpush1.msra.mxu0 0.0
    %2347 = vmatprep.subr.mxu0 0.0
    %2348 = vmatpush1.msra.mxu0 0.0
    %2349 = vmatprep.subr.mxu0 0.0
    %2350 = vmatpush1.msra.mxu0 0.0
    %2351 = vmatprep.subr.mxu0 0.0
    %2352 = vmatpush1.msra.mxu0 0.0
    %2353 = vmatprep.subr.mxu0 0.0
    %2354 = vmatpush1.msra.mxu0 0.0
    %2355 = vmatprep.subr.mxu0 0.0
    %2356 = vmatpush1.msra.mxu0 0.0
    %2357 = vmatprep.subr.mxu0 0.0
    %2358 = vmatpush1.msra.mxu0 0.0
    %2359 = vmatprep.subr.mxu0 0.0
    %2360 = vmatpush1.msra.mxu0 0.0
    %2361 = vmatprep.subr.mxu0 0.0
    %2362 = vmatpush1.msra.mxu0 0.0
    %2363 = vmatprep.subr.mxu0 0.0
    %2364 = vmatpush1.msra.mxu0 0.0
    %2365 = vmatprep.subr.mxu0 0.0
    %2366 = vmatpush1.msra.mxu0 0.0
    %2367 = vmatprep.subr.mxu0 0.0
    %2368 = vmatpush1.msra.mxu0 0.0
    %2369 = vmatprep.subr.mxu0 0.0
    %2370 = vmatpush1.msra.mxu0 0.0
    %2371 = vmatprep.subr.mxu0 0.0
    %2372 = vmatpush1.msra.mxu0 0.0
    %2373 = vmatprep.subr.mxu0 0.0
    %2374 = vmatpush1.msra.mxu0 0.0
    %2375 = vmatprep.subr.mxu0 0.0
    %2376 = vmatpush1.msra.mxu0 0.0
    %2377 = vmatprep.subr.mxu0 0.0
    %2378 = vmatpush1.msra.mxu0 0.0
    %2379 = vmatprep.subr.mxu0 0.0
    %2380 = vmatpush1.msra.mxu0 0.0
    %2381 = vmatprep.subr.mxu0 0.0
    %2382 = vmatpush1.msra.mxu0 0.0
    %2383 = vmatprep.subr.mxu0 0.0
    %2384 = vmatpush1.msra.mxu0 0.0
    %2385 = vmatprep.subr.mxu0 0.0
    %2386 = vmatpush1.msra.mxu0 0.0
    %2387 = vmatprep.subr.mxu0 0.0
    %2388 = vmatpush1.msra.mxu0 0.0
    %2389 = vmatprep.mubr.f32.mxu0 0.0
    %2390 = vmatmul.mubr.f32.gmra.mrb[0].mxu0 %v2323
    %v2391 = vpop.f32.mrb[0].mxu0
    %v2392 = vadd.f32 %v2039, %v2391
    %v2393 = vpop.f32.mrb[0].mxu0
    %2394 = vdwg.mxu0
    %v2395 = vsel %vm2116, %v2392, -inf
    %2396 = vmax.xlane.f32.xlu0 %v2395
    %v2397 = vpop.xlane.xlu0 %2396
    %v2398 = vsub.f32 %v2392, %v2397
    %v2399 = vmul.f32 %v2398, 1.442695
    %v2400 = vpow.pop %v2399
    %v2401 = vsel %vm2116, %v2400, 0.0
    %2402 = vadd.xlane.f32.xlu0 %v2401
    %v2403 = vpop.xlane.xlu0 %2402
    %v2404 = vlog2.pop %v2403
    %v2405 = vmul.f32 %v2404, 0.6931472
    %v2406 = vadd.f32 %v2405, %v2397
    %v2407 = vsub.f32 %v2392, %v2406
    %s2408 = scalar_lea.vmem %s18, 2
    %2409 = vst [vmem:[%s2408] sm:$0x3] %v2407
    %vm2410 = vcmp.eq.f32.partialorder %v2392, %v2397
    %v2411 = vsel %vm2410, %v2132, 128
    %v2412 = vsel %vm2116, %v2411, 2147483647
    %v2413 = vand.u32 %v2412, 65535
    %v2414 = vshra.s32 %v2412, 16
    %v2415 = vcvt.s32.f32 %v2413
    %v2416 = vcvt.s32.f32 %v2414
    %2417 = vmin.xlane.f32.xlu0 %v2416
    %v2418 = vpop.xlane.xlu0 %2417
    %vm2419 = vcmp.eq.f32.partialorder %v2416, %v2418
    %v2420 = vsel %vm2419, %v2415, inf
    %2421 = vmin.xlane.f32.xlu0 %v2420
    %v2422 = vpop.xlane.xlu0 %2421
    %v2423 = vcvt.f32.s32 %v2422
    %v2424 = vcvt.f32.s32 %v2418
    %v2425 = vshll.u32 %v2424, 16
    %v2426 = vadd.s32 %v2425, %v2423
    %s2427 = scalar_lea.vmem %s1, 4
    %v2428 = vld [vmem:[%s2427] sm:$0x3]
    %2429 = vmatprep.subr.mxu0 0.0
    %2430 = vmatpush1.msra.mxu0 %v1843
    %2431 = vmatprep.subr.mxu0 0.0
    %2432 = vmatpush1.msra.mxu0 %v1844
    %2433 = vmatprep.subr.mxu0 0.0
    %2434 = vmatpush1.msra.mxu0 %v1845
    %2435 = vmatprep.subr.mxu0 0.0
    %2436 = vmatpush1.msra.mxu0 %v1846
    %2437 = vmatprep.subr.mxu0 0.0
    %2438 = vmatpush1.msra.mxu0 0.0
    %2439 = vmatprep.subr.mxu0 0.0
    %2440 = vmatpush1.msra.mxu0 0.0
    %2441 = vmatprep.subr.mxu0 0.0
    %2442 = vmatpush1.msra.mxu0 0.0
    %2443 = vmatprep.subr.mxu0 0.0
    %2444 = vmatpush1.msra.mxu0 0.0
    %2445 = vmatprep.subr.mxu0 0.0
    %2446 = vmatpush1.msra.mxu0 0.0
    %2447 = vmatprep.subr.mxu0 0.0
    %2448 = vmatpush1.msra.mxu0 0.0
    %2449 = vmatprep.subr.mxu0 0.0
    %2450 = vmatpush1.msra.mxu0 0.0
    %2451 = vmatprep.subr.mxu0 0.0
    %2452 = vmatpush1.msra.mxu0 0.0
    %2453 = vmatprep.subr.mxu0 0.0
    %2454 = vmatpush1.msra.mxu0 0.0
    %2455 = vmatprep.subr.mxu0 0.0
    %2456 = vmatpush1.msra.mxu0 0.0
    %2457 = vmatprep.subr.mxu0 0.0
    %2458 = vmatpush1.msra.mxu0 0.0
    %2459 = vmatprep.subr.mxu0 0.0
    %2460 = vmatpush1.msra.mxu0 0.0
    %2461 = vmatprep.subr.mxu0 0.0
    %2462 = vmatpush1.msra.mxu0 0.0
    %2463 = vmatprep.subr.mxu0 0.0
    %2464 = vmatpush1.msra.mxu0 0.0
    %2465 = vmatprep.subr.mxu0 0.0
    %2466 = vmatpush1.msra.mxu0 0.0
    %2467 = vmatprep.subr.mxu0 0.0
    %2468 = vmatpush1.msra.mxu0 0.0
    %2469 = vmatprep.subr.mxu0 0.0
    %2470 = vmatpush1.msra.mxu0 0.0
    %2471 = vmatprep.subr.mxu0 0.0
    %2472 = vmatpush1.msra.mxu0 0.0
    %2473 = vmatprep.subr.mxu0 0.0
    %2474 = vmatpush1.msra.mxu0 0.0
    %2475 = vmatprep.subr.mxu0 0.0
    %2476 = vmatpush1.msra.mxu0 0.0
    %2477 = vmatprep.subr.mxu0 0.0
    %2478 = vmatpush1.msra.mxu0 0.0
    %2479 = vmatprep.subr.mxu0 0.0
    %2480 = vmatpush1.msra.mxu0 0.0
    %2481 = vmatprep.subr.mxu0 0.0
    %2482 = vmatpush1.msra.mxu0 0.0
    %2483 = vmatprep.subr.mxu0 0.0
    %2484 = vmatpush1.msra.mxu0 0.0
    %2485 = vmatprep.subr.mxu0 0.0
    %2486 = vmatpush1.msra.mxu0 0.0
    %2487 = vmatprep.subr.mxu0 0.0
    %2488 = vmatpush1.msra.mxu0 0.0
    %2489 = vmatprep.subr.mxu0 0.0
    %2490 = vmatpush1.msra.mxu0 0.0
    %2491 = vmatprep.subr.mxu0 0.0
    %2492 = vmatpush1.msra.mxu0 0.0
    %2493 = vmatprep.mubr.f32.mxu0 0.0
    %2494 = vmatmul.mubr.f32.gmra.mrb[0].mxu0 %v2323
    %v2495 = vpop.f32.mrb[0].mxu0
    %v2496 = vadd.f32 0.0, %v2495
    %v2497 = vpop.f32.mrb[0].mxu0
    %2498 = vdwg.mxu0
    %v2500 = vsel %vm71, %v2428, 0
    %2502 = vmatprep.subr.mxu0 0.0
    %2503 = vmatpush1.msra.mxu0 %v1839
    %2504 = vmatprep.subr.mxu0 0.0
    %2505 = vmatpush1.msra.mxu0 %v1840
    %2506 = vmatprep.subr.mxu0 0.0
    %2507 = vmatpush1.msra.mxu0 %v1841
    %2508 = vmatprep.subr.mxu0 0.0
    %2509 = vmatpush1.msra.mxu0 %v1842
    %2510 = vmatprep.subr.mxu0 0.0
    %2511 = vmatpush1.msra.mxu0 0.0
    %2512 = vmatprep.subr.mxu0 0.0
    %2513 = vmatpush1.msra.mxu0 0.0
    %2514 = vmatprep.subr.mxu0 0.0
    %2515 = vmatpush1.msra.mxu0 0.0
    %2516 = vmatprep.subr.mxu0 0.0
    %2517 = vmatpush1.msra.mxu0 0.0
    %2518 = vmatprep.subr.mxu0 0.0
    %2519 = vmatpush1.msra.mxu0 0.0
    %2520 = vmatprep.subr.mxu0 0.0
    %2521 = vmatpush1.msra.mxu0 0.0
    %2522 = vmatprep.subr.mxu0 0.0
    %2523 = vmatpush1.msra.mxu0 0.0
    %2524 = vmatprep.subr.mxu0 0.0
    %2525 = vmatpush1.msra.mxu0 0.0
    %2526 = vmatprep.subr.mxu0 0.0
    %2527 = vmatpush1.msra.mxu0 0.0
    %2528 = vmatprep.subr.mxu0 0.0
    %2529 = vmatpush1.msra.mxu0 0.0
    %2530 = vmatprep.subr.mxu0 0.0
    %2531 = vmatpush1.msra.mxu0 0.0
    %2532 = vmatprep.subr.mxu0 0.0
    %2533 = vmatpush1.msra.mxu0 0.0
    %2534 = vmatprep.subr.mxu0 0.0
    %2535 = vmatpush1.msra.mxu0 0.0
    %2536 = vmatprep.subr.mxu0 0.0
    %2537 = vmatpush1.msra.mxu0 0.0
    %2538 = vmatprep.subr.mxu0 0.0
    %2539 = vmatpush1.msra.mxu0 0.0
    %2540 = vmatprep.subr.mxu0 0.0
    %2541 = vmatpush1.msra.mxu0 0.0
    %2542 = vmatprep.subr.mxu0 0.0
    %2543 = vmatpush1.msra.mxu0 0.0
    %2544 = vmatprep.subr.mxu0 0.0
    %2545 = vmatpush1.msra.mxu0 0.0
    %2546 = vmatprep.subr.mxu0 0.0
    %2547 = vmatpush1.msra.mxu0 0.0
    %2548 = vmatprep.subr.mxu0 0.0
    %2549 = vmatpush1.msra.mxu0 0.0
    %2550 = vmatprep.subr.mxu0 0.0
    %2551 = vmatpush1.msra.mxu0 0.0
    %2552 = vmatprep.subr.mxu0 0.0
    %2553 = vmatpush1.msra.mxu0 0.0
    %2554 = vmatprep.subr.mxu0 0.0
    %2555 = vmatpush1.msra.mxu0 0.0
    %2556 = vmatprep.subr.mxu0 0.0
    %2557 = vmatpush1.msra.mxu0 0.0
    %2558 = vmatprep.subr.mxu0 0.0
    %2559 = vmatpush1.msra.mxu0 0.0
    %2560 = vmatprep.subr.mxu0 0.0
    %2561 = vmatpush1.msra.mxu0 0.0
    %2562 = vmatprep.subr.mxu0 0.0
    %2563 = vmatpush1.msra.mxu0 0.0
    %2564 = vmatprep.subr.mxu0 0.0
    %2565 = vmatpush1.msra.mxu0 0.0
    %2566 = vmatprep.mubr.f32.mxu0 0.0
    %2567 = vmatmul.mubr.f32.gmra.mrb[0].mxu0 %v2500
    %v2568 = vpop.f32.mrb[0].mxu0
    %v2569 = vadd.f32 %v2496, %v2568
    %v2570 = vpop.f32.mrb[0].mxu0
    %2571 = vdwg.mxu0
    %v2572 = vadd.f32 %v2569, %v2004
    %v2573 = vxor.u32 %v2572, 2147483648
    %v2574 = vmul.f32 %v2573, 1.442695
    %v2575 = vpow.pop %v2574
    %v2576 = vadd.f32 %v2575, 1.0
    %v2577 = vrcp.pop %v2576
    %v2578 = vmul.f32 1.0, %v2577
    %v2579 = vtanh.pop %v2572
    %v2580 = vmul.f32 %v2578, %v2313
    %2582 = vrot.lane.b32.xlu0 %v2579, 64
    %v2583 = vpop.permute.xlu0 %2582
    %v2585 = vmul.f32 %v2578, %v2583
    %2587 = vrot.lane.b32.xlu0 %v2585, 32
    %v2588 = vpop.permute.xlu0 %2587
    %v2590 = vadd.f32 %v2580, %v2588
    %v2591 = vtanh.pop %v2590
    %2593 = vrot.lane.b32.xlu0 %v2591, 64
    %v2594 = vpop.permute.xlu0 %2593
    %v2596 = vmul.f32 %v2578, %v2594
    %2598 = vrot.lane.b32.xlu0 %v2596, 32
    %v2599 = vpop.permute.xlu0 %2598
    %v2600 = vsel %vm71, %v2599, 0
    %2602 = vmatprep.subr.mxu0 0.0
    %2603 = vmatpush1.msra.mxu0 %v1848
    %2604 = vmatprep.subr.mxu0 0.0
    %2605 = vmatpush1.msra.mxu0 %v1849
    %2606 = vmatprep.subr.mxu0 0.0
    %2607 = vmatpush1.msra.mxu0 %v1850
    %2608 = vmatprep.subr.mxu0 0.0
    %2609 = vmatpush1.msra.mxu0 %v1851
    %2610 = vmatprep.subr.mxu0 0.0
    %2611 = vmatpush1.msra.mxu0 0.0
    %2612 = vmatprep.subr.mxu0 0.0
    %2613 = vmatpush1.msra.mxu0 0.0
    %2614 = vmatprep.subr.mxu0 0.0
    %2615 = vmatpush1.msra.mxu0 0.0
    %2616 = vmatprep.subr.mxu0 0.0
    %2617 = vmatpush1.msra.mxu0 0.0
    %2618 = vmatprep.subr.mxu0 0.0
    %2619 = vmatpush1.msra.mxu0 0.0
    %2620 = vmatprep.subr.mxu0 0.0
    %2621 = vmatpush1.msra.mxu0 0.0
    %2622 = vmatprep.subr.mxu0 0.0
    %2623 = vmatpush1.msra.mxu0 0.0
    %2624 = vmatprep.subr.mxu0 0.0
    %2625 = vmatpush1.msra.mxu0 0.0
    %2626 = vmatprep.subr.mxu0 0.0
    %2627 = vmatpush1.msra.mxu0 0.0
    %2628 = vmatprep.subr.mxu0 0.0
    %2629 = vmatpush1.msra.mxu0 0.0
    %2630 = vmatprep.subr.mxu0 0.0
    %2631 = vmatpush1.msra.mxu0 0.0
    %2632 = vmatprep.subr.mxu0 0.0
    %2633 = vmatpush1.msra.mxu0 0.0
    %2634 = vmatprep.subr.mxu0 0.0
    %2635 = vmatpush1.msra.mxu0 0.0
    %2636 = vmatprep.subr.mxu0 0.0
    %2637 = vmatpush1.msra.mxu0 0.0
    %2638 = vmatprep.subr.mxu0 0.0
    %2639 = vmatpush1.msra.mxu0 0.0
    %2640 = vmatprep.subr.mxu0 0.0
    %2641 = vmatpush1.msra.mxu0 0.0
    %2642 = vmatprep.subr.mxu0 0.0
    %2643 = vmatpush1.msra.mxu0 0.0
    %2644 = vmatprep.subr.mxu0 0.0
    %2645 = vmatpush1.msra.mxu0 0.0
    %2646 = vmatprep.subr.mxu0 0.0
    %2647 = vmatpush1.msra.mxu0 0.0
    %2648 = vmatprep.subr.mxu0 0.0
    %2649 = vmatpush1.msra.mxu0 0.0
    %2650 = vmatprep.subr.mxu0 0.0
    %2651 = vmatpush1.msra.mxu0 0.0
    %2652 = vmatprep.subr.mxu0 0.0
    %2653 = vmatpush1.msra.mxu0 0.0
    %2654 = vmatprep.subr.mxu0 0.0
    %2655 = vmatpush1.msra.mxu0 0.0
    %2656 = vmatprep.subr.mxu0 0.0
    %2657 = vmatpush1.msra.mxu0 0.0
    %2658 = vmatprep.subr.mxu0 0.0
    %2659 = vmatpush1.msra.mxu0 0.0
    %2660 = vmatprep.subr.mxu0 0.0
    %2661 = vmatpush1.msra.mxu0 0.0
    %2662 = vmatprep.subr.mxu0 0.0
    %2663 = vmatpush1.msra.mxu0 0.0
    %2664 = vmatprep.subr.mxu0 0.0
    %2665 = vmatpush1.msra.mxu0 0.0
    %2666 = vmatprep.mubr.f32.mxu0 0.0
    %2667 = vmatmul.mubr.f32.gmra.mrb[0].mxu0 %v2600
    %v2668 = vpop.f32.mrb[0].mxu0
    %v2669 = vadd.f32 %v2039, %v2668
    %v2670 = vpop.f32.mrb[0].mxu0
    %2671 = vdwg.mxu0
    %v2672 = vsel %vm2116, %v2669, -inf
    %2673 = vmax.xlane.f32.xlu0 %v2672
    %v2674 = vpop.xlane.xlu0 %2673
    %v2675 = vsub.f32 %v2669, %v2674
    %v2676 = vmul.f32 %v2675, 1.442695
    %v2677 = vpow.pop %v2676
    %v2678 = vsel %vm2116, %v2677, 0.0
    %2679 = vadd.xlane.f32.xlu0 %v2678
    %v2680 = vpop.xlane.xlu0 %2679
    %v2681 = vlog2.pop %v2680
    %v2682 = vmul.f32 %v2681, 0.6931472
    %v2683 = vadd.f32 %v2682, %v2674
    %v2684 = vsub.f32 %v2669, %v2683
    %s2685 = scalar_lea.vmem %s18, 4
    %2686 = vst [vmem:[%s2685] sm:$0x3] %v2684
    %vm2687 = vcmp.eq.f32.partialorder %v2669, %v2674
    %v2688 = vsel %vm2687, %v2132, 128
    %v2689 = vsel %vm2116, %v2688, 2147483647
    %v2690 = vand.u32 %v2689, 65535
    %v2691 = vshra.s32 %v2689, 16
    %v2692 = vcvt.s32.f32 %v2690
    %v2693 = vcvt.s32.f32 %v2691
    %2694 = vmin.xlane.f32.xlu0 %v2693
    %v2695 = vpop.xlane.xlu0 %2694
    %vm2696 = vcmp.eq.f32.partialorder %v2693, %v2695
    %v2697 = vsel %vm2696, %v2692, inf
    %2698 = vmin.xlane.f32.xlu0 %v2697
    %v2699 = vpop.xlane.xlu0 %2698
    %v2700 = vcvt.f32.s32 %v2699
    %v2701 = vcvt.f32.s32 %v2695
    %v2702 = vshll.u32 %v2701, 16
    %v2703 = vadd.s32 %v2702, %v2700
    %s2704 = scalar_lea.vmem %s1, 6
    %v2705 = vld [vmem:[%s2704] sm:$0x3]
    %2706 = vmatprep.subr.mxu0 0.0
    %2707 = vmatpush1.msra.mxu0 %v1843
    %2708 = vmatprep.subr.mxu0 0.0
    %2709 = vmatpush1.msra.mxu0 %v1844
    %2710 = vmatprep.subr.mxu0 0.0
    %2711 = vmatpush1.msra.mxu0 %v1845
    %2712 = vmatprep.subr.mxu0 0.0
    %2713 = vmatpush1.msra.mxu0 %v1846
    %2714 = vmatprep.subr.mxu0 0.0
    %2715 = vmatpush1.msra.mxu0 0.0
    %2716 = vmatprep.subr.mxu0 0.0
    %2717 = vmatpush1.msra.mxu0 0.0
    %2718 = vmatprep.subr.mxu0 0.0
    %2719 = vmatpush1.msra.mxu0 0.0
    %2720 = vmatprep.subr.mxu0 0.0
    %2721 = vmatpush1.msra.mxu0 0.0
    %2722 = vmatprep.subr.mxu0 0.0
    %2723 = vmatpush1.msra.mxu0 0.0
    %2724 = vmatprep.subr.mxu0 0.0
    %2725 = vmatpush1.msra.mxu0 0.0
    %2726 = vmatprep.subr.mxu0 0.0
    %2727 = vmatpush1.msra.mxu0 0.0
    %2728 = vmatprep.subr.mxu0 0.0
    %2729 = vmatpush1.msra.mxu0 0.0
    %2730 = vmatprep.subr.mxu0 0.0
    %2731 = vmatpush1.msra.mxu0 0.0
    %2732 = vmatprep.subr.mxu0 0.0
    %2733 = vmatpush1.msra.mxu0 0.0
    %2734 = vmatprep.subr.mxu0 0.0
    %2735 = vmatpush1.msra.mxu0 0.0
    %2736 = vmatprep.subr.mxu0 0.0
    %2737 = vmatpush1.msra.mxu0 0.0
    %2738 = vmatprep.subr.mxu0 0.0
    %2739 = vmatpush1.msra.mxu0 0.0
    %2740 = vmatprep.subr.mxu0 0.0
    %2741 = vmatpush1.msra.mxu0 0.0
    %2742 = vmatprep.subr.mxu0 0.0
    %2743 = vmatpush1.msra.mxu0 0.0
    %2744 = vmatprep.subr.mxu0 0.0
    %2745 = vmatpush1.msra.mxu0 0.0
    %2746 = vmatprep.subr.mxu0 0.0
    %2747 = vmatpush1.msra.mxu0 0.0
    %2748 = vmatprep.subr.mxu0 0.0
    %2749 = vmatpush1.msra.mxu0 0.0
    %2750 = vmatprep.subr.mxu0 0.0
    %2751 = vmatpush1.msra.mxu0 0.0
    %2752 = vmatprep.subr.mxu0 0.0
    %2753 = vmatpush1.msra.mxu0 0.0
    %2754 = vmatprep.subr.mxu0 0.0
    %2755 = vmatpush1.msra.mxu0 0.0
    %2756 = vmatprep.subr.mxu0 0.0
    %2757 = vmatpush1.msra.mxu0 0.0
    %2758 = vmatprep.subr.mxu0 0.0
    %2759 = vmatpush1.msra.mxu0 0.0
    %2760 = vmatprep.subr.mxu0 0.0
    %2761 = vmatpush1.msra.mxu0 0.0
    %2762 = vmatprep.subr.mxu0 0.0
    %2763 = vmatpush1.msra.mxu0 0.0
    %2764 = vmatprep.subr.mxu0 0.0
    %2765 = vmatpush1.msra.mxu0 0.0
    %2766 = vmatprep.subr.mxu0 0.0
    %2767 = vmatpush1.msra.mxu0 0.0
    %2768 = vmatprep.subr.mxu0 0.0
    %2769 = vmatpush1.msra.mxu0 0.0
    %2770 = vmatprep.mubr.f32.mxu0 0.0
    %2771 = vmatmul.mubr.f32.gmra.mrb[0].mxu0 %v2600
    %v2772 = vpop.f32.mrb[0].mxu0
    %v2773 = vadd.f32 0.0, %v2772
    %v2774 = vpop.f32.mrb[0].mxu0
    %2775 = vdwg.mxu0
    %v2777 = vsel %vm71, %v2705, 0
    %2779 = vmatprep.subr.mxu0 0.0
    %2780 = vmatpush1.msra.mxu0 %v1839
    %2781 = vmatprep.subr.mxu0 0.0
    %2782 = vmatpush1.msra.mxu0 %v1840
    %2783 = vmatprep.subr.mxu0 0.0
    %2784 = vmatpush1.msra.mxu0 %v1841
    %2785 = vmatprep.subr.mxu0 0.0
    %2786 = vmatpush1.msra.mxu0 %v1842
    %2787 = vmatprep.subr.mxu0 0.0
    %2788 = vmatpush1.msra.mxu0 0.0
    %2789 = vmatprep.subr.mxu0 0.0
    %2790 = vmatpush1.msra.mxu0 0.0
    %2791 = vmatprep.subr.mxu0 0.0
    %2792 = vmatpush1.msra.mxu0 0.0
    %2793 = vmatprep.subr.mxu0 0.0
    %2794 = vmatpush1.msra.mxu0 0.0
    %2795 = vmatprep.subr.mxu0 0.0
    %2796 = vmatpush1.msra.mxu0 0.0
    %2797 = vmatprep.subr.mxu0 0.0
    %2798 = vmatpush1.msra.mxu0 0.0
    %2799 = vmatprep.subr.mxu0 0.0
    %2800 = vmatpush1.msra.mxu0 0.0
    %2801 = vmatprep.subr.mxu0 0.0
    %2802 = vmatpush1.msra.mxu0 0.0
    %2803 = vmatprep.subr.mxu0 0.0
    %2804 = vmatpush1.msra.mxu0 0.0
    %2805 = vmatprep.subr.mxu0 0.0
    %2806 = vmatpush1.msra.mxu0 0.0
    %2807 = vmatprep.subr.mxu0 0.0
    %2808 = vmatpush1.msra.mxu0 0.0
    %2809 = vmatprep.subr.mxu0 0.0
    %2810 = vmatpush1.msra.mxu0 0.0
    %2811 = vmatprep.subr.mxu0 0.0
    %2812 = vmatpush1.msra.mxu0 0.0
    %2813 = vmatprep.subr.mxu0 0.0
    %2814 = vmatpush1.msra.mxu0 0.0
    %2815 = vmatprep.subr.mxu0 0.0
    %2816 = vmatpush1.msra.mxu0 0.0
    %2817 = vmatprep.subr.mxu0 0.0
    %2818 = vmatpush1.msra.mxu0 0.0
    %2819 = vmatprep.subr.mxu0 0.0
    %2820 = vmatpush1.msra.mxu0 0.0
    %2821 = vmatprep.subr.mxu0 0.0
    %2822 = vmatpush1.msra.mxu0 0.0
    %2823 = vmatprep.subr.mxu0 0.0
    %2824 = vmatpush1.msra.mxu0 0.0
    %2825 = vmatprep.subr.mxu0 0.0
    %2826 = vmatpush1.msra.mxu0 0.0
    %2827 = vmatprep.subr.mxu0 0.0
    %2828 = vmatpush1.msra.mxu0 0.0
    %2829 = vmatprep.subr.mxu0 0.0
    %2830 = vmatpush1.msra.mxu0 0.0
    %2831 = vmatprep.subr.mxu0 0.0
    %2832 = vmatpush1.msra.mxu0 0.0
    %2833 = vmatprep.subr.mxu0 0.0
    %2834 = vmatpush1.msra.mxu0 0.0
    %2835 = vmatprep.subr.mxu0 0.0
    %2836 = vmatpush1.msra.mxu0 0.0
    %2837 = vmatprep.subr.mxu0 0.0
    %2838 = vmatpush1.msra.mxu0 0.0
    %2839 = vmatprep.subr.mxu0 0.0
    %2840 = vmatpush1.msra.mxu0 0.0
    %2841 = vmatprep.subr.mxu0 0.0
    %2842 = vmatpush1.msra.mxu0 0.0
    %2843 = vmatprep.mubr.f32.mxu0 0.0
    %2844 = vmatmul.mubr.f32.gmra.mrb[0].mxu0 %v2777
    %v2845 = vpop.f32.mrb[0].mxu0
    %v2846 = vadd.f32 %v2773, %v2845
    %v2847 = vpop.f32.mrb[0].mxu0
    %2848 = vdwg.mxu0
    %v2849 = vadd.f32 %v2846, %v2004
    %v2850 = vxor.u32 %v2849, 2147483648
    %v2851 = vmul.f32 %v2850, 1.442695
    %v2852 = vpow.pop %v2851
    %v2853 = vadd.f32 %v2852, 1.0
    %v2854 = vrcp.pop %v2853
    %v2855 = vmul.f32 1.0, %v2854
    %v2856 = vtanh.pop %v2849
    %v2857 = vmul.f32 %v2855, %v2590
    %2859 = vrot.lane.b32.xlu0 %v2856, 64
    %v2860 = vpop.permute.xlu0 %2859
    %v2862 = vmul.f32 %v2855, %v2860
    %2864 = vrot.lane.b32.xlu0 %v2862, 32
    %v2865 = vpop.permute.xlu0 %2864
    %v2867 = vadd.f32 %v2857, %v2865
    %v2868 = vtanh.pop %v2867
    %2870 = vrot.lane.b32.xlu0 %v2868, 64
    %v2871 = vpop.permute.xlu0 %2870
    %v2873 = vmul.f32 %v2855, %v2871
    %2875 = vrot.lane.b32.xlu0 %v2873, 32
    %v2876 = vpop.permute.xlu0 %2875
    %v2877 = vsel %vm71, %v2876, 0
    %2879 = vmatprep.subr.mxu0 0.0
    %2880 = vmatpush1.msra.mxu0 %v1848
    %2881 = vmatprep.subr.mxu0 0.0
    %2882 = vmatpush1.msra.mxu0 %v1849
    %2883 = vmatprep.subr.mxu0 0.0
    %2884 = vmatpush1.msra.mxu0 %v1850
    %2885 = vmatprep.subr.mxu0 0.0
    %2886 = vmatpush1.msra.mxu0 %v1851
    %2887 = vmatprep.subr.mxu0 0.0
    %2888 = vmatpush1.msra.mxu0 0.0
    %2889 = vmatprep.subr.mxu0 0.0
    %2890 = vmatpush1.msra.mxu0 0.0
    %2891 = vmatprep.subr.mxu0 0.0
    %2892 = vmatpush1.msra.mxu0 0.0
    %2893 = vmatprep.subr.mxu0 0.0
    %2894 = vmatpush1.msra.mxu0 0.0
    %2895 = vmatprep.subr.mxu0 0.0
    %2896 = vmatpush1.msra.mxu0 0.0
    %2897 = vmatprep.subr.mxu0 0.0
    %2898 = vmatpush1.msra.mxu0 0.0
    %2899 = vmatprep.subr.mxu0 0.0
    %2900 = vmatpush1.msra.mxu0 0.0
    %2901 = vmatprep.subr.mxu0 0.0
    %2902 = vmatpush1.msra.mxu0 0.0
    %2903 = vmatprep.subr.mxu0 0.0
    %2904 = vmatpush1.msra.mxu0 0.0
    %2905 = vmatprep.subr.mxu0 0.0
    %2906 = vmatpush1.msra.mxu0 0.0
    %2907 = vmatprep.subr.mxu0 0.0
    %2908 = vmatpush1.msra.mxu0 0.0
    %2909 = vmatprep.subr.mxu0 0.0
    %2910 = vmatpush1.msra.mxu0 0.0
    %2911 = vmatprep.subr.mxu0 0.0
    %2912 = vmatpush1.msra.mxu0 0.0
    %2913 = vmatprep.subr.mxu0 0.0
    %2914 = vmatpush1.msra.mxu0 0.0
    %2915 = vmatprep.subr.mxu0 0.0
    %2916 = vmatpush1.msra.mxu0 0.0
    %2917 = vmatprep.subr.mxu0 0.0
    %2918 = vmatpush1.msra.mxu0 0.0
    %2919 = vmatprep.subr.mxu0 0.0
    %2920 = vmatpush1.msra.mxu0 0.0
    %2921 = vmatprep.subr.mxu0 0.0
    %2922 = vmatpush1.msra.mxu0 0.0
    %2923 = vmatprep.subr.mxu0 0.0
    %2924 = vmatpush1.msra.mxu0 0.0
    %2925 = vmatprep.subr.mxu0 0.0
    %2926 = vmatpush1.msra.mxu0 0.0
    %2927 = vmatprep.subr.mxu0 0.0
    %2928 = vmatpush1.msra.mxu0 0.0
    %2929 = vmatprep.subr.mxu0 0.0
    %2930 = vmatpush1.msra.mxu0 0.0
    %2931 = vmatprep.subr.mxu0 0.0
    %2932 = vmatpush1.msra.mxu0 0.0
    %2933 = vmatprep.subr.mxu0 0.0
    %2934 = vmatpush1.msra.mxu0 0.0
    %2935 = vmatprep.subr.mxu0 0.0
    %2936 = vmatpush1.msra.mxu0 0.0
    %2937 = vmatprep.subr.mxu0 0.0
    %2938 = vmatpush1.msra.mxu0 0.0
    %2939 = vmatprep.subr.mxu0 0.0
    %2940 = vmatpush1.msra.mxu0 0.0
    %2941 = vmatprep.subr.mxu0 0.0
    %2942 = vmatpush1.msra.mxu0 0.0
    %2943 = vmatprep.mubr.f32.mxu0 0.0
    %2944 = vmatmul.mubr.f32.gmra.mrb[0].mxu0 %v2877
    %v2945 = vpop.f32.mrb[0].mxu0
    %v2946 = vadd.f32 %v2039, %v2945
    %v2947 = vpop.f32.mrb[0].mxu0
    %2948 = vdwg.mxu0
    %v2949 = vsel %vm2116, %v2946, -inf
    %2950 = vmax.xlane.f32.xlu0 %v2949
    %v2951 = vpop.xlane.xlu0 %2950
    %v2952 = vsub.f32 %v2946, %v2951
    %v2953 = vmul.f32 %v2952, 1.442695
    %v2954 = vpow.pop %v2953
    %v2955 = vsel %vm2116, %v2954, 0.0
    %2956 = vadd.xlane.f32.xlu0 %v2955
    %v2957 = vpop.xlane.xlu0 %2956
    %v2958 = vlog2.pop %v2957
    %v2959 = vmul.f32 %v2958, 0.6931472
    %v2960 = vadd.f32 %v2959, %v2951
    %v2961 = vsub.f32 %v2946, %v2960
    %s2962 = scalar_lea.vmem %s18, 6
    %2963 = vst [vmem:[%s2962] sm:$0x3] %v2961
    %vm2964 = vcmp.eq.f32.partialorder %v2946, %v2951
    %v2965 = vsel %vm2964, %v2132, 128
    %v2966 = vsel %vm2116, %v2965, 2147483647
    %v2967 = vand.u32 %v2966, 65535
    %v2968 = vshra.s32 %v2966, 16
    %v2969 = vcvt.s32.f32 %v2967
    %v2970 = vcvt.s32.f32 %v2968
    %2971 = vmin.xlane.f32.xlu0 %v2970
    %v2972 = vpop.xlane.xlu0 %2971
    %vm2973 = vcmp.eq.f32.partialorder %v2970, %v2972
    %v2974 = vsel %vm2973, %v2969, inf
    %2975 = vmin.xlane.f32.xlu0 %v2974
    %v2976 = vpop.xlane.xlu0 %2975
    %v2977 = vcvt.f32.s32 %v2976
    %v2978 = vcvt.f32.s32 %v2972
    %v2979 = vshll.u32 %v2978, 16
    %v2980 = vadd.s32 %v2979, %v2977
    %s2981 = scalar_lea.vmem %s1, 8
    %v2982 = vld [vmem:[%s2981] sm:$0x3]
    %2983 = vmatprep.subr.mxu0 0.0
    %2984 = vmatpush1.msra.mxu0 %v1843
    %2985 = vmatprep.subr.mxu0 0.0
    %2986 = vmatpush1.msra.mxu0 %v1844
    %2987 = vmatprep.subr.mxu0 0.0
    %2988 = vmatpush1.msra.mxu0 %v1845
    %2989 = vmatprep.subr.mxu0 0.0
    %2990 = vmatpush1.msra.mxu0 %v1846
    %2991 = vmatprep.subr.mxu0 0.0
    %2992 = vmatpush1.msra.mxu0 0.0
    %2993 = vmatprep.subr.mxu0 0.0
    %2994 = vmatpush1.msra.mxu0 0.0
    %2995 = vmatprep.subr.mxu0 0.0
    %2996 = vmatpush1.msra.mxu0 0.0
    %2997 = vmatprep.subr.mxu0 0.0
    %2998 = vmatpush1.msra.mxu0 0.0
    %2999 = vmatprep.subr.mxu0 0.0
    %3000 = vmatpush1.msra.mxu0 0.0
    %3001 = vmatprep.subr.mxu0 0.0
    %3002 = vmatpush1.msra.mxu0 0.0
    %3003 = vmatprep.subr.mxu0 0.0
    %3004 = vmatpush1.msra.mxu0 0.0
    %3005 = vmatprep.subr.mxu0 0.0
    %3006 = vmatpush1.msra.mxu0 0.0
    %3007 = vmatprep.subr.mxu0 0.0
    %3008 = vmatpush1.msra.mxu0 0.0
    %3009 = vmatprep.subr.mxu0 0.0
    %3010 = vmatpush1.msra.mxu0 0.0
    %3011 = vmatprep.subr.mxu0 0.0
    %3012 = vmatpush1.msra.mxu0 0.0
    %3013 = vmatprep.subr.mxu0 0.0
    %3014 = vmatpush1.msra.mxu0 0.0
    %3015 = vmatprep.subr.mxu0 0.0
    %3016 = vmatpush1.msra.mxu0 0.0
    %3017 = vmatprep.subr.mxu0 0.0
    %3018 = vmatpush1.msra.mxu0 0.0
    %3019 = vmatprep.subr.mxu0 0.0
    %3020 = vmatpush1.msra.mxu0 0.0
    %3021 = vmatprep.subr.mxu0 0.0
    %3022 = vmatpush1.msra.mxu0 0.0
    %3023 = vmatprep.subr.mxu0 0.0
    %3024 = vmatpush1.msra.mxu0 0.0
    %3025 = vmatprep.subr.mxu0 0.0
    %3026 = vmatpush1.msra.mxu0 0.0
    %3027 = vmatprep.subr.mxu0 0.0
    %3028 = vmatpush1.msra.mxu0 0.0
    %3029 = vmatprep.subr.mxu0 0.0
    %3030 = vmatpush1.msra.mxu0 0.0
    %3031 = vmatprep.subr.mxu0 0.0
    %3032 = vmatpush1.msra.mxu0 0.0
    %3033 = vmatprep.subr.mxu0 0.0
    %3034 = vmatpush1.msra.mxu0 0.0
    %3035 = vmatprep.subr.mxu0 0.0
    %3036 = vmatpush1.msra.mxu0 0.0
    %3037 = vmatprep.subr.mxu0 0.0
    %3038 = vmatpush1.msra.mxu0 0.0
    %3039 = vmatprep.subr.mxu0 0.0
    %3040 = vmatpush1.msra.mxu0 0.0
    %3041 = vmatprep.subr.mxu0 0.0
    %3042 = vmatpush1.msra.mxu0 0.0
    %3043 = vmatprep.subr.mxu0 0.0
    %3044 = vmatpush1.msra.mxu0 0.0
    %3045 = vmatprep.subr.mxu0 0.0
    %3046 = vmatpush1.msra.mxu0 0.0
    %3047 = vmatprep.mubr.f32.mxu0 0.0
    %3048 = vmatmul.mubr.f32.gmra.mrb[0].mxu0 %v2877
    %v3049 = vpop.f32.mrb[0].mxu0
    %v3050 = vadd.f32 0.0, %v3049
    %v3051 = vpop.f32.mrb[0].mxu0
    %3052 = vdwg.mxu0
    %v3054 = vsel %vm71, %v2982, 0
    %3056 = vmatprep.subr.mxu0 0.0
    %3057 = vmatpush1.msra.mxu0 %v1839
    %3058 = vmatprep.subr.mxu0 0.0
    %3059 = vmatpush1.msra.mxu0 %v1840
    %3060 = vmatprep.subr.mxu0 0.0
    %3061 = vmatpush1.msra.mxu0 %v1841
    %3062 = vmatprep.subr.mxu0 0.0
    %3063 = vmatpush1.msra.mxu0 %v1842
    %3064 = vmatprep.subr.mxu0 0.0
    %3065 = vmatpush1.msra.mxu0 0.0
    %3066 = vmatprep.subr.mxu0 0.0
    %3067 = vmatpush1.msra.mxu0 0.0
    %3068 = vmatprep.subr.mxu0 0.0
    %3069 = vmatpush1.msra.mxu0 0.0
    %3070 = vmatprep.subr.mxu0 0.0
    %3071 = vmatpush1.msra.mxu0 0.0
    %3072 = vmatprep.subr.mxu0 0.0
    %3073 = vmatpush1.msra.mxu0 0.0
    %3074 = vmatprep.subr.mxu0 0.0
    %3075 = vmatpush1.msra.mxu0 0.0
    %3076 = vmatprep.subr.mxu0 0.0
    %3077 = vmatpush1.msra.mxu0 0.0
    %3078 = vmatprep.subr.mxu0 0.0
    %3079 = vmatpush1.msra.mxu0 0.0
    %3080 = vmatprep.subr.mxu0 0.0
    %3081 = vmatpush1.msra.mxu0 0.0
    %3082 = vmatprep.subr.mxu0 0.0
    %3083 = vmatpush1.msra.mxu0 0.0
    %3084 = vmatprep.subr.mxu0 0.0
    %3085 = vmatpush1.msra.mxu0 0.0
    %3086 = vmatprep.subr.mxu0 0.0
    %3087 = vmatpush1.msra.mxu0 0.0
    %3088 = vmatprep.subr.mxu0 0.0
    %3089 = vmatpush1.msra.mxu0 0.0
    %3090 = vmatprep.subr.mxu0 0.0
    %3091 = vmatpush1.msra.mxu0 0.0
    %3092 = vmatprep.subr.mxu0 0.0
    %3093 = vmatpush1.msra.mxu0 0.0
    %3094 = vmatprep.subr.mxu0 0.0
    %3095 = vmatpush1.msra.mxu0 0.0
    %3096 = vmatprep.subr.mxu0 0.0
    %3097 = vmatpush1.msra.mxu0 0.0
    %3098 = vmatprep.subr.mxu0 0.0
    %3099 = vmatpush1.msra.mxu0 0.0
    %3100 = vmatprep.subr.mxu0 0.0
    %3101 = vmatpush1.msra.mxu0 0.0
    %3102 = vmatprep.subr.mxu0 0.0
    %3103 = vmatpush1.msra.mxu0 0.0
    %3104 = vmatprep.subr.mxu0 0.0
    %3105 = vmatpush1.msra.mxu0 0.0
    %3106 = vmatprep.subr.mxu0 0.0
    %3107 = vmatpush1.msra.mxu0 0.0
    %3108 = vmatprep.subr.mxu0 0.0
    %3109 = vmatpush1.msra.mxu0 0.0
    %3110 = vmatprep.subr.mxu0 0.0
    %3111 = vmatpush1.msra.mxu0 0.0
    %3112 = vmatprep.subr.mxu0 0.0
    %3113 = vmatpush1.msra.mxu0 0.0
    %3114 = vmatprep.subr.mxu0 0.0
    %3115 = vmatpush1.msra.mxu0 0.0
    %3116 = vmatprep.subr.mxu0 0.0
    %3117 = vmatpush1.msra.mxu0 0.0
    %3118 = vmatprep.subr.mxu0 0.0
    %3119 = vmatpush1.msra.mxu0 0.0
    %3120 = vmatprep.mubr.f32.mxu0 0.0
    %3121 = vmatmul.mubr.f32.gmra.mrb[0].mxu0 %v3054
    %v3122 = vpop.f32.mrb[0].mxu0
    %v3123 = vadd.f32 %v3050, %v3122
    %v3124 = vpop.f32.mrb[0].mxu0
    %3125 = vdwg.mxu0
    %v3126 = vadd.f32 %v3123, %v2004
    %v3127 = vxor.u32 %v3126, 2147483648
    %v3128 = vmul.f32 %v3127, 1.442695
    %v3129 = vpow.pop %v3128
    %v3130 = vadd.f32 %v3129, 1.0
    %v3131 = vrcp.pop %v3130
    %v3132 = vmul.f32 1.0, %v3131
    %v3133 = vtanh.pop %v3126
    %v3134 = vmul.f32 %v3132, %v2867
    %3136 = vrot.lane.b32.xlu0 %v3133, 64
    %v3137 = vpop.permute.xlu0 %3136
    %v3139 = vmul.f32 %v3132, %v3137
    %3141 = vrot.lane.b32.xlu0 %v3139, 32
    %v3142 = vpop.permute.xlu0 %3141
    %v3144 = vadd.f32 %v3134, %v3142
    %v3145 = vtanh.pop %v3144
    %3147 = vrot.lane.b32.xlu0 %v3145, 64
    %v3148 = vpop.permute.xlu0 %3147
    %v3150 = vmul.f32 %v3132, %v3148
    %3152 = vrot.lane.b32.xlu0 %v3150, 32
    %v3153 = vpop.permute.xlu0 %3152
    %v3154 = vsel %vm71, %v3153, 0
    %3156 = vmatprep.subr.mxu0 0.0
    %3157 = vmatpush1.msra.mxu0 %v1848
    %3158 = vmatprep.subr.mxu0 0.0
    %3159 = vmatpush1.msra.mxu0 %v1849
    %3160 = vmatprep.subr.mxu0 0.0
    %3161 = vmatpush1.msra.mxu0 %v1850
    %3162 = vmatprep.subr.mxu0 0.0
    %3163 = vmatpush1.msra.mxu0 %v1851
    %3164 = vmatprep.subr.mxu0 0.0
    %3165 = vmatpush1.msra.mxu0 0.0
    %3166 = vmatprep.subr.mxu0 0.0
    %3167 = vmatpush1.msra.mxu0 0.0
    %3168 = vmatprep.subr.mxu0 0.0
    %3169 = vmatpush1.msra.mxu0 0.0
    %3170 = vmatprep.subr.mxu0 0.0
    %3171 = vmatpush1.msra.mxu0 0.0
    %3172 = vmatprep.subr.mxu0 0.0
    %3173 = vmatpush1.msra.mxu0 0.0
    %3174 = vmatprep.subr.mxu0 0.0
    %3175 = vmatpush1.msra.mxu0 0.0
    %3176 = vmatprep.subr.mxu0 0.0
    %3177 = vmatpush1.msra.mxu0 0.0
    %3178 = vmatprep.subr.mxu0 0.0
    %3179 = vmatpush1.msra.mxu0 0.0
    %3180 = vmatprep.subr.mxu0 0.0
    %3181 = vmatpush1.msra.mxu0 0.0
    %3182 = vmatprep.subr.mxu0 0.0
    %3183 = vmatpush1.msra.mxu0 0.0
    %3184 = vmatprep.subr.mxu0 0.0
    %3185 = vmatpush1.msra.mxu0 0.0
    %3186 = vmatprep.subr.mxu0 0.0
    %3187 = vmatpush1.msra.mxu0 0.0
    %3188 = vmatprep.subr.mxu0 0.0
    %3189 = vmatpush1.msra.mxu0 0.0
    %3190 = vmatprep.subr.mxu0 0.0
    %3191 = vmatpush1.msra.mxu0 0.0
    %3192 = vmatprep.subr.mxu0 0.0
    %3193 = vmatpush1.msra.mxu0 0.0
    %3194 = vmatprep.subr.mxu0 0.0
    %3195 = vmatpush1.msra.mxu0 0.0
    %3196 = vmatprep.subr.mxu0 0.0
    %3197 = vmatpush1.msra.mxu0 0.0
    %3198 = vmatprep.subr.mxu0 0.0
    %3199 = vmatpush1.msra.mxu0 0.0
    %3200 = vmatprep.subr.mxu0 0.0
    %3201 = vmatpush1.msra.mxu0 0.0
    %3202 = vmatprep.subr.mxu0 0.0
    %3203 = vmatpush1.msra.mxu0 0.0
    %3204 = vmatprep.subr.mxu0 0.0
    %3205 = vmatpush1.msra.mxu0 0.0
    %3206 = vmatprep.subr.mxu0 0.0
    %3207 = vmatpush1.msra.mxu0 0.0
    %3208 = vmatprep.subr.mxu0 0.0
    %3209 = vmatpush1.msra.mxu0 0.0
    %3210 = vmatprep.subr.mxu0 0.0
    %3211 = vmatpush1.msra.mxu0 0.0
    %3212 = vmatprep.subr.mxu0 0.0
    %3213 = vmatpush1.msra.mxu0 0.0
    %3214 = vmatprep.subr.mxu0 0.0
    %3215 = vmatpush1.msra.mxu0 0.0
    %3216 = vmatprep.subr.mxu0 0.0
    %3217 = vmatpush1.msra.mxu0 0.0
    %3218 = vmatprep.subr.mxu0 0.0
    %3219 = vmatpush1.msra.mxu0 0.0
    %3220 = vmatprep.mubr.f32.mxu0 0.0
    %3221 = vmatmul.mubr.f32.gmra.mrb[0].mxu0 %v3154
    %v3222 = vpop.f32.mrb[0].mxu0
    %v3223 = vadd.f32 %v2039, %v3222
    %v3224 = vpop.f32.mrb[0].mxu0
    %3225 = vdwg.mxu0
    %v3226 = vsel %vm2116, %v3223, -inf
    %3227 = vmax.xlane.f32.xlu0 %v3226
    %v3228 = vpop.xlane.xlu0 %3227
    %v3229 = vsub.f32 %v3223, %v3228
    %v3230 = vmul.f32 %v3229, 1.442695
    %v3231 = vpow.pop %v3230
    %v3232 = vsel %vm2116, %v3231, 0.0
    %3233 = vadd.xlane.f32.xlu0 %v3232
    %v3234 = vpop.xlane.xlu0 %3233
    %v3235 = vlog2.pop %v3234
    %v3236 = vmul.f32 %v3235, 0.6931472
    %v3237 = vadd.f32 %v3236, %v3228
    %v3238 = vsub.f32 %v3223, %v3237
    %s3239 = scalar_lea.vmem %s18, 8
    %3240 = vst [vmem:[%s3239] sm:$0x3] %v3238
    %vm3241 = vcmp.eq.f32.partialorder %v3223, %v3228
    %v3242 = vsel %vm3241, %v2132, 128
    %v3243 = vsel %vm2116, %v3242, 2147483647
    %v3244 = vand.u32 %v3243, 65535
    %v3245 = vshra.s32 %v3243, 16
    %v3246 = vcvt.s32.f32 %v3244
    %v3247 = vcvt.s32.f32 %v3245
    %3248 = vmin.xlane.f32.xlu0 %v3247
    %v3249 = vpop.xlane.xlu0 %3248
    %vm3250 = vcmp.eq.f32.partialorder %v3247, %v3249
    %v3251 = vsel %vm3250, %v3246, inf
    %3252 = vmin.xlane.f32.xlu0 %v3251
    %v3253 = vpop.xlane.xlu0 %3252
    %v3254 = vcvt.f32.s32 %v3253
    %v3255 = vcvt.f32.s32 %v3249
    %v3256 = vshll.u32 %v3255, 16
    %v3257 = vadd.s32 %v3256, %v3254
    %s3258 = scalar_lea.vmem %s1, 10
    %v3259 = vld [vmem:[%s3258] sm:$0x3]
    %3260 = vmatprep.subr.mxu0 0.0
    %3261 = vmatpush1.msra.mxu0 %v1843
    %3262 = vmatprep.subr.mxu0 0.0
    %3263 = vmatpush1.msra.mxu0 %v1844
    %3264 = vmatprep.subr.mxu0 0.0
    %3265 = vmatpush1.msra.mxu0 %v1845
    %3266 = vmatprep.subr.mxu0 0.0
    %3267 = vmatpush1.msra.mxu0 %v1846
    %3268 = vmatprep.subr.mxu0 0.0
    %3269 = vmatpush1.msra.mxu0 0.0
    %3270 = vmatprep.subr.mxu0 0.0
    %3271 = vmatpush1.msra.mxu0 0.0
    %3272 = vmatprep.subr.mxu0 0.0
    %3273 = vmatpush1.msra.mxu0 0.0
    %3274 = vmatprep.subr.mxu0 0.0
    %3275 = vmatpush1.msra.mxu0 0.0
    %3276 = vmatprep.subr.mxu0 0.0
    %3277 = vmatpush1.msra.mxu0 0.0
    %3278 = vmatprep.subr.mxu0 0.0
    %3279 = vmatpush1.msra.mxu0 0.0
    %3280 = vmatprep.subr.mxu0 0.0
    %3281 = vmatpush1.msra.mxu0 0.0
    %3282 = vmatprep.subr.mxu0 0.0
    %3283 = vmatpush1.msra.mxu0 0.0
    %3284 = vmatprep.subr.mxu0 0.0
    %3285 = vmatpush1.msra.mxu0 0.0
    %3286 = vmatprep.subr.mxu0 0.0
    %3287 = vmatpush1.msra.mxu0 0.0
    %3288 = vmatprep.subr.mxu0 0.0
    %3289 = vmatpush1.msra.mxu0 0.0
    %3290 = vmatprep.subr.mxu0 0.0
    %3291 = vmatpush1.msra.mxu0 0.0
    %3292 = vmatprep.subr.mxu0 0.0
    %3293 = vmatpush1.msra.mxu0 0.0
    %3294 = vmatprep.subr.mxu0 0.0
    %3295 = vmatpush1.msra.mxu0 0.0
    %3296 = vmatprep.subr.mxu0 0.0
    %3297 = vmatpush1.msra.mxu0 0.0
    %3298 = vmatprep.subr.mxu0 0.0
    %3299 = vmatpush1.msra.mxu0 0.0
    %3300 = vmatprep.subr.mxu0 0.0
    %3301 = vmatpush1.msra.mxu0 0.0
    %3302 = vmatprep.subr.mxu0 0.0
    %3303 = vmatpush1.msra.mxu0 0.0
    %3304 = vmatprep.subr.mxu0 0.0
    %3305 = vmatpush1.msra.mxu0 0.0
    %3306 = vmatprep.subr.mxu0 0.0
    %3307 = vmatpush1.msra.mxu0 0.0
    %3308 = vmatprep.subr.mxu0 0.0
    %3309 = vmatpush1.msra.mxu0 0.0
    %3310 = vmatprep.subr.mxu0 0.0
    %3311 = vmatpush1.msra.mxu0 0.0
    %3312 = vmatprep.subr.mxu0 0.0
    %3313 = vmatpush1.msra.mxu0 0.0
    %3314 = vmatprep.subr.mxu0 0.0
    %3315 = vmatpush1.msra.mxu0 0.0
    %3316 = vmatprep.subr.mxu0 0.0
    %3317 = vmatpush1.msra.mxu0 0.0
    %3318 = vmatprep.subr.mxu0 0.0
    %3319 = vmatpush1.msra.mxu0 0.0
    %3320 = vmatprep.subr.mxu0 0.0
    %3321 = vmatpush1.msra.mxu0 0.0
    %3322 = vmatprep.subr.mxu0 0.0
    %3323 = vmatpush1.msra.mxu0 0.0
    %3324 = vmatprep.mubr.f32.mxu0 0.0
    %3325 = vmatmul.mubr.f32.gmra.mrb[0].mxu0 %v3154
    %v3326 = vpop.f32.mrb[0].mxu0
    %v3327 = vadd.f32 0.0, %v3326
    %v3328 = vpop.f32.mrb[0].mxu0
    %3329 = vdwg.mxu0
    %v3331 = vsel %vm71, %v3259, 0
    %3333 = vmatprep.subr.mxu0 0.0
    %3334 = vmatpush1.msra.mxu0 %v1839
    %3335 = vmatprep.subr.mxu0 0.0
    %3336 = vmatpush1.msra.mxu0 %v1840
    %3337 = vmatprep.subr.mxu0 0.0
    %3338 = vmatpush1.msra.mxu0 %v1841
    %3339 = vmatprep.subr.mxu0 0.0
    %3340 = vmatpush1.msra.mxu0 %v1842
    %3341 = vmatprep.subr.mxu0 0.0
    %3342 = vmatpush1.msra.mxu0 0.0
    %3343 = vmatprep.subr.mxu0 0.0
    %3344 = vmatpush1.msra.mxu0 0.0
    %3345 = vmatprep.subr.mxu0 0.0
    %3346 = vmatpush1.msra.mxu0 0.0
    %3347 = vmatprep.subr.mxu0 0.0
    %3348 = vmatpush1.msra.mxu0 0.0
    %3349 = vmatprep.subr.mxu0 0.0
    %3350 = vmatpush1.msra.mxu0 0.0
    %3351 = vmatprep.subr.mxu0 0.0
    %3352 = vmatpush1.msra.mxu0 0.0
    %3353 = vmatprep.subr.mxu0 0.0
    %3354 = vmatpush1.msra.mxu0 0.0
    %3355 = vmatprep.subr.mxu0 0.0
    %3356 = vmatpush1.msra.mxu0 0.0
    %3357 = vmatprep.subr.mxu0 0.0
    %3358 = vmatpush1.msra.mxu0 0.0
    %3359 = vmatprep.subr.mxu0 0.0
    %3360 = vmatpush1.msra.mxu0 0.0
    %3361 = vmatprep.subr.mxu0 0.0
    %3362 = vmatpush1.msra.mxu0 0.0
    %3363 = vmatprep.subr.mxu0 0.0
    %3364 = vmatpush1.msra.mxu0 0.0
    %3365 = vmatprep.subr.mxu0 0.0
    %3366 = vmatpush1.msra.mxu0 0.0
    %3367 = vmatprep.subr.mxu0 0.0
    %3368 = vmatpush1.msra.mxu0 0.0
    %3369 = vmatprep.subr.mxu0 0.0
    %3370 = vmatpush1.msra.mxu0 0.0
    %3371 = vmatprep.subr.mxu0 0.0
    %3372 = vmatpush1.msra.mxu0 0.0
    %3373 = vmatprep.subr.mxu0 0.0
    %3374 = vmatpush1.msra.mxu0 0.0
    %3375 = vmatprep.subr.mxu0 0.0
    %3376 = vmatpush1.msra.mxu0 0.0
    %3377 = vmatprep.subr.mxu0 0.0
    %3378 = vmatpush1.msra.mxu0 0.0
    %3379 = vmatprep.subr.mxu0 0.0
    %3380 = vmatpush1.msra.mxu0 0.0
    %3381 = vmatprep.subr.mxu0 0.0
    %3382 = vmatpush1.msra.mxu0 0.0
    %3383 = vmatprep.subr.mxu0 0.0
    %3384 = vmatpush1.msra.mxu0 0.0
    %3385 = vmatprep.subr.mxu0 0.0
    %3386 = vmatpush1.msra.mxu0 0.0
    %3387 = vmatprep.subr.mxu0 0.0
    %3388 = vmatpush1.msra.mxu0 0.0
    %3389 = vmatprep.subr.mxu0 0.0
    %3390 = vmatpush1.msra.mxu0 0.0
    %3391 = vmatprep.subr.mxu0 0.0
    %3392 = vmatpush1.msra.mxu0 0.0
    %3393 = vmatprep.subr.mxu0 0.0
    %3394 = vmatpush1.msra.mxu0 0.0
    %3395 = vmatprep.subr.mxu0 0.0
    %3396 = vmatpush1.msra.mxu0 0.0
    %3397 = vmatprep.mubr.f32.mxu0 0.0
    %3398 = vmatmul.mubr.f32.gmra.mrb[0].mxu0 %v3331
    %v3399 = vpop.f32.mrb[0].mxu0
    %v3400 = vadd.f32 %v3327, %v3399
    %v3401 = vpop.f32.mrb[0].mxu0
    %3402 = vdwg.mxu0
    %v3403 = vadd.f32 %v3400, %v2004
    %v3404 = vxor.u32 %v3403, 2147483648
    %v3405 = vmul.f32 %v3404, 1.442695
    %v3406 = vpow.pop %v3405
    %v3407 = vadd.f32 %v3406, 1.0
    %v3408 = vrcp.pop %v3407
    %v3409 = vmul.f32 1.0, %v3408
    %v3410 = vtanh.pop %v3403
    %v3411 = vmul.f32 %v3409, %v3144
    %3413 = vrot.lane.b32.xlu0 %v3410, 64
    %v3414 = vpop.permute.xlu0 %3413
    %v3416 = vmul.f32 %v3409, %v3414
    %3418 = vrot.lane.b32.xlu0 %v3416, 32
    %v3419 = vpop.permute.xlu0 %3418
    %v3421 = vadd.f32 %v3411, %v3419
    %v3422 = vtanh.pop %v3421
    %3424 = vrot.lane.b32.xlu0 %v3422, 64
    %v3425 = vpop.permute.xlu0 %3424
    %v3427 = vmul.f32 %v3409, %v3425
    %3429 = vrot.lane.b32.xlu0 %v3427, 32
    %v3430 = vpop.permute.xlu0 %3429
    %v3431 = vsel %vm71, %v3430, 0
    %3433 = vmatprep.subr.mxu0 0.0
    %3434 = vmatpush1.msra.mxu0 %v1848
    %3435 = vmatprep.subr.mxu0 0.0
    %3436 = vmatpush1.msra.mxu0 %v1849
    %3437 = vmatprep.subr.mxu0 0.0
    %3438 = vmatpush1.msra.mxu0 %v1850
    %3439 = vmatprep.subr.mxu0 0.0
    %3440 = vmatpush1.msra.mxu0 %v1851
    %3441 = vmatprep.subr.mxu0 0.0
    %3442 = vmatpush1.msra.mxu0 0.0
    %3443 = vmatprep.subr.mxu0 0.0
    %3444 = vmatpush1.msra.mxu0 0.0
    %3445 = vmatprep.subr.mxu0 0.0
    %3446 = vmatpush1.msra.mxu0 0.0
    %3447 = vmatprep.subr.mxu0 0.0
    %3448 = vmatpush1.msra.mxu0 0.0
    %3449 = vmatprep.subr.mxu0 0.0
    %3450 = vmatpush1.msra.mxu0 0.0
    %3451 = vmatprep.subr.mxu0 0.0
    %3452 = vmatpush1.msra.mxu0 0.0
    %3453 = vmatprep.subr.mxu0 0.0
    %3454 = vmatpush1.msra.mxu0 0.0
    %3455 = vmatprep.subr.mxu0 0.0
    %3456 = vmatpush1.msra.mxu0 0.0
    %3457 = vmatprep.subr.mxu0 0.0
    %3458 = vmatpush1.msra.mxu0 0.0
    %3459 = vmatprep.subr.mxu0 0.0
    %3460 = vmatpush1.msra.mxu0 0.0
    %3461 = vmatprep.subr.mxu0 0.0
    %3462 = vmatpush1.msra.mxu0 0.0
    %3463 = vmatprep.subr.mxu0 0.0
    %3464 = vmatpush1.msra.mxu0 0.0
    %3465 = vmatprep.subr.mxu0 0.0
    %3466 = vmatpush1.msra.mxu0 0.0
    %3467 = vmatprep.subr.mxu0 0.0
    %3468 = vmatpush1.msra.mxu0 0.0
    %3469 = vmatprep.subr.mxu0 0.0
    %3470 = vmatpush1.msra.mxu0 0.0
    %3471 = vmatprep.subr.mxu0 0.0
    %3472 = vmatpush1.msra.mxu0 0.0
    %3473 = vmatprep.subr.mxu0 0.0
    %3474 = vmatpush1.msra.mxu0 0.0
    %3475 = vmatprep.subr.mxu0 0.0
    %3476 = vmatpush1.msra.mxu0 0.0
    %3477 = vmatprep.subr.mxu0 0.0
    %3478 = vmatpush1.msra.mxu0 0.0
    %3479 = vmatprep.subr.mxu0 0.0
    %3480 = vmatpush1.msra.mxu0 0.0
    %3481 = vmatprep.subr.mxu0 0.0
    %3482 = vmatpush1.msra.mxu0 0.0
    %3483 = vmatprep.subr.mxu0 0.0
    %3484 = vmatpush1.msra.mxu0 0.0
    %3485 = vmatprep.subr.mxu0 0.0
    %3486 = vmatpush1.msra.mxu0 0.0
    %3487 = vmatprep.subr.mxu0 0.0
    %3488 = vmatpush1.msra.mxu0 0.0
    %3489 = vmatprep.subr.mxu0 0.0
    %3490 = vmatpush1.msra.mxu0 0.0
    %3491 = vmatprep.subr.mxu0 0.0
    %3492 = vmatpush1.msra.mxu0 0.0
    %3493 = vmatprep.subr.mxu0 0.0
    %3494 = vmatpush1.msra.mxu0 0.0
    %3495 = vmatprep.subr.mxu0 0.0
    %3496 = vmatpush1.msra.mxu0 0.0
    %3497 = vmatprep.mubr.f32.mxu0 0.0
    %3498 = vmatmul.mubr.f32.gmra.mrb[0].mxu0 %v3431
    %v3499 = vpop.f32.mrb[0].mxu0
    %v3500 = vadd.f32 %v2039, %v3499
    %v3501 = vpop.f32.mrb[0].mxu0
    %3502 = vdwg.mxu0
    %v3503 = vsel %vm2116, %v3500, -inf
    %3504 = vmax.xlane.f32.xlu0 %v3503
    %v3505 = vpop.xlane.xlu0 %3504
    %v3506 = vsub.f32 %v3500, %v3505
    %v3507 = vmul.f32 %v3506, 1.442695
    %v3508 = vpow.pop %v3507
    %v3509 = vsel %vm2116, %v3508, 0.0
    %3510 = vadd.xlane.f32.xlu0 %v3509
    %v3511 = vpop.xlane.xlu0 %3510
    %v3512 = vlog2.pop %v3511
    %v3513 = vmul.f32 %v3512, 0.6931472
    %v3514 = vadd.f32 %v3513, %v3505
    %v3515 = vsub.f32 %v3500, %v3514
    %s3516 = scalar_lea.vmem %s18, 10
    %3517 = vst [vmem:[%s3516] sm:$0x3] %v3515
    %vm3518 = vcmp.eq.f32.partialorder %v3500, %v3505
    %v3519 = vsel %vm3518, %v2132, 128
    %v3520 = vsel %vm2116, %v3519, 2147483647
    %v3521 = vand.u32 %v3520, 65535
    %v3522 = vshra.s32 %v3520, 16
    %v3523 = vcvt.s32.f32 %v3521
    %v3524 = vcvt.s32.f32 %v3522
    %3525 = vmin.xlane.f32.xlu0 %v3524
    %v3526 = vpop.xlane.xlu0 %3525
    %vm3527 = vcmp.eq.f32.partialorder %v3524, %v3526
    %v3528 = vsel %vm3527, %v3523, inf
    %3529 = vmin.xlane.f32.xlu0 %v3528
    %v3530 = vpop.xlane.xlu0 %3529
    %v3531 = vcvt.f32.s32 %v3530
    %v3532 = vcvt.f32.s32 %v3526
    %v3533 = vshll.u32 %v3532, 16
    %v3534 = vadd.s32 %v3533, %v3531
    %s3535 = scalar_lea.vmem %s1, 12
    %v3536 = vld [vmem:[%s3535] sm:$0x3]
    %3537 = vmatprep.subr.mxu0 0.0
    %3538 = vmatpush1.msra.mxu0 %v1843
    %3539 = vmatprep.subr.mxu0 0.0
    %3540 = vmatpush1.msra.mxu0 %v1844
    %3541 = vmatprep.subr.mxu0 0.0
    %3542 = vmatpush1.msra.mxu0 %v1845
    %3543 = vmatprep.subr.mxu0 0.0
    %3544 = vmatpush1.msra.mxu0 %v1846
    %3545 = vmatprep.subr.mxu0 0.0
    %3546 = vmatpush1.msra.mxu0 0.0
    %3547 = vmatprep.subr.mxu0 0.0
    %3548 = vmatpush1.msra.mxu0 0.0
    %3549 = vmatprep.subr.mxu0 0.0
    %3550 = vmatpush1.msra.mxu0 0.0
    %3551 = vmatprep.subr.mxu0 0.0
    %3552 = vmatpush1.msra.mxu0 0.0
    %3553 = vmatprep.subr.mxu0 0.0
    %3554 = vmatpush1.msra.mxu0 0.0
    %3555 = vmatprep.subr.mxu0 0.0
    %3556 = vmatpush1.msra.mxu0 0.0
    %3557 = vmatprep.subr.mxu0 0.0
    %3558 = vmatpush1.msra.mxu0 0.0
    %3559 = vmatprep.subr.mxu0 0.0
    %3560 = vmatpush1.msra.mxu0 0.0
    %3561 = vmatprep.subr.mxu0 0.0
    %3562 = vmatpush1.msra.mxu0 0.0
    %3563 = vmatprep.subr.mxu0 0.0
    %3564 = vmatpush1.msra.mxu0 0.0
    %3565 = vmatprep.subr.mxu0 0.0
    %3566 = vmatpush1.msra.mxu0 0.0
    %3567 = vmatprep.subr.mxu0 0.0
    %3568 = vmatpush1.msra.mxu0 0.0
    %3569 = vmatprep.subr.mxu0 0.0
    %3570 = vmatpush1.msra.mxu0 0.0
    %3571 = vmatprep.subr.mxu0 0.0
    %3572 = vmatpush1.msra.mxu0 0.0
    %3573 = vmatprep.subr.mxu0 0.0
    %3574 = vmatpush1.msra.mxu0 0.0
    %3575 = vmatprep.subr.mxu0 0.0
    %3576 = vmatpush1.msra.mxu0 0.0
    %3577 = vmatprep.subr.mxu0 0.0
    %3578 = vmatpush1.msra.mxu0 0.0
    %3579 = vmatprep.subr.mxu0 0.0
    %3580 = vmatpush1.msra.mxu0 0.0
    %3581 = vmatprep.subr.mxu0 0.0
    %3582 = vmatpush1.msra.mxu0 0.0
    %3583 = vmatprep.subr.mxu0 0.0
    %3584 = vmatpush1.msra.mxu0 0.0
    %3585 = vmatprep.subr.mxu0 0.0
    %3586 = vmatpush1.msra.mxu0 0.0
    %3587 = vmatprep.subr.mxu0 0.0
    %3588 = vmatpush1.msra.mxu0 0.0
    %3589 = vmatprep.subr.mxu0 0.0
    %3590 = vmatpush1.msra.mxu0 0.0
    %3591 = vmatprep.subr.mxu0 0.0
    %3592 = vmatpush1.msra.mxu0 0.0
    %3593 = vmatprep.subr.mxu0 0.0
    %3594 = vmatpush1.msra.mxu0 0.0
    %3595 = vmatprep.subr.mxu0 0.0
    %3596 = vmatpush1.msra.mxu0 0.0
    %3597 = vmatprep.subr.mxu0 0.0
    %3598 = vmatpush1.msra.mxu0 0.0
    %3599 = vmatprep.subr.mxu0 0.0
    %3600 = vmatpush1.msra.mxu0 0.0
    %3601 = vmatprep.mubr.f32.mxu0 0.0
    %3602 = vmatmul.mubr.f32.gmra.mrb[0].mxu0 %v3431
    %v3603 = vpop.f32.mrb[0].mxu0
    %v3604 = vadd.f32 0.0, %v3603
    %v3605 = vpop.f32.mrb[0].mxu0
    %3606 = vdwg.mxu0
    %v3608 = vsel %vm71, %v3536, 0
    %3610 = vmatprep.subr.mxu0 0.0
    %3611 = vmatpush1.msra.mxu0 %v1839
    %3612 = vmatprep.subr.mxu0 0.0
    %3613 = vmatpush1.msra.mxu0 %v1840
    %3614 = vmatprep.subr.mxu0 0.0
    %3615 = vmatpush1.msra.mxu0 %v1841
    %3616 = vmatprep.subr.mxu0 0.0
    %3617 = vmatpush1.msra.mxu0 %v1842
    %3618 = vmatprep.subr.mxu0 0.0
    %3619 = vmatpush1.msra.mxu0 0.0
    %3620 = vmatprep.subr.mxu0 0.0
    %3621 = vmatpush1.msra.mxu0 0.0
    %3622 = vmatprep.subr.mxu0 0.0
    %3623 = vmatpush1.msra.mxu0 0.0
    %3624 = vmatprep.subr.mxu0 0.0
    %3625 = vmatpush1.msra.mxu0 0.0
    %3626 = vmatprep.subr.mxu0 0.0
    %3627 = vmatpush1.msra.mxu0 0.0
    %3628 = vmatprep.subr.mxu0 0.0
    %3629 = vmatpush1.msra.mxu0 0.0
    %3630 = vmatprep.subr.mxu0 0.0
    %3631 = vmatpush1.msra.mxu0 0.0
    %3632 = vmatprep.subr.mxu0 0.0
    %3633 = vmatpush1.msra.mxu0 0.0
    %3634 = vmatprep.subr.mxu0 0.0
    %3635 = vmatpush1.msra.mxu0 0.0
    %3636 = vmatprep.subr.mxu0 0.0
    %3637 = vmatpush1.msra.mxu0 0.0
    %3638 = vmatprep.subr.mxu0 0.0
    %3639 = vmatpush1.msra.mxu0 0.0
    %3640 = vmatprep.subr.mxu0 0.0
    %3641 = vmatpush1.msra.mxu0 0.0
    %3642 = vmatprep.subr.mxu0 0.0
    %3643 = vmatpush1.msra.mxu0 0.0
    %3644 = vmatprep.subr.mxu0 0.0
    %3645 = vmatpush1.msra.mxu0 0.0
    %3646 = vmatprep.subr.mxu0 0.0
    %3647 = vmatpush1.msra.mxu0 0.0
    %3648 = vmatprep.subr.mxu0 0.0
    %3649 = vmatpush1.msra.mxu0 0.0
    %3650 = vmatprep.subr.mxu0 0.0
    %3651 = vmatpush1.msra.mxu0 0.0
    %3652 = vmatprep.subr.mxu0 0.0
    %3653 = vmatpush1.msra.mxu0 0.0
    %3654 = vmatprep.subr.mxu0 0.0
    %3655 = vmatpush1.msra.mxu0 0.0
    %3656 = vmatprep.subr.mxu0 0.0
    %3657 = vmatpush1.msra.mxu0 0.0
    %3658 = vmatprep.subr.mxu0 0.0
    %3659 = vmatpush1.msra.mxu0 0.0
    %3660 = vmatprep.subr.mxu0 0.0
    %3661 = vmatpush1.msra.mxu0 0.0
    %3662 = vmatprep.subr.mxu0 0.0
    %3663 = vmatpush1.msra.mxu0 0.0
    %3664 = vmatprep.subr.mxu0 0.0
    %3665 = vmatpush1.msra.mxu0 0.0
    %3666 = vmatprep.subr.mxu0 0.0
    %3667 = vmatpush1.msra.mxu0 0.0
    %3668 = vmatprep.subr.mxu0 0.0
    %3669 = vmatpush1.msra.mxu0 0.0
    %3670 = vmatprep.subr.mxu0 0.0
    %3671 = vmatpush1.msra.mxu0 0.0
    %3672 = vmatprep.subr.mxu0 0.0
    %3673 = vmatpush1.msra.mxu0 0.0
    %3674 = vmatprep.mubr.f32.mxu0 0.0
    %3675 = vmatmul.mubr.f32.gmra.mrb[0].mxu0 %v3608
    %v3676 = vpop.f32.mrb[0].mxu0
    %v3677 = vadd.f32 %v3604, %v3676
    %v3678 = vpop.f32.mrb[0].mxu0
    %3679 = vdwg.mxu0
    %v3680 = vadd.f32 %v3677, %v2004
    %v3681 = vxor.u32 %v3680, 2147483648
    %v3682 = vmul.f32 %v3681, 1.442695
    %v3683 = vpow.pop %v3682
    %v3684 = vadd.f32 %v3683, 1.0
    %v3685 = vrcp.pop %v3684
    %v3686 = vmul.f32 1.0, %v3685
    %v3687 = vtanh.pop %v3680
    %v3688 = vmul.f32 %v3686, %v3421
    %3690 = vrot.lane.b32.xlu0 %v3687, 64
    %v3691 = vpop.permute.xlu0 %3690
    %v3693 = vmul.f32 %v3686, %v3691
    %3695 = vrot.lane.b32.xlu0 %v3693, 32
    %v3696 = vpop.permute.xlu0 %3695
    %v3698 = vadd.f32 %v3688, %v3696
    %v3699 = vtanh.pop %v3698
    %3701 = vrot.lane.b32.xlu0 %v3699, 64
    %v3702 = vpop.permute.xlu0 %3701
    %v3704 = vmul.f32 %v3686, %v3702
    %3706 = vrot.lane.b32.xlu0 %v3704, 32
    %v3707 = vpop.permute.xlu0 %3706
    %v3708 = vsel %vm71, %v3707, 0
    %3710 = vmatprep.subr.mxu0 0.0
    %3711 = vmatpush1.msra.mxu0 %v1848
    %3712 = vmatprep.subr.mxu0 0.0
    %3713 = vmatpush1.msra.mxu0 %v1849
    %3714 = vmatprep.subr.mxu0 0.0
    %3715 = vmatpush1.msra.mxu0 %v1850
    %3716 = vmatprep.subr.mxu0 0.0
    %3717 = vmatpush1.msra.mxu0 %v1851
    %3718 = vmatprep.subr.mxu0 0.0
    %3719 = vmatpush1.msra.mxu0 0.0
    %3720 = vmatprep.subr.mxu0 0.0
    %3721 = vmatpush1.msra.mxu0 0.0
    %3722 = vmatprep.subr.mxu0 0.0
    %3723 = vmatpush1.msra.mxu0 0.0
    %3724 = vmatprep.subr.mxu0 0.0
    %3725 = vmatpush1.msra.mxu0 0.0
    %3726 = vmatprep.subr.mxu0 0.0
    %3727 = vmatpush1.msra.mxu0 0.0
    %3728 = vmatprep.subr.mxu0 0.0
    %3729 = vmatpush1.msra.mxu0 0.0
    %3730 = vmatprep.subr.mxu0 0.0
    %3731 = vmatpush1.msra.mxu0 0.0
    %3732 = vmatprep.subr.mxu0 0.0
    %3733 = vmatpush1.msra.mxu0 0.0
    %3734 = vmatprep.subr.mxu0 0.0
    %3735 = vmatpush1.msra.mxu0 0.0
    %3736 = vmatprep.subr.mxu0 0.0
    %3737 = vmatpush1.msra.mxu0 0.0
    %3738 = vmatprep.subr.mxu0 0.0
    %3739 = vmatpush1.msra.mxu0 0.0
    %3740 = vmatprep.subr.mxu0 0.0
    %3741 = vmatpush1.msra.mxu0 0.0
    %3742 = vmatprep.subr.mxu0 0.0
    %3743 = vmatpush1.msra.mxu0 0.0
    %3744 = vmatprep.subr.mxu0 0.0
    %3745 = vmatpush1.msra.mxu0 0.0
    %3746 = vmatprep.subr.mxu0 0.0
    %3747 = vmatpush1.msra.mxu0 0.0
    %3748 = vmatprep.subr.mxu0 0.0
    %3749 = vmatpush1.msra.mxu0 0.0
    %3750 = vmatprep.subr.mxu0 0.0
    %3751 = vmatpush1.msra.mxu0 0.0
    %3752 = vmatprep.subr.mxu0 0.0
    %3753 = vmatpush1.msra.mxu0 0.0
    %3754 = vmatprep.subr.mxu0 0.0
    %3755 = vmatpush1.msra.mxu0 0.0
    %3756 = vmatprep.subr.mxu0 0.0
    %3757 = vmatpush1.msra.mxu0 0.0
    %3758 = vmatprep.subr.mxu0 0.0
    %3759 = vmatpush1.msra.mxu0 0.0
    %3760 = vmatprep.subr.mxu0 0.0
    %3761 = vmatpush1.msra.mxu0 0.0
    %3762 = vmatprep.subr.mxu0 0.0
    %3763 = vmatpush1.msra.mxu0 0.0
    %3764 = vmatprep.subr.mxu0 0.0
    %3765 = vmatpush1.msra.mxu0 0.0
    %3766 = vmatprep.subr.mxu0 0.0
    %3767 = vmatpush1.msra.mxu0 0.0
    %3768 = vmatprep.subr.mxu0 0.0
    %3769 = vmatpush1.msra.mxu0 0.0
    %3770 = vmatprep.subr.mxu0 0.0
    %3771 = vmatpush1.msra.mxu0 0.0
    %3772 = vmatprep.subr.mxu0 0.0
    %3773 = vmatpush1.msra.mxu0 0.0
    %3774 = vmatprep.mubr.f32.mxu0 0.0
    %3775 = vmatmul.mubr.f32.gmra.mrb[0].mxu0 %v3708
    %v3776 = vpop.f32.mrb[0].mxu0
    %v3777 = vadd.f32 %v2039, %v3776
    %v3778 = vpop.f32.mrb[0].mxu0
    %3779 = vdwg.mxu0
    %v3780 = vsel %vm2116, %v3777, -inf
    %3781 = vmax.xlane.f32.xlu0 %v3780
    %v3782 = vpop.xlane.xlu0 %3781
    %v3783 = vsub.f32 %v3777, %v3782
    %v3784 = vmul.f32 %v3783, 1.442695
    %v3785 = vpow.pop %v3784
    %v3786 = vsel %vm2116, %v3785, 0.0
    %3787 = vadd.xlane.f32.xlu0 %v3786
    %v3788 = vpop.xlane.xlu0 %3787
    %v3789 = vlog2.pop %v3788
    %v3790 = vmul.f32 %v3789, 0.6931472
    %v3791 = vadd.f32 %v3790, %v3782
    %v3792 = vsub.f32 %v3777, %v3791
    %s3793 = scalar_lea.vmem %s18, 12
    %3794 = vst [vmem:[%s3793] sm:$0x3] %v3792
    %vm3795 = vcmp.eq.f32.partialorder %v3777, %v3782
    %v3796 = vsel %vm3795, %v2132, 128
    %v3797 = vsel %vm2116, %v3796, 2147483647
    %v3798 = vand.u32 %v3797, 65535
    %v3799 = vshra.s32 %v3797, 16
    %v3800 = vcvt.s32.f32 %v3798
    %v3801 = vcvt.s32.f32 %v3799
    %3802 = vmin.xlane.f32.xlu0 %v3801
    %v3803 = vpop.xlane.xlu0 %3802
    %vm3804 = vcmp.eq.f32.partialorder %v3801, %v3803
    %v3805 = vsel %vm3804, %v3800, inf
    %3806 = vmin.xlane.f32.xlu0 %v3805
    %v3807 = vpop.xlane.xlu0 %3806
    %v3808 = vcvt.f32.s32 %v3807
    %v3809 = vcvt.f32.s32 %v3803
    %v3810 = vshll.u32 %v3809, 16
    %v3811 = vadd.s32 %v3810, %v3808
    %s3812 = scalar_lea.vmem %s1, 14
    %v3813 = vld [vmem:[%s3812] sm:$0x3]
    %3814 = vmatprep.subr.mxu0 0.0
    %3815 = vmatpush1.msra.mxu0 %v1843
    %3816 = vmatprep.subr.mxu0 0.0
    %3817 = vmatpush1.msra.mxu0 %v1844
    %3818 = vmatprep.subr.mxu0 0.0
    %3819 = vmatpush1.msra.mxu0 %v1845
    %3820 = vmatprep.subr.mxu0 0.0
    %3821 = vmatpush1.msra.mxu0 %v1846
    %3822 = vmatprep.subr.mxu0 0.0
    %3823 = vmatpush1.msra.mxu0 0.0
    %3824 = vmatprep.subr.mxu0 0.0
    %3825 = vmatpush1.msra.mxu0 0.0
    %3826 = vmatprep.subr.mxu0 0.0
    %3827 = vmatpush1.msra.mxu0 0.0
    %3828 = vmatprep.subr.mxu0 0.0
    %3829 = vmatpush1.msra.mxu0 0.0
    %3830 = vmatprep.subr.mxu0 0.0
    %3831 = vmatpush1.msra.mxu0 0.0
    %3832 = vmatprep.subr.mxu0 0.0
    %3833 = vmatpush1.msra.mxu0 0.0
    %3834 = vmatprep.subr.mxu0 0.0
    %3835 = vmatpush1.msra.mxu0 0.0
    %3836 = vmatprep.subr.mxu0 0.0
    %3837 = vmatpush1.msra.mxu0 0.0
    %3838 = vmatprep.subr.mxu0 0.0
    %3839 = vmatpush1.msra.mxu0 0.0
    %3840 = vmatprep.subr.mxu0 0.0
    %3841 = vmatpush1.msra.mxu0 0.0
    %3842 = vmatprep.subr.mxu0 0.0
    %3843 = vmatpush1.msra.mxu0 0.0
    %3844 = vmatprep.subr.mxu0 0.0
    %3845 = vmatpush1.msra.mxu0 0.0
    %3846 = vmatprep.subr.mxu0 0.0
    %3847 = vmatpush1.msra.mxu0 0.0
    %3848 = vmatprep.subr.mxu0 0.0
    %3849 = vmatpush1.msra.mxu0 0.0
    %3850 = vmatprep.subr.mxu0 0.0
    %3851 = vmatpush1.msra.mxu0 0.0
    %3852 = vmatprep.subr.mxu0 0.0
    %3853 = vmatpush1.msra.mxu0 0.0
    %3854 = vmatprep.subr.mxu0 0.0
    %3855 = vmatpush1.msra.mxu0 0.0
    %3856 = vmatprep.subr.mxu0 0.0
    %3857 = vmatpush1.msra.mxu0 0.0
    %3858 = vmatprep.subr.mxu0 0.0
    %3859 = vmatpush1.msra.mxu0 0.0
    %3860 = vmatprep.subr.mxu0 0.0
    %3861 = vmatpush1.msra.mxu0 0.0
    %3862 = vmatprep.subr.mxu0 0.0
    %3863 = vmatpush1.msra.mxu0 0.0
    %3864 = vmatprep.subr.mxu0 0.0
    %3865 = vmatpush1.msra.mxu0 0.0
    %3866 = vmatprep.subr.mxu0 0.0
    %3867 = vmatpush1.msra.mxu0 0.0
    %3868 = vmatprep.subr.mxu0 0.0
    %3869 = vmatpush1.msra.mxu0 0.0
    %3870 = vmatprep.subr.mxu0 0.0
    %3871 = vmatpush1.msra.mxu0 0.0
    %3872 = vmatprep.subr.mxu0 0.0
    %3873 = vmatpush1.msra.mxu0 0.0
    %3874 = vmatprep.subr.mxu0 0.0
    %3875 = vmatpush1.msra.mxu0 0.0
    %3876 = vmatprep.subr.mxu0 0.0
    %3877 = vmatpush1.msra.mxu0 0.0
    %3878 = vmatprep.mubr.f32.mxu0 0.0
    %3879 = vmatmul.mubr.f32.gmra.mrb[0].mxu0 %v3708
    %v3880 = vpop.f32.mrb[0].mxu0
    %v3881 = vadd.f32 0.0, %v3880
    %v3882 = vpop.f32.mrb[0].mxu0
    %3883 = vdwg.mxu0
    %v3885 = vsel %vm71, %v3813, 0
    %3887 = vmatprep.subr.mxu0 0.0
    %3888 = vmatpush1.msra.mxu0 %v1839
    %3889 = vmatprep.subr.mxu0 0.0
    %3890 = vmatpush1.msra.mxu0 %v1840
    %3891 = vmatprep.subr.mxu0 0.0
    %3892 = vmatpush1.msra.mxu0 %v1841
    %3893 = vmatprep.subr.mxu0 0.0
    %3894 = vmatpush1.msra.mxu0 %v1842
    %3895 = vmatprep.subr.mxu0 0.0
    %3896 = vmatpush1.msra.mxu0 0.0
    %3897 = vmatprep.subr.mxu0 0.0
    %3898 = vmatpush1.msra.mxu0 0.0
    %3899 = vmatprep.subr.mxu0 0.0
    %3900 = vmatpush1.msra.mxu0 0.0
    %3901 = vmatprep.subr.mxu0 0.0
    %3902 = vmatpush1.msra.mxu0 0.0
    %3903 = vmatprep.subr.mxu0 0.0
    %3904 = vmatpush1.msra.mxu0 0.0
    %3905 = vmatprep.subr.mxu0 0.0
    %3906 = vmatpush1.msra.mxu0 0.0
    %3907 = vmatprep.subr.mxu0 0.0
    %3908 = vmatpush1.msra.mxu0 0.0
    %3909 = vmatprep.subr.mxu0 0.0
    %3910 = vmatpush1.msra.mxu0 0.0
    %3911 = vmatprep.subr.mxu0 0.0
    %3912 = vmatpush1.msra.mxu0 0.0
    %3913 = vmatprep.subr.mxu0 0.0
    %3914 = vmatpush1.msra.mxu0 0.0
    %3915 = vmatprep.subr.mxu0 0.0
    %3916 = vmatpush1.msra.mxu0 0.0
    %3917 = vmatprep.subr.mxu0 0.0
    %3918 = vmatpush1.msra.mxu0 0.0
    %3919 = vmatprep.subr.mxu0 0.0
    %3920 = vmatpush1.msra.mxu0 0.0
    %3921 = vmatprep.subr.mxu0 0.0
    %3922 = vmatpush1.msra.mxu0 0.0
    %3923 = vmatprep.subr.mxu0 0.0
    %3924 = vmatpush1.msra.mxu0 0.0
    %3925 = vmatprep.subr.mxu0 0.0
    %3926 = vmatpush1.msra.mxu0 0.0
    %3927 = vmatprep.subr.mxu0 0.0
    %3928 = vmatpush1.msra.mxu0 0.0
    %3929 = vmatprep.subr.mxu0 0.0
    %3930 = vmatpush1.msra.mxu0 0.0
    %3931 = vmatprep.subr.mxu0 0.0
    %3932 = vmatpush1.msra.mxu0 0.0
    %3933 = vmatprep.subr.mxu0 0.0
    %3934 = vmatpush1.msra.mxu0 0.0
    %3935 = vmatprep.subr.mxu0 0.0
    %3936 = vmatpush1.msra.mxu0 0.0
    %3937 = vmatprep.subr.mxu0 0.0
    %3938 = vmatpush1.msra.mxu0 0.0
    %3939 = vmatprep.subr.mxu0 0.0
    %3940 = vmatpush1.msra.mxu0 0.0
    %3941 = vmatprep.subr.mxu0 0.0
    %3942 = vmatpush1.msra.mxu0 0.0
    %3943 = vmatprep.subr.mxu0 0.0
    %3944 = vmatpush1.msra.mxu0 0.0
    %3945 = vmatprep.subr.mxu0 0.0
    %3946 = vmatpush1.msra.mxu0 0.0
    %3947 = vmatprep.subr.mxu0 0.0
    %3948 = vmatpush1.msra.mxu0 0.0
    %3949 = vmatprep.subr.mxu0 0.0
    %3950 = vmatpush1.msra.mxu0 0.0
    %3951 = vmatprep.mubr.f32.mxu0 0.0
    %3952 = vmatmul.mubr.f32.gmra.mrb[0].mxu0 %v3885
    %v3953 = vpop.f32.mrb[0].mxu0
    %v3954 = vadd.f32 %v3881, %v3953
    %v3955 = vpop.f32.mrb[0].mxu0
    %3956 = vdwg.mxu0
    %v3957 = vadd.f32 %v3954, %v2004
    %v3958 = vxor.u32 %v3957, 2147483648
    %v3959 = vmul.f32 %v3958, 1.442695
    %v3960 = vpow.pop %v3959
    %v3961 = vadd.f32 %v3960, 1.0
    %v3962 = vrcp.pop %v3961
    %v3963 = vmul.f32 1.0, %v3962
    %v3964 = vtanh.pop %v3957
    %v3965 = vmul.f32 %v3963, %v3698
    %3967 = vrot.lane.b32.xlu0 %v3964, 64
    %v3968 = vpop.permute.xlu0 %3967
    %v3970 = vmul.f32 %v3963, %v3968
    %3972 = vrot.lane.b32.xlu0 %v3970, 32
    %v3973 = vpop.permute.xlu0 %3972
    %v3975 = vadd.f32 %v3965, %v3973
    %v3976 = vtanh.pop %v3975
    %3978 = vrot.lane.b32.xlu0 %v3976, 64
    %v3979 = vpop.permute.xlu0 %3978
    %v3981 = vmul.f32 %v3963, %v3979
    %3983 = vrot.lane.b32.xlu0 %v3981, 32
    %v3984 = vpop.permute.xlu0 %3983
    %v3985 = vsel %vm71, %v3984, 0
    %3987 = vmatprep.subr.mxu0 0.0
    %3988 = vmatpush1.msra.mxu0 %v1848
    %3989 = vmatprep.subr.mxu0 0.0
    %3990 = vmatpush1.msra.mxu0 %v1849
    %3991 = vmatprep.subr.mxu0 0.0
    %3992 = vmatpush1.msra.mxu0 %v1850
    %3993 = vmatprep.subr.mxu0 0.0
    %3994 = vmatpush1.msra.mxu0 %v1851
    %3995 = vmatprep.subr.mxu0 0.0
    %3996 = vmatpush1.msra.mxu0 0.0
    %3997 = vmatprep.subr.mxu0 0.0
    %3998 = vmatpush1.msra.mxu0 0.0
    %3999 = vmatprep.subr.mxu0 0.0
    %4000 = vmatpush1.msra.mxu0 0.0
    %4001 = vmatprep.subr.mxu0 0.0
    %4002 = vmatpush1.msra.mxu0 0.0
    %4003 = vmatprep.subr.mxu0 0.0
    %4004 = vmatpush1.msra.mxu0 0.0
    %4005 = vmatprep.subr.mxu0 0.0
    %4006 = vmatpush1.msra.mxu0 0.0
    %4007 = vmatprep.subr.mxu0 0.0
    %4008 = vmatpush1.msra.mxu0 0.0
    %4009 = vmatprep.subr.mxu0 0.0
    %4010 = vmatpush1.msra.mxu0 0.0
    %4011 = vmatprep.subr.mxu0 0.0
    %4012 = vmatpush1.msra.mxu0 0.0
    %4013 = vmatprep.subr.mxu0 0.0
    %4014 = vmatpush1.msra.mxu0 0.0
    %4015 = vmatprep.subr.mxu0 0.0
    %4016 = vmatpush1.msra.mxu0 0.0
    %4017 = vmatprep.subr.mxu0 0.0
    %4018 = vmatpush1.msra.mxu0 0.0
    %4019 = vmatprep.subr.mxu0 0.0
    %4020 = vmatpush1.msra.mxu0 0.0
    %4021 = vmatprep.subr.mxu0 0.0
    %4022 = vmatpush1.msra.mxu0 0.0
    %4023 = vmatprep.subr.mxu0 0.0
    %4024 = vmatpush1.msra.mxu0 0.0
    %4025 = vmatprep.subr.mxu0 0.0
    %4026 = vmatpush1.msra.mxu0 0.0
    %4027 = vmatprep.subr.mxu0 0.0
    %4028 = vmatpush1.msra.mxu0 0.0
    %4029 = vmatprep.subr.mxu0 0.0
    %4030 = vmatpush1.msra.mxu0 0.0
    %4031 = vmatprep.subr.mxu0 0.0
    %4032 = vmatpush1.msra.mxu0 0.0
    %4033 = vmatprep.subr.mxu0 0.0
    %4034 = vmatpush1.msra.mxu0 0.0
    %4035 = vmatprep.subr.mxu0 0.0
    %4036 = vmatpush1.msra.mxu0 0.0
    %4037 = vmatprep.subr.mxu0 0.0
    %4038 = vmatpush1.msra.mxu0 0.0
    %4039 = vmatprep.subr.mxu0 0.0
    %4040 = vmatpush1.msra.mxu0 0.0
    %4041 = vmatprep.subr.mxu0 0.0
    %4042 = vmatpush1.msra.mxu0 0.0
    %4043 = vmatprep.subr.mxu0 0.0
    %4044 = vmatpush1.msra.mxu0 0.0
    %4045 = vmatprep.subr.mxu0 0.0
    %4046 = vmatpush1.msra.mxu0 0.0
    %4047 = vmatprep.subr.mxu0 0.0
    %4048 = vmatpush1.msra.mxu0 0.0
    %4049 = vmatprep.subr.mxu0 0.0
    %4050 = vmatpush1.msra.mxu0 0.0
    %4051 = vmatprep.mubr.f32.mxu0 0.0
    %4052 = vmatmul.mubr.f32.gmra.mrb[0].mxu0 %v3985
    %v4053 = vpop.f32.mrb[0].mxu0
    %v4054 = vadd.f32 %v2039, %v4053
    %v4055 = vpop.f32.mrb[0].mxu0
    %4056 = vdwg.mxu0
    %v4057 = vsel %vm2116, %v4054, -inf
    %4058 = vmax.xlane.f32.xlu0 %v4057
    %v4059 = vpop.xlane.xlu0 %4058
    %v4060 = vsub.f32 %v4054, %v4059
    %v4061 = vmul.f32 %v4060, 1.442695
    %v4062 = vpow.pop %v4061
    %v4063 = vsel %vm2116, %v4062, 0.0
    %4064 = vadd.xlane.f32.xlu0 %v4063
    %v4065 = vpop.xlane.xlu0 %4064
    %v4066 = vlog2.pop %v4065
    %v4067 = vmul.f32 %v4066, 0.6931472
    %v4068 = vadd.f32 %v4067, %v4059
    %v4069 = vsub.f32 %v4054, %v4068
    %s4070 = scalar_lea.vmem %s18, 14
    %4071 = vst [vmem:[%s4070] sm:$0x3] %v4069
    %vm4072 = vcmp.eq.f32.partialorder %v4054, %v4059
    %v4073 = vsel %vm4072, %v2132, 128
    %v4074 = vsel %vm2116, %v4073, 2147483647
    %v4075 = vand.u32 %v4074, 65535
    %v4076 = vshra.s32 %v4074, 16
    %v4077 = vcvt.s32.f32 %v4075
    %v4078 = vcvt.s32.f32 %v4076
    %4079 = vmin.xlane.f32.xlu0 %v4078
    %v4080 = vpop.xlane.xlu0 %4079
    %vm4081 = vcmp.eq.f32.partialorder %v4078, %v4080
    %v4082 = vsel %vm4081, %v4077, inf
    %4083 = vmin.xlane.f32.xlu0 %v4082
    %v4084 = vpop.xlane.xlu0 %4083
    %v4085 = vcvt.f32.s32 %v4084
    %v4086 = vcvt.f32.s32 %v4080
    %v4087 = vshll.u32 %v4086, 16
    %v4088 = vadd.s32 %v4087, %v4085
    %vm4089 = vcmask 7168
    %v4090 = vsel %vm4089, %v2149, %v2426
    %vm4091 = vcmask 15360
    %v4092 = vsel %vm4091, %v4090, %v2703
    %vm4093 = vcmask 23552
    %v4094 = vsel %vm4093, %v4092, %v2980
    %vm4095 = vcmask 31744
    %v4096 = vsel %vm4095, %v4094, %v3257
    %vm4097 = vcmask 39936
    %v4098 = vsel %vm4097, %v4096, %v3534
    %vm4099 = vcmask 48128
    %v4100 = vsel %vm4099, %v4098, %v3811
    %vm4101 = vcmask 56320
    %v4102 = vsel %vm4101, %v4100, %v4088
    %vm4103 = vcmask 58368
    %4104 = vst.msk [vmem:[#allocation2] sm:$0x3] %vm4103, %v4102
    // Predicated region
    $region70: #{_cvae_forward_jit.1} parent=1 // pred_check
      _
    $region71: #{_cvae_forward_jit.1} parent=1 // pred_check_branch
      %4106 = sbr.rel (0) target = $region73
    $region72: #{_cvae_forward_jit.1} parent=1 // pred_region
      _
    $region73: #{_cvae_forward_jit.1} parent=1 // pred_fallthru
      _
    // Predicated region
    $region74: #{_cvae_forward_jit.1} parent=1 // pred_check
      _
    $region75: #{_cvae_forward_jit.1} parent=1 // pred_check_branch
      %4108 = sbr.rel (0) target = $region77
    $region76: #{_cvae_forward_jit.1} parent=1 // pred_region
      _
    $region77: #{_cvae_forward_jit.1} parent=1 // pred_fallthru
      _
    // Predicated region
    $region78: #{_cvae_forward_jit.1} parent=1 // pred_check
      _
    $region79: #{_cvae_forward_jit.1} parent=1 // pred_check_branch
      %4110 = sbr.rel (0) target = $region81
    $region80: #{_cvae_forward_jit.1} parent=1 // pred_region
      %s4112 = ssub.s32 32, 32
      %4113 = vsyncadd [#allocation3], %s4112
      %s4115 = sshll.u32 [#allocation2], 4
      %s4116 = int_to_ptr.vmem [resolvable:$true] %s4115
      %4118 = dma.vmem_to_hbm [thread:$0]  %s4116, 32, %s19, [#allocation3]
    $region81: #{_cvae_forward_jit.1} parent=1 // pred_fallthru
      _
    // Predicated region
    $region82: #{_cvae_forward_jit.1} parent=1 // pred_check
      _
    $region83: #{_cvae_forward_jit.1} parent=1 // pred_check_branch
      %4120 = sbr.rel (0) target = $region85
    $region84: #{_cvae_forward_jit.1} parent=1 // pred_region
      _
    $region85: #{_cvae_forward_jit.1} parent=1 // pred_fallthru
      _
    // Predicated region
    $region86: #{_cvae_forward_jit.1} parent=1 // pred_check
      _
    $region87: #{_cvae_forward_jit.1} parent=1 // pred_check_branch
      %4122 = sbr.rel (0) target = $region89
    $region88: #{_cvae_forward_jit.1} parent=1 // pred_region
      _
    $region89: #{_cvae_forward_jit.1} parent=1 // pred_fallthru
      _
    // Predicated region
    $region90: #{_cvae_forward_jit.1} parent=1 // pred_check
      _
    $region91: #{_cvae_forward_jit.1} parent=1 // pred_check_branch
      %4124 = sbr.rel (0) target = $region93
    $region92: #{_cvae_forward_jit.1} parent=1 // pred_region
      %4125 = dma.done [#allocation3], 32
    $region93: #{_cvae_forward_jit.1} parent=1 // pred_fallthru
      _
    %4126 = vsyncpa [#allocation3], 1

</llo_original>
